<compile_context>
chip_gen: v7x
topology: tpu7x:2x2x1
jax: 0.10.0
libtpu: 0.0.40
codegen_flags: <defaults>
</compile_context>

<pallas_src>
import functools

import jax
import jax.numpy as jnp
from jax.experimental import pallas as pl
from jax.experimental.pallas import tpu as pltpu


def _round_up(n, m):
    return ((n + m - 1) // m) * m


def _full_spec(shape):
    # Single grid step, full-array block.
    return pl.BlockSpec(shape, lambda i: (0,) * len(shape))


# ------------------------------ fused kernel --------------------------------

def _lenet_kernel(x_ref, w1_ref, b1_ref, s1_ref, w2_ref, b2_ref, s2_ref,
                  wf1_ref, bf1_ref, wf2_ref, bf2_ref, wf3_ref, bf3_ref,
                  out_ref,
                  p1_ref, h1_ref, pool1_ref, p2_ref, h2_ref, flat_ref,
                  *, batch, m1, m2, l2):
    f32 = jnp.float32

    # -------- conv1 (1 -> 6, 5x5) as ONE lane-dense MXU matmul ---------------
    # x_ref is the zero-padded flat image buffer, column = b*784 + i*28 + j.
    # Patch matrix: P1[kh*5+kw, m] = x_flat[m + kh*28 + kw]  (shift im2col).
    for kh in range(5):
        for kw in range(5):
            r = kh * 5 + kw
            off = kh * 28 + kw
            p1_ref[r:r + 1, :] = x_ref[:, off:off + m1]
    # Zero the K-padding rows (never feed uninitialized VMEM into the matmul).
    p1_ref[25:32, :] = jnp.zeros((7, m1), f32)

    h1 = jnp.dot(w1_ref[...], p1_ref[...], preferred_element_type=f32)   # [8, m1]
    h1 = jnp.maximum(h1 + b1_ref[...], 0.0)                              # bias + relu
    h1_ref[...] = h1

    # -------- 2x2 max-pool #1 + re-layout (row stride 28 -> 12) --------------
    # max over the 4 window taps = elementwise max of 4 shifted slices; the
    # subsample/re-layout is a 0/1 selection matmul (stays lane-dense, on MXU).
    pool1_ref[:, batch * 144:l2] = jnp.zeros((8, l2 - batch * 144), f32)
    for b in range(batch):
        q = b * 784
        win = jnp.maximum(
            jnp.maximum(h1_ref[:, q:q + 784], h1_ref[:, q + 1:q + 785]),
            jnp.maximum(h1_ref[:, q + 28:q + 812], h1_ref[:, q + 29:q + 813]))
        pool1_ref[:, b * 144:(b + 1) * 144] = jnp.dot(
            win, s1_ref[...], preferred_element_type=f32)                # [8, 144]

    # -------- conv2 (6 -> 12, 5x5) as ONE lane-dense MXU matmul --------------
    # pool1 layout: column = b*144 + i*12 + j (8 channel rows, 6 real).
    # P2[(kh*5+kw)*8 + c, m] = pool1[c, m + kh*12 + kw]
    for kh in range(5):
        for kw in range(5):
            r0 = (kh * 5 + kw) * 8
            off = kh * 12 + kw
            p2_ref[r0:r0 + 8, :] = pool1_ref[:, off:off + m2]

    h2 = jnp.dot(w2_ref[...], p2_ref[...], preferred_element_type=f32)   # [16, m2]
    h2 = jnp.maximum(h2 + b2_ref[...], 0.0)
    h2_ref[...] = h2

    # -------- 2x2 max-pool #2 + flatten to [B, 256] ---------------------------
    flat_ref[...] = jnp.zeros(flat_ref.shape, f32)
    for b in range(batch):
        q = b * 144
        win = jnp.maximum(
            jnp.maximum(h2_ref[:, q:q + 144], h2_ref[:, q + 1:q + 145]),
            jnp.maximum(h2_ref[:, q + 12:q + 156], h2_ref[:, q + 13:q + 157]))
        pooled = jnp.dot(win, s2_ref[...], preferred_element_type=f32)   # [16, 16]
        # torch .view(B, -1) flatten order = (channel, i2*4 + j2); fc1 weights
        # were permuted/padded at init to match this (channel padded 12 -> 16).
        for c in range(16):
            flat_ref[b:b + 1, c * 16:(c + 1) * 16] = pooled[c:c + 1, :]

    # -------- FC head 192->120->60->10 (padded 256/128/64) + softmax ----------
    flat = flat_ref[...]                                                 # [>=8, 256]
    y = jnp.dot(flat, wf1_ref[...], preferred_element_type=f32) + bf1_ref[...]
    y = jnp.maximum(y, 0.0)
    y = jnp.dot(y, wf2_ref[...], preferred_element_type=f32) + bf2_ref[...]
    y = jnp.maximum(y, 0.0)
    logits = jnp.dot(y, wf3_ref[...], preferred_element_type=f32) + bf3_ref[...]
    mx = jnp.max(logits, axis=1, keepdims=True)
    e = jnp.exp(logits - mx)
    # single reciprocal + multiply (exact; approx=True would also be fine here)
    probs = e * pl.reciprocal(jnp.sum(e, axis=1, keepdims=True))
    out_ref[...] = probs[:batch, :]


# --------------------------- one-time weight prep ----------------------------

def prep_params(p):
    """Reshape/pad all weights into kernel-ready layouts (done once at init)."""
    f32 = jnp.float32

    # conv1: [6,1,5,5] -> [8, 32]  (OC 6->8, K 25->32, feature order kh*5+kw)
    w1m = jnp.zeros((8, 32), f32).at[:6, :25].set(p["conv1_w"].reshape(6, 25))
    b1 = jnp.zeros((8, 1), f32).at[:6, 0].set(p["conv1_b"])

    # conv2: [12,6,5,5] -> [16, 200]  row order (kh, kw, c) with channels padded to 8
    w2p = jnp.zeros((16, 8, 5, 5), f32).at[:12, :6].set(p["conv2_w"])
    w2m = w2p.transpose(0, 2, 3, 1).reshape(16, 200)
    b2 = jnp.zeros((16, 1), f32).at[:12, 0].set(p["conv2_b"])

    # fc1: [120, 192] -> [256, 128] (input features (c, s), c padded 12->16)
    wf1 = jnp.zeros((128, 16, 16), f32).at[:120, :12, :].set(
        p["fc1_w"].reshape(120, 12, 16)).reshape(128, 256).T
    bf1 = jnp.zeros((1, 128), f32).at[0, :120].set(p["fc1_b"])

    # fc2: [60, 120] -> [128, 64]
    wf2 = jnp.zeros((64, 128), f32).at[:60, :120].set(p["fc2_w"]).T
    bf2 = jnp.zeros((1, 64), f32).at[0, :60].set(p["fc2_b"])

    # out: [10, 60] -> [64, 10]   (final N kept at 10 so softmax is exact)
    wf3 = jnp.zeros((10, 64), f32).at[:, :60].set(p["out_w"]).T
    bf3 = p["out_b"].reshape(1, 10).astype(f32)

    # 0/1 selection matrices for the pool subsample / re-layout matmuls.
    c1 = jnp.arange(144)
    s1 = jax.nn.one_hot(2 * (c1 // 12) * 28 + 2 * (c1 % 12), 784, dtype=f32).T  # [784,144]
    c2 = jnp.arange(16)
    s2 = jax.nn.one_hot(2 * (c2 // 4) * 12 + 2 * (c2 % 4), 144, dtype=f32).T    # [144,16]

    return dict(w1m=w1m, b1=b1, s1=s1, w2m=w2m, b2=b2, s2=s2,
                wf1=wf1, bf1=bf1, wf2=wf2, bf2=bf2, wf3=wf3, bf3=bf3)


# ------------------------------ fused forward --------------------------------

@jax.jit
def fused_forward(x, kp):
    B = x.shape[0]
    # flat-layout sizes (all static at trace time)
    m1 = _round_up(B * 784 + 29, 128)       # conv1 output columns
    l1 = _round_up(m1 + 116, 128)           # padded flat-input length
    m2 = _round_up(B * 144 + 13, 128)       # conv2 output columns
    l2 = m2 + 64                            # pool1 buffer length (conv2 shift tail)
    rows = _round_up(max(B, 8), 8)          # FC-head row padding

    # only per-step host glue: flatten + zero-pad the input images
    xf = jnp.pad(x.reshape(1, -1), ((0, 0), (0, l1 - B * 784)))

    kernel = functools.partial(_lenet_kernel, batch=B, m1=m1, m2=m2, l2=l2)
    args = (xf, kp["w1m"], kp["b1"], kp["s1"], kp["w2m"], kp["b2"], kp["s2"],
            kp["wf1"], kp["bf1"], kp["wf2"], kp["bf2"], kp["wf3"], kp["bf3"])

    # TODO(synk): for large batch on v7x (64 MiB VMEM, 2 TCs) tile the flattened
    # spatial dim with a "parallel" grid axis and cast matmul operands to bf16
    # (v6e/v7x) instead of this single-block, all-f32 launch.
    return pl.pallas_call(
        kernel,
        grid=(1,),
        in_specs=[_full_spec(a.shape) for a in args],
        out_specs=_full_spec((B, 10)),
        out_shape=jax.ShapeDtypeStruct((B, 10), jnp.float32),
        scratch_shapes=[
            pltpu.VMEM((32, m1), jnp.float32),    # conv1 im2col patches
            pltpu.VMEM((8, m1), jnp.float32),     # conv1 relu output
            pltpu.VMEM((8, l2), jnp.float32),     # pool1 output (stride-12 layout)
            pltpu.VMEM((200, m2), jnp.float32),   # conv2 im2col patches
            pltpu.VMEM((16, m2), jnp.float32),    # conv2 relu output
            pltpu.VMEM((rows, 256), jnp.float32), # flattened FC input
        ],
        compiler_params=pltpu.CompilerParams(dimension_semantics=("arbitrary",)),
    )(*args)


# ------------------------- params & pure-JAX reference ----------------------

def init_params(key):
    ks = jax.random.split(key, 10)

    def u(k, shape, fan_in):
        bound = 1.0 / (fan_in ** 0.5)
        return jax.random.uniform(k, shape, jnp.float32, -bound, bound)

    return {
        "conv1_w": u(ks[0], (6, 1, 5, 5), 25),
        "conv1_b": u(ks[1], (6,), 25),
        "conv2_w": u(ks[2], (12, 6, 5, 5), 150),
        "conv2_b": u(ks[3], (12,), 150),
        "fc1_w": u(ks[4], (120, 4 * 4 * 12), 192),
        "fc1_b": u(ks[5], (120,), 192),
        "fc2_w": u(ks[6], (60, 120), 120),
        "fc2_b": u(ks[7], (60,), 120),
        "out_w": u(ks[8], (10, 60), 60),
        "out_b": u(ks[9], (10,), 60),
    }


def reference_forward(x, p):
    def conv(x, w, b):
        y = jax.lax.conv_general_dilated(
            x, w, (1, 1), "VALID", dimension_numbers=("NCHW", "OIHW", "NCHW"))
        return jax.nn.relu(y + b.reshape(1, -1, 1, 1))

    def pool(x):
        return jax.lax.reduce_window(x, -jnp.inf, jax.lax.max,
                                     (1, 1, 2, 2), (1, 1, 2, 2), "VALID")

    h = pool(conv(x, p["conv1_w"], p["conv1_b"]))
    h = pool(conv(h, p["conv2_w"], p["conv2_b"]))
    flat = h.reshape(h.shape[0], -1)
    h = jax.nn.relu(flat @ p["fc1_w"].T + p["fc1_b"])
    h = jax.nn.relu(h @ p["fc2_w"].T + p["fc2_b"])
    logits = h @ p["out_w"].T + p["out_b"]
    return jax.nn.softmax(logits, axis=1)


# ----------------------------------- main ------------------------------------

if __name__ == "__main__":
    key = jax.random.PRNGKey(0)
    pkey, xkey = jax.random.split(key)
    params = init_params(pkey)
    kparams = prep_params(params)   # one-time kernel-layout weight prep

    # LeNet-style forward requires 28x28 single-channel input (fc1 expects 4*4*12).
    x = jax.random.normal(xkey, (2, 1, 28, 28), jnp.float32)

    out = jax.block_until_ready(fused_forward(x, kparams))
    ref = reference_forward(x, params)

    assert out.shape == (2, 10)
    assert bool(jnp.all(jnp.isfinite(out)))
    assert bool(jnp.allclose(out, ref, atol=1e-3, rtol=1e-3)), "mismatch vs JAX reference"
    print("KERNEL_OK")
</pallas_src>

<mosaic_0001>
module attributes {stable_mosaic.version = 11 : i64} {
  func.func @_lenet_kernel(%arg0: i32, %arg1: memref<1x1792xf32, #tpu.memory_space<vmem>>, %arg2: memref<8x32xf32, #tpu.memory_space<vmem>>, %arg3: memref<8x1xf32, #tpu.memory_space<vmem>>, %arg4: memref<784x144xf32, #tpu.memory_space<vmem>>, %arg5: memref<16x200xf32, #tpu.memory_space<vmem>>, %arg6: memref<16x1xf32, #tpu.memory_space<vmem>>, %arg7: memref<144x16xf32, #tpu.memory_space<vmem>>, %arg8: memref<256x128xf32, #tpu.memory_space<vmem>>, %arg9: memref<1x128xf32, #tpu.memory_space<vmem>>, %arg10: memref<128x64xf32, #tpu.memory_space<vmem>>, %arg11: memref<1x64xf32, #tpu.memory_space<vmem>>, %arg12: memref<64x10xf32, #tpu.memory_space<vmem>>, %arg13: memref<1x10xf32, #tpu.memory_space<vmem>>, %arg14: memref<2x10xf32, #tpu.memory_space<vmem>>, %arg15: memref<32x1664xf32, #tpu.memory_space<vmem>>, %arg16: memref<8x1664xf32, #tpu.memory_space<vmem>>, %arg17: memref<8x448xf32, #tpu.memory_space<vmem>>, %arg18: memref<200x384xf32, #tpu.memory_space<vmem>>, %arg19: memref<16x384xf32, #tpu.memory_space<vmem>>, %arg20: memref<8x256xf32, #tpu.memory_space<vmem>>) attributes {dimension_semantics = [#tpu.dimension_semantics<arbitrary>], iteration_bounds = array<i64: 1>, scalar_prefetch = 0 : i64, scratch_operands = 6 : i64, tpu.core_type = #tpu.core_type<tc>, window_params = [{pipeline_mode = #tpu.pipeline_mode<synchronous>, transform_indices = @transform_0, window_bounds = array<i64: 1, 1792>}, {pipeline_mode = #tpu.pipeline_mode<synchronous>, transform_indices = @transform_1, window_bounds = array<i64: 8, 32>}, {pipeline_mode = #tpu.pipeline_mode<synchronous>, transform_indices = @transform_2, window_bounds = array<i64: 8, 1>}, {pipeline_mode = #tpu.pipeline_mode<synchronous>, transform_indices = @transform_3, window_bounds = array<i64: 784, 144>}, {pipeline_mode = #tpu.pipeline_mode<synchronous>, transform_indices = @transform_4, window_bounds = array<i64: 16, 200>}, {pipeline_mode = #tpu.pipeline_mode<synchronous>, transform_indices = @transform_5, window_bounds = array<i64: 16, 1>}, {pipeline_mode = #tpu.pipeline_mode<synchronous>, transform_indices = @transform_6, window_bounds = array<i64: 144, 16>}, {pipeline_mode = #tpu.pipeline_mode<synchronous>, transform_indices = @transform_7, window_bounds = array<i64: 256, 128>}, {pipeline_mode = #tpu.pipeline_mode<synchronous>, transform_indices = @transform_8, window_bounds = array<i64: 1, 128>}, {pipeline_mode = #tpu.pipeline_mode<synchronous>, transform_indices = @transform_9, window_bounds = array<i64: 128, 64>}, {pipeline_mode = #tpu.pipeline_mode<synchronous>, transform_indices = @transform_10, window_bounds = array<i64: 1, 64>}, {pipeline_mode = #tpu.pipeline_mode<synchronous>, transform_indices = @transform_11, window_bounds = array<i64: 64, 10>}, {pipeline_mode = #tpu.pipeline_mode<synchronous>, transform_indices = @transform_12, window_bounds = array<i64: 1, 10>}, {pipeline_mode = #tpu.pipeline_mode<synchronous>, transform_indices = @transform_13, window_bounds = array<i64: 2, 10>}]} {
    %c0 = arith.constant 0 : index
    %c0_0 = arith.constant 0 : index
    %0 = vector.load %arg1[%c0, %c0_0] : memref<1x1792xf32, #tpu.memory_space<vmem>>, vector<1x1664xf32>
    %c0_1 = arith.constant 0 : index
    %c0_2 = arith.constant 0 : index
    %1 = vector.load %arg15[%c0_1, %c0_2] : memref<32x1664xf32, #tpu.memory_space<vmem>>, vector<1x1664xf32>
    tpu.vector_store %arg15[%c0_1, %c0_2], %0 {strides = array<i32>} : memref<32x1664xf32, #tpu.memory_space<vmem>>, vector<1x1664xf32>,
    %c0_3 = arith.constant 0 : index
    %c1 = arith.constant 1 : index
    %2 = vector.load %arg1[%c0_3, %c1] : memref<1x1792xf32, #tpu.memory_space<vmem>>, vector<1x1664xf32>
    %c1_4 = arith.constant 1 : index
    %c0_5 = arith.constant 0 : index
    %3 = vector.load %arg15[%c1_4, %c0_5] : memref<32x1664xf32, #tpu.memory_space<vmem>>, vector<1x1664xf32>
    tpu.vector_store %arg15[%c1_4, %c0_5], %2 {strides = array<i32>} : memref<32x1664xf32, #tpu.memory_space<vmem>>, vector<1x1664xf32>,
    %c0_6 = arith.constant 0 : index
    %c2 = arith.constant 2 : index
    %4 = vector.load %arg1[%c0_6, %c2] : memref<1x1792xf32, #tpu.memory_space<vmem>>, vector<1x1664xf32>
    %c2_7 = arith.constant 2 : index
    %c0_8 = arith.constant 0 : index
    %5 = vector.load %arg15[%c2_7, %c0_8] : memref<32x1664xf32, #tpu.memory_space<vmem>>, vector<1x1664xf32>
    tpu.vector_store %arg15[%c2_7, %c0_8], %4 {strides = array<i32>} : memref<32x1664xf32, #tpu.memory_space<vmem>>, vector<1x1664xf32>,
    %c0_9 = arith.constant 0 : index
    %c3 = arith.constant 3 : index
    %6 = vector.load %arg1[%c0_9, %c3] : memref<1x1792xf32, #tpu.memory_space<vmem>>, vector<1x1664xf32>
    %c3_10 = arith.constant 3 : index
    %c0_11 = arith.constant 0 : index
    %7 = vector.load %arg15[%c3_10, %c0_11] : memref<32x1664xf32, #tpu.memory_space<vmem>>, vector<1x1664xf32>
    tpu.vector_store %arg15[%c3_10, %c0_11], %6 {strides = array<i32>} : memref<32x1664xf32, #tpu.memory_space<vmem>>, vector<1x1664xf32>,
    %c0_12 = arith.constant 0 : index
    %c4 = arith.constant 4 : index
    %8 = vector.load %arg1[%c0_12, %c4] : memref<1x1792xf32, #tpu.memory_space<vmem>>, vector<1x1664xf32>
    %c4_13 = arith.constant 4 : index
    %c0_14 = arith.constant 0 : index
    %9 = vector.load %arg15[%c4_13, %c0_14] : memref<32x1664xf32, #tpu.memory_space<vmem>>, vector<1x1664xf32>
    tpu.vector_store %arg15[%c4_13, %c0_14], %8 {strides = array<i32>} : memref<32x1664xf32, #tpu.memory_space<vmem>>, vector<1x1664xf32>,
    %c0_15 = arith.constant 0 : index
    %c28 = arith.constant 28 : index
    %10 = vector.load %arg1[%c0_15, %c28] : memref<1x1792xf32, #tpu.memory_space<vmem>>, vector<1x1664xf32>
    %c5 = arith.constant 5 : index
    %c0_16 = arith.constant 0 : index
    %11 = vector.load %arg15[%c5, %c0_16] : memref<32x1664xf32, #tpu.memory_space<vmem>>, vector<1x1664xf32>
    tpu.vector_store %arg15[%c5, %c0_16], %10 {strides = array<i32>} : memref<32x1664xf32, #tpu.memory_space<vmem>>, vector<1x1664xf32>,
    %c0_17 = arith.constant 0 : index
    %c29 = arith.constant 29 : index
    %12 = vector.load %arg1[%c0_17, %c29] : memref<1x1792xf32, #tpu.memory_space<vmem>>, vector<1x1664xf32>
    %c6 = arith.constant 6 : index
    %c0_18 = arith.constant 0 : index
    %13 = vector.load %arg15[%c6, %c0_18] : memref<32x1664xf32, #tpu.memory_space<vmem>>, vector<1x1664xf32>
    tpu.vector_store %arg15[%c6, %c0_18], %12 {strides = array<i32>} : memref<32x1664xf32, #tpu.memory_space<vmem>>, vector<1x1664xf32>,
    %c0_19 = arith.constant 0 : index
    %c30 = arith.constant 30 : index
    %14 = vector.load %arg1[%c0_19, %c30] : memref<1x1792xf32, #tpu.memory_space<vmem>>, vector<1x1664xf32>
    %c7 = arith.constant 7 : index
    %c0_20 = arith.constant 0 : index
    %15 = vector.load %arg15[%c7, %c0_20] : memref<32x1664xf32, #tpu.memory_space<vmem>>, vector<1x1664xf32>
    tpu.vector_store %arg15[%c7, %c0_20], %14 {strides = array<i32>} : memref<32x1664xf32, #tpu.memory_space<vmem>>, vector<1x1664xf32>,
    %c0_21 = arith.constant 0 : index
    %c31 = arith.constant 31 : index
    %16 = vector.load %arg1[%c0_21, %c31] : memref<1x1792xf32, #tpu.memory_space<vmem>>, vector<1x1664xf32>
    %c8 = arith.constant 8 : index
    %c0_22 = arith.constant 0 : index
    %17 = vector.load %arg15[%c8, %c0_22] : memref<32x1664xf32, #tpu.memory_space<vmem>>, vector<1x1664xf32>
    tpu.vector_store %arg15[%c8, %c0_22], %16 {strides = array<i32>} : memref<32x1664xf32, #tpu.memory_space<vmem>>, vector<1x1664xf32>,
    %c0_23 = arith.constant 0 : index
    %c32 = arith.constant 32 : index
    %18 = vector.load %arg1[%c0_23, %c32] : memref<1x1792xf32, #tpu.memory_space<vmem>>, vector<1x1664xf32>
    %c9 = arith.constant 9 : index
    %c0_24 = arith.constant 0 : index
    %19 = vector.load %arg15[%c9, %c0_24] : memref<32x1664xf32, #tpu.memory_space<vmem>>, vector<1x1664xf32>
    tpu.vector_store %arg15[%c9, %c0_24], %18 {strides = array<i32>} : memref<32x1664xf32, #tpu.memory_space<vmem>>, vector<1x1664xf32>,
    %c0_25 = arith.constant 0 : index
    %c56 = arith.constant 56 : index
    %20 = vector.load %arg1[%c0_25, %c56] : memref<1x1792xf32, #tpu.memory_space<vmem>>, vector<1x1664xf32>
    %c10 = arith.constant 10 : index
    %c0_26 = arith.constant 0 : index
    %21 = vector.load %arg15[%c10, %c0_26] : memref<32x1664xf32, #tpu.memory_space<vmem>>, vector<1x1664xf32>
    tpu.vector_store %arg15[%c10, %c0_26], %20 {strides = array<i32>} : memref<32x1664xf32, #tpu.memory_space<vmem>>, vector<1x1664xf32>,
    %c0_27 = arith.constant 0 : index
    %c57 = arith.constant 57 : index
    %22 = vector.load %arg1[%c0_27, %c57] : memref<1x1792xf32, #tpu.memory_space<vmem>>, vector<1x1664xf32>
    %c11 = arith.constant 11 : index
    %c0_28 = arith.constant 0 : index
    %23 = vector.load %arg15[%c11, %c0_28] : memref<32x1664xf32, #tpu.memory_space<vmem>>, vector<1x1664xf32>
    tpu.vector_store %arg15[%c11, %c0_28], %22 {strides = array<i32>} : memref<32x1664xf32, #tpu.memory_space<vmem>>, vector<1x1664xf32>,
    %c0_29 = arith.constant 0 : index
    %c58 = arith.constant 58 : index
    %24 = vector.load %arg1[%c0_29, %c58] : memref<1x1792xf32, #tpu.memory_space<vmem>>, vector<1x1664xf32>
    %c12 = arith.constant 12 : index
    %c0_30 = arith.constant 0 : index
    %25 = vector.load %arg15[%c12, %c0_30] : memref<32x1664xf32, #tpu.memory_space<vmem>>, vector<1x1664xf32>
    tpu.vector_store %arg15[%c12, %c0_30], %24 {strides = array<i32>} : memref<32x1664xf32, #tpu.memory_space<vmem>>, vector<1x1664xf32>,
    %c0_31 = arith.constant 0 : index
    %c59 = arith.constant 59 : index
    %26 = vector.load %arg1[%c0_31, %c59] : memref<1x1792xf32, #tpu.memory_space<vmem>>, vector<1x1664xf32>
    %c13 = arith.constant 13 : index
    %c0_32 = arith.constant 0 : index
    %27 = vector.load %arg15[%c13, %c0_32] : memref<32x1664xf32, #tpu.memory_space<vmem>>, vector<1x1664xf32>
    tpu.vector_store %arg15[%c13, %c0_32], %26 {strides = array<i32>} : memref<32x1664xf32, #tpu.memory_space<vmem>>, vector<1x1664xf32>,
    %c0_33 = arith.constant 0 : index
    %c60 = arith.constant 60 : index
    %28 = vector.load %arg1[%c0_33, %c60] : memref<1x1792xf32, #tpu.memory_space<vmem>>, vector<1x1664xf32>
    %c14 = arith.constant 14 : index
    %c0_34 = arith.constant 0 : index
    %29 = vector.load %arg15[%c14, %c0_34] : memref<32x1664xf32, #tpu.memory_space<vmem>>, vector<1x1664xf32>
    tpu.vector_store %arg15[%c14, %c0_34], %28 {strides = array<i32>} : memref<32x1664xf32, #tpu.memory_space<vmem>>, vector<1x1664xf32>,
    %c0_35 = arith.constant 0 : index
    %c84 = arith.constant 84 : index
    %30 = vector.load %arg1[%c0_35, %c84] : memref<1x1792xf32, #tpu.memory_space<vmem>>, vector<1x1664xf32>
    %c15 = arith.constant 15 : index
    %c0_36 = arith.constant 0 : index
    %31 = vector.load %arg15[%c15, %c0_36] : memref<32x1664xf32, #tpu.memory_space<vmem>>, vector<1x1664xf32>
    tpu.vector_store %arg15[%c15, %c0_36], %30 {strides = array<i32>} : memref<32x1664xf32, #tpu.memory_space<vmem>>, vector<1x1664xf32>,
    %c0_37 = arith.constant 0 : index
    %c85 = arith.constant 85 : index
    %32 = vector.load %arg1[%c0_37, %c85] : memref<1x1792xf32, #tpu.memory_space<vmem>>, vector<1x1664xf32>
    %c16 = arith.constant 16 : index
    %c0_38 = arith.constant 0 : index
    %33 = vector.load %arg15[%c16, %c0_38] : memref<32x1664xf32, #tpu.memory_space<vmem>>, vector<1x1664xf32>
    tpu.vector_store %arg15[%c16, %c0_38], %32 {strides = array<i32>} : memref<32x1664xf32, #tpu.memory_space<vmem>>, vector<1x1664xf32>,
    %c0_39 = arith.constant 0 : index
    %c86 = arith.constant 86 : index
    %34 = vector.load %arg1[%c0_39, %c86] : memref<1x1792xf32, #tpu.memory_space<vmem>>, vector<1x1664xf32>
    %c17 = arith.constant 17 : index
    %c0_40 = arith.constant 0 : index
    %35 = vector.load %arg15[%c17, %c0_40] : memref<32x1664xf32, #tpu.memory_space<vmem>>, vector<1x1664xf32>
    tpu.vector_store %arg15[%c17, %c0_40], %34 {strides = array<i32>} : memref<32x1664xf32, #tpu.memory_space<vmem>>, vector<1x1664xf32>,
    %c0_41 = arith.constant 0 : index
    %c87 = arith.constant 87 : index
    %36 = vector.load %arg1[%c0_41, %c87] : memref<1x1792xf32, #tpu.memory_space<vmem>>, vector<1x1664xf32>
    %c18 = arith.constant 18 : index
    %c0_42 = arith.constant 0 : index
    %37 = vector.load %arg15[%c18, %c0_42] : memref<32x1664xf32, #tpu.memory_space<vmem>>, vector<1x1664xf32>
    tpu.vector_store %arg15[%c18, %c0_42], %36 {strides = array<i32>} : memref<32x1664xf32, #tpu.memory_space<vmem>>, vector<1x1664xf32>,
    %c0_43 = arith.constant 0 : index
    %c88 = arith.constant 88 : index
    %38 = vector.load %arg1[%c0_43, %c88] : memref<1x1792xf32, #tpu.memory_space<vmem>>, vector<1x1664xf32>
    %c19 = arith.constant 19 : index
    %c0_44 = arith.constant 0 : index
    %39 = vector.load %arg15[%c19, %c0_44] : memref<32x1664xf32, #tpu.memory_space<vmem>>, vector<1x1664xf32>
    tpu.vector_store %arg15[%c19, %c0_44], %38 {strides = array<i32>} : memref<32x1664xf32, #tpu.memory_space<vmem>>, vector<1x1664xf32>,
    %c0_45 = arith.constant 0 : index
    %c112 = arith.constant 112 : index
    %40 = vector.load %arg1[%c0_45, %c112] : memref<1x1792xf32, #tpu.memory_space<vmem>>, vector<1x1664xf32>
    %c20 = arith.constant 20 : index
    %c0_46 = arith.constant 0 : index
    %41 = vector.load %arg15[%c20, %c0_46] : memref<32x1664xf32, #tpu.memory_space<vmem>>, vector<1x1664xf32>
    tpu.vector_store %arg15[%c20, %c0_46], %40 {strides = array<i32>} : memref<32x1664xf32, #tpu.memory_space<vmem>>, vector<1x1664xf32>,
    %c0_47 = arith.constant 0 : index
    %c113 = arith.constant 113 : index
    %42 = vector.load %arg1[%c0_47, %c113] : memref<1x1792xf32, #tpu.memory_space<vmem>>, vector<1x1664xf32>
    %c21 = arith.constant 21 : index
    %c0_48 = arith.constant 0 : index
    %43 = vector.load %arg15[%c21, %c0_48] : memref<32x1664xf32, #tpu.memory_space<vmem>>, vector<1x1664xf32>
    tpu.vector_store %arg15[%c21, %c0_48], %42 {strides = array<i32>} : memref<32x1664xf32, #tpu.memory_space<vmem>>, vector<1x1664xf32>,
    %c0_49 = arith.constant 0 : index
    %c114 = arith.constant 114 : index
    %44 = vector.load %arg1[%c0_49, %c114] : memref<1x1792xf32, #tpu.memory_space<vmem>>, vector<1x1664xf32>
    %c22 = arith.constant 22 : index
    %c0_50 = arith.constant 0 : index
    %45 = vector.load %arg15[%c22, %c0_50] : memref<32x1664xf32, #tpu.memory_space<vmem>>, vector<1x1664xf32>
    tpu.vector_store %arg15[%c22, %c0_50], %44 {strides = array<i32>} : memref<32x1664xf32, #tpu.memory_space<vmem>>, vector<1x1664xf32>,
    %c0_51 = arith.constant 0 : index
    %c115 = arith.constant 115 : index
    %46 = vector.load %arg1[%c0_51, %c115] : memref<1x1792xf32, #tpu.memory_space<vmem>>, vector<1x1664xf32>
    %c23 = arith.constant 23 : index
    %c0_52 = arith.constant 0 : index
    %47 = vector.load %arg15[%c23, %c0_52] : memref<32x1664xf32, #tpu.memory_space<vmem>>, vector<1x1664xf32>
    tpu.vector_store %arg15[%c23, %c0_52], %46 {strides = array<i32>} : memref<32x1664xf32, #tpu.memory_space<vmem>>, vector<1x1664xf32>,
    %c0_53 = arith.constant 0 : index
    %c116 = arith.constant 116 : index
    %48 = vector.load %arg1[%c0_53, %c116] : memref<1x1792xf32, #tpu.memory_space<vmem>>, vector<1x1664xf32>
    %c24 = arith.constant 24 : index
    %c0_54 = arith.constant 0 : index
    %49 = vector.load %arg15[%c24, %c0_54] : memref<32x1664xf32, #tpu.memory_space<vmem>>, vector<1x1664xf32>
    tpu.vector_store %arg15[%c24, %c0_54], %48 {strides = array<i32>} : memref<32x1664xf32, #tpu.memory_space<vmem>>, vector<1x1664xf32>,
    %cst = arith.constant 0.000000e+00 : f32
    %50 = vector.broadcast %cst : f32 to vector<7x1664xf32>
    %c25 = arith.constant 25 : index
    %c0_55 = arith.constant 0 : index
    %51 = vector.load %arg15[%c25, %c0_55] : memref<32x1664xf32, #tpu.memory_space<vmem>>, vector<7x1664xf32>
    tpu.vector_store %arg15[%c25, %c0_55], %50 {strides = array<i32>} : memref<32x1664xf32, #tpu.memory_space<vmem>>, vector<7x1664xf32>,
    %c0_56 = arith.constant 0 : index
    %c0_57 = arith.constant 0 : index
    %52 = vector.load %arg2[%c0_56, %c0_57] : memref<8x32xf32, #tpu.memory_space<vmem>>, vector<8x32xf32>
    %c0_58 = arith.constant 0 : index
    %c0_59 = arith.constant 0 : index
    %53 = vector.load %arg15[%c0_58, %c0_59] : memref<32x1664xf32, #tpu.memory_space<vmem>>, vector<32x1664xf32>
    %cst_60 = arith.constant dense<0.000000e+00> : vector<8x1664xf32>
    %54 = tpu.matmul %52, %53, %cst_60 {dimension_numbers = #tpu.dot_dimension_numbers<[1], [0], [0], [1], [0, 0, 1, 1], [], []>} : vector<8x32xf32>, vector<32x1664xf32>, vector<8x1664xf32> -> vector<8x1664xf32>
    %c0_61 = arith.constant 0 : index
    %c0_62 = arith.constant 0 : index
    %55 = vector.load %arg3[%c0_61, %c0_62] : memref<8x1xf32, #tpu.memory_space<vmem>>, vector<8x1xf32>
    %56 = vector.broadcast %55 : vector<8x1xf32> to vector<8x1664xf32>
    %57 = arith.addf %54, %56 : vector<8x1664xf32>
    %cst_63 = arith.constant 0.000000e+00 : f32
    %58 = vector.broadcast %cst_63 : f32 to vector<8x1664xf32>
    %59 = arith.maximumf %57, %58 : vector<8x1664xf32>
    %c0_64 = arith.constant 0 : index
    %c0_65 = arith.constant 0 : index
    %60 = vector.load %arg16[%c0_64, %c0_65] : memref<8x1664xf32, #tpu.memory_space<vmem>>, vector<8x1664xf32>
    tpu.vector_store %arg16[%c0_64, %c0_65], %59 {strides = array<i32>} : memref<8x1664xf32, #tpu.memory_space<vmem>>, vector<8x1664xf32>,
    %cst_66 = arith.constant 0.000000e+00 : f32
    %61 = vector.broadcast %cst_66 : f32 to vector<8x160xf32>
    %c0_67 = arith.constant 0 : index
    %c288 = arith.constant 288 : index
    %62 = vector.load %arg17[%c0_67, %c288] : memref<8x448xf32, #tpu.memory_space<vmem>>, vector<8x160xf32>
    tpu.vector_store %arg17[%c0_67, %c288], %61 {strides = array<i32>} : memref<8x448xf32, #tpu.memory_space<vmem>>, vector<8x160xf32>,
    %c0_68 = arith.constant 0 : index
    %c0_69 = arith.constant 0 : index
    %63 = vector.load %arg16[%c0_68, %c0_69] : memref<8x1664xf32, #tpu.memory_space<vmem>>, vector<8x784xf32>
    %c0_70 = arith.constant 0 : index
    %c1_71 = arith.constant 1 : index
    %64 = vector.load %arg16[%c0_70, %c1_71] : memref<8x1664xf32, #tpu.memory_space<vmem>>, vector<8x784xf32>
    %65 = arith.maximumf %63, %64 : vector<8x784xf32>
    %c0_72 = arith.constant 0 : index
    %c28_73 = arith.constant 28 : index
    %66 = vector.load %arg16[%c0_72, %c28_73] : memref<8x1664xf32, #tpu.memory_space<vmem>>, vector<8x784xf32>
    %c0_74 = arith.constant 0 : index
    %c29_75 = arith.constant 29 : index
    %67 = vector.load %arg16[%c0_74, %c29_75] : memref<8x1664xf32, #tpu.memory_space<vmem>>, vector<8x784xf32>
    %68 = arith.maximumf %66, %67 : vector<8x784xf32>
    %69 = arith.maximumf %65, %68 : vector<8x784xf32>
    %c0_76 = arith.constant 0 : index
    %c0_77 = arith.constant 0 : index
    %70 = vector.load %arg4[%c0_76, %c0_77] : memref<784x144xf32, #tpu.memory_space<vmem>>, vector<784x144xf32>
    %cst_78 = arith.constant dense<0.000000e+00> : vector<8x144xf32>
    %71 = tpu.matmul %69, %70, %cst_78 {dimension_numbers = #tpu.dot_dimension_numbers<[1], [0], [0], [1], [0, 0, 1, 1], [], []>} : vector<8x784xf32>, vector<784x144xf32>, vector<8x144xf32> -> vector<8x144xf32>
    %c0_79 = arith.constant 0 : index
    %c0_80 = arith.constant 0 : index
    %72 = vector.load %arg17[%c0_79, %c0_80] : memref<8x448xf32, #tpu.memory_space<vmem>>, vector<8x144xf32>
    tpu.vector_store %arg17[%c0_79, %c0_80], %71 {strides = array<i32>} : memref<8x448xf32, #tpu.memory_space<vmem>>, vector<8x144xf32>,
    %c0_81 = arith.constant 0 : index
    %c784 = arith.constant 784 : index
    %73 = vector.load %arg16[%c0_81, %c784] : memref<8x1664xf32, #tpu.memory_space<vmem>>, vector<8x784xf32>
    %c0_82 = arith.constant 0 : index
    %c785 = arith.constant 785 : index
    %74 = vector.load %arg16[%c0_82, %c785] : memref<8x1664xf32, #tpu.memory_space<vmem>>, vector<8x784xf32>
    %75 = arith.maximumf %73, %74 : vector<8x784xf32>
    %c0_83 = arith.constant 0 : index
    %c812 = arith.constant 812 : index
    %76 = vector.load %arg16[%c0_83, %c812] : memref<8x1664xf32, #tpu.memory_space<vmem>>, vector<8x784xf32>
    %c0_84 = arith.constant 0 : index
    %c813 = arith.constant 813 : index
    %77 = vector.load %arg16[%c0_84, %c813] : memref<8x1664xf32, #tpu.memory_space<vmem>>, vector<8x784xf32>
    %78 = arith.maximumf %76, %77 : vector<8x784xf32>
    %79 = arith.maximumf %75, %78 : vector<8x784xf32>
    %c0_85 = arith.constant 0 : index
    %c0_86 = arith.constant 0 : index
    %80 = vector.load %arg4[%c0_85, %c0_86] : memref<784x144xf32, #tpu.memory_space<vmem>>, vector<784x144xf32>
    %cst_87 = arith.constant dense<0.000000e+00> : vector<8x144xf32>
    %81 = tpu.matmul %79, %80, %cst_87 {dimension_numbers = #tpu.dot_dimension_numbers<[1], [0], [0], [1], [0, 0, 1, 1], [], []>} : vector<8x784xf32>, vector<784x144xf32>, vector<8x144xf32> -> vector<8x144xf32>
    %c0_88 = arith.constant 0 : index
    %c144 = arith.constant 144 : index
    %82 = vector.load %arg17[%c0_88, %c144] : memref<8x448xf32, #tpu.memory_space<vmem>>, vector<8x144xf32>
    tpu.vector_store %arg17[%c0_88, %c144], %81 {strides = array<i32>} : memref<8x448xf32, #tpu.memory_space<vmem>>, vector<8x144xf32>,
    %c0_89 = arith.constant 0 : index
    %c0_90 = arith.constant 0 : index
    %83 = vector.load %arg17[%c0_89, %c0_90] : memref<8x448xf32, #tpu.memory_space<vmem>>, vector<8x384xf32>
    %c0_91 = arith.constant 0 : index
    %c0_92 = arith.constant 0 : index
    %84 = vector.load %arg18[%c0_91, %c0_92] : memref<200x384xf32, #tpu.memory_space<vmem>>, vector<8x384xf32>
    tpu.vector_store %arg18[%c0_91, %c0_92], %83 {strides = array<i32>} : memref<200x384xf32, #tpu.memory_space<vmem>>, vector<8x384xf32>,
    %c0_93 = arith.constant 0 : index
    %c1_94 = arith.constant 1 : index
    %85 = vector.load %arg17[%c0_93, %c1_94] : memref<8x448xf32, #tpu.memory_space<vmem>>, vector<8x384xf32>
    %c8_95 = arith.constant 8 : index
    %c0_96 = arith.constant 0 : index
    %86 = vector.load %arg18[%c8_95, %c0_96] : memref<200x384xf32, #tpu.memory_space<vmem>>, vector<8x384xf32>
    tpu.vector_store %arg18[%c8_95, %c0_96], %85 {strides = array<i32>} : memref<200x384xf32, #tpu.memory_space<vmem>>, vector<8x384xf32>,
    %c0_97 = arith.constant 0 : index
    %c2_98 = arith.constant 2 : index
    %87 = vector.load %arg17[%c0_97, %c2_98] : memref<8x448xf32, #tpu.memory_space<vmem>>, vector<8x384xf32>
    %c16_99 = arith.constant 16 : index
    %c0_100 = arith.constant 0 : index
    %88 = vector.load %arg18[%c16_99, %c0_100] : memref<200x384xf32, #tpu.memory_space<vmem>>, vector<8x384xf32>
    tpu.vector_store %arg18[%c16_99, %c0_100], %87 {strides = array<i32>} : memref<200x384xf32, #tpu.memory_space<vmem>>, vector<8x384xf32>,
    %c0_101 = arith.constant 0 : index
    %c3_102 = arith.constant 3 : index
    %89 = vector.load %arg17[%c0_101, %c3_102] : memref<8x448xf32, #tpu.memory_space<vmem>>, vector<8x384xf32>
    %c24_103 = arith.constant 24 : index
    %c0_104 = arith.constant 0 : index
    %90 = vector.load %arg18[%c24_103, %c0_104] : memref<200x384xf32, #tpu.memory_space<vmem>>, vector<8x384xf32>
    tpu.vector_store %arg18[%c24_103, %c0_104], %89 {strides = array<i32>} : memref<200x384xf32, #tpu.memory_space<vmem>>, vector<8x384xf32>,
    %c0_105 = arith.constant 0 : index
    %c4_106 = arith.constant 4 : index
    %91 = vector.load %arg17[%c0_105, %c4_106] : memref<8x448xf32, #tpu.memory_space<vmem>>, vector<8x384xf32>
    %c32_107 = arith.constant 32 : index
    %c0_108 = arith.constant 0 : index
    %92 = vector.load %arg18[%c32_107, %c0_108] : memref<200x384xf32, #tpu.memory_space<vmem>>, vector<8x384xf32>
    tpu.vector_store %arg18[%c32_107, %c0_108], %91 {strides = array<i32>} : memref<200x384xf32, #tpu.memory_space<vmem>>, vector<8x384xf32>,
    %c0_109 = arith.constant 0 : index
    %c12_110 = arith.constant 12 : index
    %93 = vector.load %arg17[%c0_109, %c12_110] : memref<8x448xf32, #tpu.memory_space<vmem>>, vector<8x384xf32>
    %c40 = arith.constant 40 : index
    %c0_111 = arith.constant 0 : index
    %94 = vector.load %arg18[%c40, %c0_111] : memref<200x384xf32, #tpu.memory_space<vmem>>, vector<8x384xf32>
    tpu.vector_store %arg18[%c40, %c0_111], %93 {strides = array<i32>} : memref<200x384xf32, #tpu.memory_space<vmem>>, vector<8x384xf32>,
    %c0_112 = arith.constant 0 : index
    %c13_113 = arith.constant 13 : index
    %95 = vector.load %arg17[%c0_112, %c13_113] : memref<8x448xf32, #tpu.memory_space<vmem>>, vector<8x384xf32>
    %c48 = arith.constant 48 : index
    %c0_114 = arith.constant 0 : index
    %96 = vector.load %arg18[%c48, %c0_114] : memref<200x384xf32, #tpu.memory_space<vmem>>, vector<8x384xf32>
    tpu.vector_store %arg18[%c48, %c0_114], %95 {strides = array<i32>} : memref<200x384xf32, #tpu.memory_space<vmem>>, vector<8x384xf32>,
    %c0_115 = arith.constant 0 : index
    %c14_116 = arith.constant 14 : index
    %97 = vector.load %arg17[%c0_115, %c14_116] : memref<8x448xf32, #tpu.memory_space<vmem>>, vector<8x384xf32>
    %c56_117 = arith.constant 56 : index
    %c0_118 = arith.constant 0 : index
    %98 = vector.load %arg18[%c56_117, %c0_118] : memref<200x384xf32, #tpu.memory_space<vmem>>, vector<8x384xf32>
    tpu.vector_store %arg18[%c56_117, %c0_118], %97 {strides = array<i32>} : memref<200x384xf32, #tpu.memory_space<vmem>>, vector<8x384xf32>,
    %c0_119 = arith.constant 0 : index
    %c15_120 = arith.constant 15 : index
    %99 = vector.load %arg17[%c0_119, %c15_120] : memref<8x448xf32, #tpu.memory_space<vmem>>, vector<8x384xf32>
    %c64 = arith.constant 64 : index
    %c0_121 = arith.constant 0 : index
    %100 = vector.load %arg18[%c64, %c0_121] : memref<200x384xf32, #tpu.memory_space<vmem>>, vector<8x384xf32>
    tpu.vector_store %arg18[%c64, %c0_121], %99 {strides = array<i32>} : memref<200x384xf32, #tpu.memory_space<vmem>>, vector<8x384xf32>,
    %c0_122 = arith.constant 0 : index
    %c16_123 = arith.constant 16 : index
    %101 = vector.load %arg17[%c0_122, %c16_123] : memref<8x448xf32, #tpu.memory_space<vmem>>, vector<8x384xf32>
    %c72 = arith.constant 72 : index
    %c0_124 = arith.constant 0 : index
    %102 = vector.load %arg18[%c72, %c0_124] : memref<200x384xf32, #tpu.memory_space<vmem>>, vector<8x384xf32>
    tpu.vector_store %arg18[%c72, %c0_124], %101 {strides = array<i32>} : memref<200x384xf32, #tpu.memory_space<vmem>>, vector<8x384xf32>,
    %c0_125 = arith.constant 0 : index
    %c24_126 = arith.constant 24 : index
    %103 = vector.load %arg17[%c0_125, %c24_126] : memref<8x448xf32, #tpu.memory_space<vmem>>, vector<8x384xf32>
    %c80 = arith.constant 80 : index
    %c0_127 = arith.constant 0 : index
    %104 = vector.load %arg18[%c80, %c0_127] : memref<200x384xf32, #tpu.memory_space<vmem>>, vector<8x384xf32>
    tpu.vector_store %arg18[%c80, %c0_127], %103 {strides = array<i32>} : memref<200x384xf32, #tpu.memory_space<vmem>>, vector<8x384xf32>,
    %c0_128 = arith.constant 0 : index
    %c25_129 = arith.constant 25 : index
    %105 = vector.load %arg17[%c0_128, %c25_129] : memref<8x448xf32, #tpu.memory_space<vmem>>, vector<8x384xf32>
    %c88_130 = arith.constant 88 : index
    %c0_131 = arith.constant 0 : index
    %106 = vector.load %arg18[%c88_130, %c0_131] : memref<200x384xf32, #tpu.memory_space<vmem>>, vector<8x384xf32>
    tpu.vector_store %arg18[%c88_130, %c0_131], %105 {strides = array<i32>} : memref<200x384xf32, #tpu.memory_space<vmem>>, vector<8x384xf32>,
    %c0_132 = arith.constant 0 : index
    %c26 = arith.constant 26 : index
    %107 = vector.load %arg17[%c0_132, %c26] : memref<8x448xf32, #tpu.memory_space<vmem>>, vector<8x384xf32>
    %c96 = arith.constant 96 : index
    %c0_133 = arith.constant 0 : index
    %108 = vector.load %arg18[%c96, %c0_133] : memref<200x384xf32, #tpu.memory_space<vmem>>, vector<8x384xf32>
    tpu.vector_store %arg18[%c96, %c0_133], %107 {strides = array<i32>} : memref<200x384xf32, #tpu.memory_space<vmem>>, vector<8x384xf32>,
    %c0_134 = arith.constant 0 : index
    %c27 = arith.constant 27 : index
    %109 = vector.load %arg17[%c0_134, %c27] : memref<8x448xf32, #tpu.memory_space<vmem>>, vector<8x384xf32>
    %c104 = arith.constant 104 : index
    %c0_135 = arith.constant 0 : index
    %110 = vector.load %arg18[%c104, %c0_135] : memref<200x384xf32, #tpu.memory_space<vmem>>, vector<8x384xf32>
    tpu.vector_store %arg18[%c104, %c0_135], %109 {strides = array<i32>} : memref<200x384xf32, #tpu.memory_space<vmem>>, vector<8x384xf32>,
    %c0_136 = arith.constant 0 : index
    %c28_137 = arith.constant 28 : index
    %111 = vector.load %arg17[%c0_136, %c28_137] : memref<8x448xf32, #tpu.memory_space<vmem>>, vector<8x384xf32>
    %c112_138 = arith.constant 112 : index
    %c0_139 = arith.constant 0 : index
    %112 = vector.load %arg18[%c112_138, %c0_139] : memref<200x384xf32, #tpu.memory_space<vmem>>, vector<8x384xf32>
    tpu.vector_store %arg18[%c112_138, %c0_139], %111 {strides = array<i32>} : memref<200x384xf32, #tpu.memory_space<vmem>>, vector<8x384xf32>,
    %c0_140 = arith.constant 0 : index
    %c36 = arith.constant 36 : index
    %113 = vector.load %arg17[%c0_140, %c36] : memref<8x448xf32, #tpu.memory_space<vmem>>, vector<8x384xf32>
    %c120 = arith.constant 120 : index
    %c0_141 = arith.constant 0 : index
    %114 = vector.load %arg18[%c120, %c0_141] : memref<200x384xf32, #tpu.memory_space<vmem>>, vector<8x384xf32>
    tpu.vector_store %arg18[%c120, %c0_141], %113 {strides = array<i32>} : memref<200x384xf32, #tpu.memory_space<vmem>>, vector<8x384xf32>,
    %c0_142 = arith.constant 0 : index
    %c37 = arith.constant 37 : index
    %115 = vector.load %arg17[%c0_142, %c37] : memref<8x448xf32, #tpu.memory_space<vmem>>, vector<8x384xf32>
    %c128 = arith.constant 128 : index
    %c0_143 = arith.constant 0 : index
    %116 = vector.load %arg18[%c128, %c0_143] : memref<200x384xf32, #tpu.memory_space<vmem>>, vector<8x384xf32>
    tpu.vector_store %arg18[%c128, %c0_143], %115 {strides = array<i32>} : memref<200x384xf32, #tpu.memory_space<vmem>>, vector<8x384xf32>,
    %c0_144 = arith.constant 0 : index
    %c38 = arith.constant 38 : index
    %117 = vector.load %arg17[%c0_144, %c38] : memref<8x448xf32, #tpu.memory_space<vmem>>, vector<8x384xf32>
    %c136 = arith.constant 136 : index
    %c0_145 = arith.constant 0 : index
    %118 = vector.load %arg18[%c136, %c0_145] : memref<200x384xf32, #tpu.memory_space<vmem>>, vector<8x384xf32>
    tpu.vector_store %arg18[%c136, %c0_145], %117 {strides = array<i32>} : memref<200x384xf32, #tpu.memory_space<vmem>>, vector<8x384xf32>,
    %c0_146 = arith.constant 0 : index
    %c39 = arith.constant 39 : index
    %119 = vector.load %arg17[%c0_146, %c39] : memref<8x448xf32, #tpu.memory_space<vmem>>, vector<8x384xf32>
    %c144_147 = arith.constant 144 : index
    %c0_148 = arith.constant 0 : index
    %120 = vector.load %arg18[%c144_147, %c0_148] : memref<200x384xf32, #tpu.memory_space<vmem>>, vector<8x384xf32>
    tpu.vector_store %arg18[%c144_147, %c0_148], %119 {strides = array<i32>} : memref<200x384xf32, #tpu.memory_space<vmem>>, vector<8x384xf32>,
    %c0_149 = arith.constant 0 : index
    %c40_150 = arith.constant 40 : index
    %121 = vector.load %arg17[%c0_149, %c40_150] : memref<8x448xf32, #tpu.memory_space<vmem>>, vector<8x384xf32>
    %c152 = arith.constant 152 : index
    %c0_151 = arith.constant 0 : index
    %122 = vector.load %arg18[%c152, %c0_151] : memref<200x384xf32, #tpu.memory_space<vmem>>, vector<8x384xf32>
    tpu.vector_store %arg18[%c152, %c0_151], %121 {strides = array<i32>} : memref<200x384xf32, #tpu.memory_space<vmem>>, vector<8x384xf32>,
    %c0_152 = arith.constant 0 : index
    %c48_153 = arith.constant 48 : index
    %123 = vector.load %arg17[%c0_152, %c48_153] : memref<8x448xf32, #tpu.memory_space<vmem>>, vector<8x384xf32>
    %c160 = arith.constant 160 : index
    %c0_154 = arith.constant 0 : index
    %124 = vector.load %arg18[%c160, %c0_154] : memref<200x384xf32, #tpu.memory_space<vmem>>, vector<8x384xf32>
    tpu.vector_store %arg18[%c160, %c0_154], %123 {strides = array<i32>} : memref<200x384xf32, #tpu.memory_space<vmem>>, vector<8x384xf32>,
    %c0_155 = arith.constant 0 : index
    %c49 = arith.constant 49 : index
    %125 = vector.load %arg17[%c0_155, %c49] : memref<8x448xf32, #tpu.memory_space<vmem>>, vector<8x384xf32>
    %c168 = arith.constant 168 : index
    %c0_156 = arith.constant 0 : index
    %126 = vector.load %arg18[%c168, %c0_156] : memref<200x384xf32, #tpu.memory_space<vmem>>, vector<8x384xf32>
    tpu.vector_store %arg18[%c168, %c0_156], %125 {strides = array<i32>} : memref<200x384xf32, #tpu.memory_space<vmem>>, vector<8x384xf32>,
    %c0_157 = arith.constant 0 : index
    %c50 = arith.constant 50 : index
    %127 = vector.load %arg17[%c0_157, %c50] : memref<8x448xf32, #tpu.memory_space<vmem>>, vector<8x384xf32>
    %c176 = arith.constant 176 : index
    %c0_158 = arith.constant 0 : index
    %128 = vector.load %arg18[%c176, %c0_158] : memref<200x384xf32, #tpu.memory_space<vmem>>, vector<8x384xf32>
    tpu.vector_store %arg18[%c176, %c0_158], %127 {strides = array<i32>} : memref<200x384xf32, #tpu.memory_space<vmem>>, vector<8x384xf32>,
    %c0_159 = arith.constant 0 : index
    %c51 = arith.constant 51 : index
    %129 = vector.load %arg17[%c0_159, %c51] : memref<8x448xf32, #tpu.memory_space<vmem>>, vector<8x384xf32>
    %c184 = arith.constant 184 : index
    %c0_160 = arith.constant 0 : index
    %130 = vector.load %arg18[%c184, %c0_160] : memref<200x384xf32, #tpu.memory_space<vmem>>, vector<8x384xf32>
    tpu.vector_store %arg18[%c184, %c0_160], %129 {strides = array<i32>} : memref<200x384xf32, #tpu.memory_space<vmem>>, vector<8x384xf32>,
    %c0_161 = arith.constant 0 : index
    %c52 = arith.constant 52 : index
    %131 = vector.load %arg17[%c0_161, %c52] : memref<8x448xf32, #tpu.memory_space<vmem>>, vector<8x384xf32>
    %c192 = arith.constant 192 : index
    %c0_162 = arith.constant 0 : index
    %132 = vector.load %arg18[%c192, %c0_162] : memref<200x384xf32, #tpu.memory_space<vmem>>, vector<8x384xf32>
    tpu.vector_store %arg18[%c192, %c0_162], %131 {strides = array<i32>} : memref<200x384xf32, #tpu.memory_space<vmem>>, vector<8x384xf32>,
    %c0_163 = arith.constant 0 : index
    %c0_164 = arith.constant 0 : index
    %133 = vector.load %arg5[%c0_163, %c0_164] : memref<16x200xf32, #tpu.memory_space<vmem>>, vector<16x200xf32>
    %c0_165 = arith.constant 0 : index
    %c0_166 = arith.constant 0 : index
    %134 = vector.load %arg18[%c0_165, %c0_166] : memref<200x384xf32, #tpu.memory_space<vmem>>, vector<200x384xf32>
    %cst_167 = arith.constant dense<0.000000e+00> : vector<16x384xf32>
    %135 = tpu.matmul %133, %134, %cst_167 {dimension_numbers = #tpu.dot_dimension_numbers<[1], [0], [0], [1], [0, 0, 1, 1], [], []>} : vector<16x200xf32>, vector<200x384xf32>, vector<16x384xf32> -> vector<16x384xf32>
    %c0_168 = arith.constant 0 : index
    %c0_169 = arith.constant 0 : index
    %136 = vector.load %arg6[%c0_168, %c0_169] : memref<16x1xf32, #tpu.memory_space<vmem>>, vector<16x1xf32>
    %137 = vector.broadcast %136 : vector<16x1xf32> to vector<16x384xf32>
    %138 = arith.addf %135, %137 : vector<16x384xf32>
    %cst_170 = arith.constant 0.000000e+00 : f32
    %139 = vector.broadcast %cst_170 : f32 to vector<16x384xf32>
    %140 = arith.maximumf %138, %139 : vector<16x384xf32>
    %c0_171 = arith.constant 0 : index
    %c0_172 = arith.constant 0 : index
    %141 = vector.load %arg19[%c0_171, %c0_172] : memref<16x384xf32, #tpu.memory_space<vmem>>, vector<16x384xf32>
    tpu.vector_store %arg19[%c0_171, %c0_172], %140 {strides = array<i32>} : memref<16x384xf32, #tpu.memory_space<vmem>>, vector<16x384xf32>,
    %cst_173 = arith.constant 0.000000e+00 : f32
    %142 = vector.broadcast %cst_173 : f32 to vector<8x256xf32>
    %c0_174 = arith.constant 0 : index
    %c0_175 = arith.constant 0 : index
    %143 = vector.load %arg20[%c0_174, %c0_175] : memref<8x256xf32, #tpu.memory_space<vmem>>, vector<8x256xf32>
    tpu.vector_store %arg20[%c0_174, %c0_175], %142 {strides = array<i32>} : memref<8x256xf32, #tpu.memory_space<vmem>>, vector<8x256xf32>,
    %c0_176 = arith.constant 0 : index
    %c0_177 = arith.constant 0 : index
    %144 = vector.load %arg19[%c0_176, %c0_177] : memref<16x384xf32, #tpu.memory_space<vmem>>, vector<16x144xf32>
    %c0_178 = arith.constant 0 : index
    %c1_179 = arith.constant 1 : index
    %145 = vector.load %arg19[%c0_178, %c1_179] : memref<16x384xf32, #tpu.memory_space<vmem>>, vector<16x144xf32>
    %146 = arith.maximumf %144, %145 : vector<16x144xf32>
    %c0_180 = arith.constant 0 : index
    %c12_181 = arith.constant 12 : index
    %147 = vector.load %arg19[%c0_180, %c12_181] : memref<16x384xf32, #tpu.memory_space<vmem>>, vector<16x144xf32>
    %c0_182 = arith.constant 0 : index
    %c13_183 = arith.constant 13 : index
    %148 = vector.load %arg19[%c0_182, %c13_183] : memref<16x384xf32, #tpu.memory_space<vmem>>, vector<16x144xf32>
    %149 = arith.maximumf %147, %148 : vector<16x144xf32>
    %150 = arith.maximumf %146, %149 : vector<16x144xf32>
    %c0_184 = arith.constant 0 : index
    %c0_185 = arith.constant 0 : index
    %151 = vector.load %arg7[%c0_184, %c0_185] : memref<144x16xf32, #tpu.memory_space<vmem>>, vector<144x16xf32>
    %cst_186 = arith.constant dense<0.000000e+00> : vector<16x16xf32>
    %152 = tpu.matmul %150, %151, %cst_186 {dimension_numbers = #tpu.dot_dimension_numbers<[1], [0], [0], [1], [0, 0, 1, 1], [], []>} : vector<16x144xf32>, vector<144x16xf32>, vector<16x16xf32> -> vector<16x16xf32>
    %153 = vector.extract_strided_slice %152 {offsets = [0, 0], sizes = [1, 16], strides = [1, 1]} : vector<16x16xf32> to vector<1x16xf32>
    %c0_187 = arith.constant 0 : index
    %c0_188 = arith.constant 0 : index
    %154 = vector.load %arg20[%c0_187, %c0_188] : memref<8x256xf32, #tpu.memory_space<vmem>>, vector<1x16xf32>
    tpu.vector_store %arg20[%c0_187, %c0_188], %153 {strides = array<i32>} : memref<8x256xf32, #tpu.memory_space<vmem>>, vector<1x16xf32>,
    %155 = vector.extract_strided_slice %152 {offsets = [1, 0], sizes = [1, 16], strides = [1, 1]} : vector<16x16xf32> to vector<1x16xf32>
    %c0_189 = arith.constant 0 : index
    %c16_190 = arith.constant 16 : index
    %156 = vector.load %arg20[%c0_189, %c16_190] : memref<8x256xf32, #tpu.memory_space<vmem>>, vector<1x16xf32>
    tpu.vector_store %arg20[%c0_189, %c16_190], %155 {strides = array<i32>} : memref<8x256xf32, #tpu.memory_space<vmem>>, vector<1x16xf32>,
    %157 = vector.extract_strided_slice %152 {offsets = [2, 0], sizes = [1, 16], strides = [1, 1]} : vector<16x16xf32> to vector<1x16xf32>
    %c0_191 = arith.constant 0 : index
    %c32_192 = arith.constant 32 : index
    %158 = vector.load %arg20[%c0_191, %c32_192] : memref<8x256xf32, #tpu.memory_space<vmem>>, vector<1x16xf32>
    tpu.vector_store %arg20[%c0_191, %c32_192], %157 {strides = array<i32>} : memref<8x256xf32, #tpu.memory_space<vmem>>, vector<1x16xf32>,
    %159 = vector.extract_strided_slice %152 {offsets = [3, 0], sizes = [1, 16], strides = [1, 1]} : vector<16x16xf32> to vector<1x16xf32>
    %c0_193 = arith.constant 0 : index
    %c48_194 = arith.constant 48 : index
    %160 = vector.load %arg20[%c0_193, %c48_194] : memref<8x256xf32, #tpu.memory_space<vmem>>, vector<1x16xf32>
    tpu.vector_store %arg20[%c0_193, %c48_194], %159 {strides = array<i32>} : memref<8x256xf32, #tpu.memory_space<vmem>>, vector<1x16xf32>,
    %161 = vector.extract_strided_slice %152 {offsets = [4, 0], sizes = [1, 16], strides = [1, 1]} : vector<16x16xf32> to vector<1x16xf32>
    %c0_195 = arith.constant 0 : index
    %c64_196 = arith.constant 64 : index
    %162 = vector.load %arg20[%c0_195, %c64_196] : memref<8x256xf32, #tpu.memory_space<vmem>>, vector<1x16xf32>
    tpu.vector_store %arg20[%c0_195, %c64_196], %161 {strides = array<i32>} : memref<8x256xf32, #tpu.memory_space<vmem>>, vector<1x16xf32>,
    %163 = vector.extract_strided_slice %152 {offsets = [5, 0], sizes = [1, 16], strides = [1, 1]} : vector<16x16xf32> to vector<1x16xf32>
    %c0_197 = arith.constant 0 : index
    %c80_198 = arith.constant 80 : index
    %164 = vector.load %arg20[%c0_197, %c80_198] : memref<8x256xf32, #tpu.memory_space<vmem>>, vector<1x16xf32>
    tpu.vector_store %arg20[%c0_197, %c80_198], %163 {strides = array<i32>} : memref<8x256xf32, #tpu.memory_space<vmem>>, vector<1x16xf32>,
    %165 = vector.extract_strided_slice %152 {offsets = [6, 0], sizes = [1, 16], strides = [1, 1]} : vector<16x16xf32> to vector<1x16xf32>
    %c0_199 = arith.constant 0 : index
    %c96_200 = arith.constant 96 : index
    %166 = vector.load %arg20[%c0_199, %c96_200] : memref<8x256xf32, #tpu.memory_space<vmem>>, vector<1x16xf32>
    tpu.vector_store %arg20[%c0_199, %c96_200], %165 {strides = array<i32>} : memref<8x256xf32, #tpu.memory_space<vmem>>, vector<1x16xf32>,
    %167 = vector.extract_strided_slice %152 {offsets = [7, 0], sizes = [1, 16], strides = [1, 1]} : vector<16x16xf32> to vector<1x16xf32>
    %c0_201 = arith.constant 0 : index
    %c112_202 = arith.constant 112 : index
    %168 = vector.load %arg20[%c0_201, %c112_202] : memref<8x256xf32, #tpu.memory_space<vmem>>, vector<1x16xf32>
    tpu.vector_store %arg20[%c0_201, %c112_202], %167 {strides = array<i32>} : memref<8x256xf32, #tpu.memory_space<vmem>>, vector<1x16xf32>,
    %169 = vector.extract_strided_slice %152 {offsets = [8, 0], sizes = [1, 16], strides = [1, 1]} : vector<16x16xf32> to vector<1x16xf32>
    %c0_203 = arith.constant 0 : index
    %c128_204 = arith.constant 128 : index
    %170 = vector.load %arg20[%c0_203, %c128_204] : memref<8x256xf32, #tpu.memory_space<vmem>>, vector<1x16xf32>
    tpu.vector_store %arg20[%c0_203, %c128_204], %169 {strides = array<i32>} : memref<8x256xf32, #tpu.memory_space<vmem>>, vector<1x16xf32>,
    %171 = vector.extract_strided_slice %152 {offsets = [9, 0], sizes = [1, 16], strides = [1, 1]} : vector<16x16xf32> to vector<1x16xf32>
    %c0_205 = arith.constant 0 : index
    %c144_206 = arith.constant 144 : index
    %172 = vector.load %arg20[%c0_205, %c144_206] : memref<8x256xf32, #tpu.memory_space<vmem>>, vector<1x16xf32>
    tpu.vector_store %arg20[%c0_205, %c144_206], %171 {strides = array<i32>} : memref<8x256xf32, #tpu.memory_space<vmem>>, vector<1x16xf32>,
    %173 = vector.extract_strided_slice %152 {offsets = [10, 0], sizes = [1, 16], strides = [1, 1]} : vector<16x16xf32> to vector<1x16xf32>
    %c0_207 = arith.constant 0 : index
    %c160_208 = arith.constant 160 : index
    %174 = vector.load %arg20[%c0_207, %c160_208] : memref<8x256xf32, #tpu.memory_space<vmem>>, vector<1x16xf32>
    tpu.vector_store %arg20[%c0_207, %c160_208], %173 {strides = array<i32>} : memref<8x256xf32, #tpu.memory_space<vmem>>, vector<1x16xf32>,
    %175 = vector.extract_strided_slice %152 {offsets = [11, 0], sizes = [1, 16], strides = [1, 1]} : vector<16x16xf32> to vector<1x16xf32>
    %c0_209 = arith.constant 0 : index
    %c176_210 = arith.constant 176 : index
    %176 = vector.load %arg20[%c0_209, %c176_210] : memref<8x256xf32, #tpu.memory_space<vmem>>, vector<1x16xf32>
    tpu.vector_store %arg20[%c0_209, %c176_210], %175 {strides = array<i32>} : memref<8x256xf32, #tpu.memory_space<vmem>>, vector<1x16xf32>,
    %177 = vector.extract_strided_slice %152 {offsets = [12, 0], sizes = [1, 16], strides = [1, 1]} : vector<16x16xf32> to vector<1x16xf32>
    %c0_211 = arith.constant 0 : index
    %c192_212 = arith.constant 192 : index
    %178 = vector.load %arg20[%c0_211, %c192_212] : memref<8x256xf32, #tpu.memory_space<vmem>>, vector<1x16xf32>
    tpu.vector_store %arg20[%c0_211, %c192_212], %177 {strides = array<i32>} : memref<8x256xf32, #tpu.memory_space<vmem>>, vector<1x16xf32>,
    %179 = vector.extract_strided_slice %152 {offsets = [13, 0], sizes = [1, 16], strides = [1, 1]} : vector<16x16xf32> to vector<1x16xf32>
    %c0_213 = arith.constant 0 : index
    %c208 = arith.constant 208 : index
    %180 = vector.load %arg20[%c0_213, %c208] : memref<8x256xf32, #tpu.memory_space<vmem>>, vector<1x16xf32>
    tpu.vector_store %arg20[%c0_213, %c208], %179 {strides = array<i32>} : memref<8x256xf32, #tpu.memory_space<vmem>>, vector<1x16xf32>,
    %181 = vector.extract_strided_slice %152 {offsets = [14, 0], sizes = [1, 16], strides = [1, 1]} : vector<16x16xf32> to vector<1x16xf32>
    %c0_214 = arith.constant 0 : index
    %c224 = arith.constant 224 : index
    %182 = vector.load %arg20[%c0_214, %c224] : memref<8x256xf32, #tpu.memory_space<vmem>>, vector<1x16xf32>
    tpu.vector_store %arg20[%c0_214, %c224], %181 {strides = array<i32>} : memref<8x256xf32, #tpu.memory_space<vmem>>, vector<1x16xf32>,
    %183 = vector.extract_strided_slice %152 {offsets = [15, 0], sizes = [1, 16], strides = [1, 1]} : vector<16x16xf32> to vector<1x16xf32>
    %c0_215 = arith.constant 0 : index
    %c240 = arith.constant 240 : index
    %184 = vector.load %arg20[%c0_215, %c240] : memref<8x256xf32, #tpu.memory_space<vmem>>, vector<1x16xf32>
    tpu.vector_store %arg20[%c0_215, %c240], %183 {strides = array<i32>} : memref<8x256xf32, #tpu.memory_space<vmem>>, vector<1x16xf32>,
    %c0_216 = arith.constant 0 : index
    %c144_217 = arith.constant 144 : index
    %185 = vector.load %arg19[%c0_216, %c144_217] : memref<16x384xf32, #tpu.memory_space<vmem>>, vector<16x144xf32>
    %c0_218 = arith.constant 0 : index
    %c145 = arith.constant 145 : index
    %186 = vector.load %arg19[%c0_218, %c145] : memref<16x384xf32, #tpu.memory_space<vmem>>, vector<16x144xf32>
    %187 = arith.maximumf %185, %186 : vector<16x144xf32>
    %c0_219 = arith.constant 0 : index
    %c156 = arith.constant 156 : index
    %188 = vector.load %arg19[%c0_219, %c156] : memref<16x384xf32, #tpu.memory_space<vmem>>, vector<16x144xf32>
    %c0_220 = arith.constant 0 : index
    %c157 = arith.constant 157 : index
    %189 = vector.load %arg19[%c0_220, %c157] : memref<16x384xf32, #tpu.memory_space<vmem>>, vector<16x144xf32>
    %190 = arith.maximumf %188, %189 : vector<16x144xf32>
    %191 = arith.maximumf %187, %190 : vector<16x144xf32>
    %c0_221 = arith.constant 0 : index
    %c0_222 = arith.constant 0 : index
    %192 = vector.load %arg7[%c0_221, %c0_222] : memref<144x16xf32, #tpu.memory_space<vmem>>, vector<144x16xf32>
    %cst_223 = arith.constant dense<0.000000e+00> : vector<16x16xf32>
    %193 = tpu.matmul %191, %192, %cst_223 {dimension_numbers = #tpu.dot_dimension_numbers<[1], [0], [0], [1], [0, 0, 1, 1], [], []>} : vector<16x144xf32>, vector<144x16xf32>, vector<16x16xf32> -> vector<16x16xf32>
    %194 = vector.extract_strided_slice %193 {offsets = [0, 0], sizes = [1, 16], strides = [1, 1]} : vector<16x16xf32> to vector<1x16xf32>
    %c1_224 = arith.constant 1 : index
    %c0_225 = arith.constant 0 : index
    %195 = vector.load %arg20[%c1_224, %c0_225] : memref<8x256xf32, #tpu.memory_space<vmem>>, vector<1x16xf32>
    tpu.vector_store %arg20[%c1_224, %c0_225], %194 {strides = array<i32>} : memref<8x256xf32, #tpu.memory_space<vmem>>, vector<1x16xf32>,
    %196 = vector.extract_strided_slice %193 {offsets = [1, 0], sizes = [1, 16], strides = [1, 1]} : vector<16x16xf32> to vector<1x16xf32>
    %c1_226 = arith.constant 1 : index
    %c16_227 = arith.constant 16 : index
    %197 = vector.load %arg20[%c1_226, %c16_227] : memref<8x256xf32, #tpu.memory_space<vmem>>, vector<1x16xf32>
    tpu.vector_store %arg20[%c1_226, %c16_227], %196 {strides = array<i32>} : memref<8x256xf32, #tpu.memory_space<vmem>>, vector<1x16xf32>,
    %198 = vector.extract_strided_slice %193 {offsets = [2, 0], sizes = [1, 16], strides = [1, 1]} : vector<16x16xf32> to vector<1x16xf32>
    %c1_228 = arith.constant 1 : index
    %c32_229 = arith.constant 32 : index
    %199 = vector.load %arg20[%c1_228, %c32_229] : memref<8x256xf32, #tpu.memory_space<vmem>>, vector<1x16xf32>
    tpu.vector_store %arg20[%c1_228, %c32_229], %198 {strides = array<i32>} : memref<8x256xf32, #tpu.memory_space<vmem>>, vector<1x16xf32>,
    %200 = vector.extract_strided_slice %193 {offsets = [3, 0], sizes = [1, 16], strides = [1, 1]} : vector<16x16xf32> to vector<1x16xf32>
    %c1_230 = arith.constant 1 : index
    %c48_231 = arith.constant 48 : index
    %201 = vector.load %arg20[%c1_230, %c48_231] : memref<8x256xf32, #tpu.memory_space<vmem>>, vector<1x16xf32>
    tpu.vector_store %arg20[%c1_230, %c48_231], %200 {strides = array<i32>} : memref<8x256xf32, #tpu.memory_space<vmem>>, vector<1x16xf32>,
    %202 = vector.extract_strided_slice %193 {offsets = [4, 0], sizes = [1, 16], strides = [1, 1]} : vector<16x16xf32> to vector<1x16xf32>
    %c1_232 = arith.constant 1 : index
    %c64_233 = arith.constant 64 : index
    %203 = vector.load %arg20[%c1_232, %c64_233] : memref<8x256xf32, #tpu.memory_space<vmem>>, vector<1x16xf32>
    tpu.vector_store %arg20[%c1_232, %c64_233], %202 {strides = array<i32>} : memref<8x256xf32, #tpu.memory_space<vmem>>, vector<1x16xf32>,
    %204 = vector.extract_strided_slice %193 {offsets = [5, 0], sizes = [1, 16], strides = [1, 1]} : vector<16x16xf32> to vector<1x16xf32>
    %c1_234 = arith.constant 1 : index
    %c80_235 = arith.constant 80 : index
    %205 = vector.load %arg20[%c1_234, %c80_235] : memref<8x256xf32, #tpu.memory_space<vmem>>, vector<1x16xf32>
    tpu.vector_store %arg20[%c1_234, %c80_235], %204 {strides = array<i32>} : memref<8x256xf32, #tpu.memory_space<vmem>>, vector<1x16xf32>,
    %206 = vector.extract_strided_slice %193 {offsets = [6, 0], sizes = [1, 16], strides = [1, 1]} : vector<16x16xf32> to vector<1x16xf32>
    %c1_236 = arith.constant 1 : index
    %c96_237 = arith.constant 96 : index
    %207 = vector.load %arg20[%c1_236, %c96_237] : memref<8x256xf32, #tpu.memory_space<vmem>>, vector<1x16xf32>
    tpu.vector_store %arg20[%c1_236, %c96_237], %206 {strides = array<i32>} : memref<8x256xf32, #tpu.memory_space<vmem>>, vector<1x16xf32>,
    %208 = vector.extract_strided_slice %193 {offsets = [7, 0], sizes = [1, 16], strides = [1, 1]} : vector<16x16xf32> to vector<1x16xf32>
    %c1_238 = arith.constant 1 : index
    %c112_239 = arith.constant 112 : index
    %209 = vector.load %arg20[%c1_238, %c112_239] : memref<8x256xf32, #tpu.memory_space<vmem>>, vector<1x16xf32>
    tpu.vector_store %arg20[%c1_238, %c112_239], %208 {strides = array<i32>} : memref<8x256xf32, #tpu.memory_space<vmem>>, vector<1x16xf32>,
    %210 = vector.extract_strided_slice %193 {offsets = [8, 0], sizes = [1, 16], strides = [1, 1]} : vector<16x16xf32> to vector<1x16xf32>
    %c1_240 = arith.constant 1 : index
    %c128_241 = arith.constant 128 : index
    %211 = vector.load %arg20[%c1_240, %c128_241] : memref<8x256xf32, #tpu.memory_space<vmem>>, vector<1x16xf32>
    tpu.vector_store %arg20[%c1_240, %c128_241], %210 {strides = array<i32>} : memref<8x256xf32, #tpu.memory_space<vmem>>, vector<1x16xf32>,
    %212 = vector.extract_strided_slice %193 {offsets = [9, 0], sizes = [1, 16], strides = [1, 1]} : vector<16x16xf32> to vector<1x16xf32>
    %c1_242 = arith.constant 1 : index
    %c144_243 = arith.constant 144 : index
    %213 = vector.load %arg20[%c1_242, %c144_243] : memref<8x256xf32, #tpu.memory_space<vmem>>, vector<1x16xf32>
    tpu.vector_store %arg20[%c1_242, %c144_243], %212 {strides = array<i32>} : memref<8x256xf32, #tpu.memory_space<vmem>>, vector<1x16xf32>,
    %214 = vector.extract_strided_slice %193 {offsets = [10, 0], sizes = [1, 16], strides = [1, 1]} : vector<16x16xf32> to vector<1x16xf32>
    %c1_244 = arith.constant 1 : index
    %c160_245 = arith.constant 160 : index
    %215 = vector.load %arg20[%c1_244, %c160_245] : memref<8x256xf32, #tpu.memory_space<vmem>>, vector<1x16xf32>
    tpu.vector_store %arg20[%c1_244, %c160_245], %214 {strides = array<i32>} : memref<8x256xf32, #tpu.memory_space<vmem>>, vector<1x16xf32>,
    %216 = vector.extract_strided_slice %193 {offsets = [11, 0], sizes = [1, 16], strides = [1, 1]} : vector<16x16xf32> to vector<1x16xf32>
    %c1_246 = arith.constant 1 : index
    %c176_247 = arith.constant 176 : index
    %217 = vector.load %arg20[%c1_246, %c176_247] : memref<8x256xf32, #tpu.memory_space<vmem>>, vector<1x16xf32>
    tpu.vector_store %arg20[%c1_246, %c176_247], %216 {strides = array<i32>} : memref<8x256xf32, #tpu.memory_space<vmem>>, vector<1x16xf32>,
    %218 = vector.extract_strided_slice %193 {offsets = [12, 0], sizes = [1, 16], strides = [1, 1]} : vector<16x16xf32> to vector<1x16xf32>
    %c1_248 = arith.constant 1 : index
    %c192_249 = arith.constant 192 : index
    %219 = vector.load %arg20[%c1_248, %c192_249] : memref<8x256xf32, #tpu.memory_space<vmem>>, vector<1x16xf32>
    tpu.vector_store %arg20[%c1_248, %c192_249], %218 {strides = array<i32>} : memref<8x256xf32, #tpu.memory_space<vmem>>, vector<1x16xf32>,
    %220 = vector.extract_strided_slice %193 {offsets = [13, 0], sizes = [1, 16], strides = [1, 1]} : vector<16x16xf32> to vector<1x16xf32>
    %c1_250 = arith.constant 1 : index
    %c208_251 = arith.constant 208 : index
    %221 = vector.load %arg20[%c1_250, %c208_251] : memref<8x256xf32, #tpu.memory_space<vmem>>, vector<1x16xf32>
    tpu.vector_store %arg20[%c1_250, %c208_251], %220 {strides = array<i32>} : memref<8x256xf32, #tpu.memory_space<vmem>>, vector<1x16xf32>,
    %222 = vector.extract_strided_slice %193 {offsets = [14, 0], sizes = [1, 16], strides = [1, 1]} : vector<16x16xf32> to vector<1x16xf32>
    %c1_252 = arith.constant 1 : index
    %c224_253 = arith.constant 224 : index
    %223 = vector.load %arg20[%c1_252, %c224_253] : memref<8x256xf32, #tpu.memory_space<vmem>>, vector<1x16xf32>
    tpu.vector_store %arg20[%c1_252, %c224_253], %222 {strides = array<i32>} : memref<8x256xf32, #tpu.memory_space<vmem>>, vector<1x16xf32>,
    %224 = vector.extract_strided_slice %193 {offsets = [15, 0], sizes = [1, 16], strides = [1, 1]} : vector<16x16xf32> to vector<1x16xf32>
    %c1_254 = arith.constant 1 : index
    %c240_255 = arith.constant 240 : index
    %225 = vector.load %arg20[%c1_254, %c240_255] : memref<8x256xf32, #tpu.memory_space<vmem>>, vector<1x16xf32>
    tpu.vector_store %arg20[%c1_254, %c240_255], %224 {strides = array<i32>} : memref<8x256xf32, #tpu.memory_space<vmem>>, vector<1x16xf32>,
    %c0_256 = arith.constant 0 : index
    %c0_257 = arith.constant 0 : index
    %226 = vector.load %arg20[%c0_256, %c0_257] : memref<8x256xf32, #tpu.memory_space<vmem>>, vector<8x256xf32>
    %c0_258 = arith.constant 0 : index
    %c0_259 = arith.constant 0 : index
    %227 = vector.load %arg8[%c0_258, %c0_259] : memref<256x128xf32, #tpu.memory_space<vmem>>, vector<256x128xf32>
    %cst_260 = arith.constant dense<0.000000e+00> : vector<8x128xf32>
    %228 = tpu.matmul %226, %227, %cst_260 {dimension_numbers = #tpu.dot_dimension_numbers<[1], [0], [0], [1], [0, 0, 1, 1], [], []>} : vector<8x256xf32>, vector<256x128xf32>, vector<8x128xf32> -> vector<8x128xf32>
    %c0_261 = arith.constant 0 : index
    %c0_262 = arith.constant 0 : index
    %229 = vector.load %arg9[%c0_261, %c0_262] : memref<1x128xf32, #tpu.memory_space<vmem>>, vector<1x128xf32>
    %230 = vector.broadcast %229 : vector<1x128xf32> to vector<8x128xf32>
    %231 = arith.addf %228, %230 : vector<8x128xf32>
    %cst_263 = arith.constant 0.000000e+00 : f32
    %232 = vector.broadcast %cst_263 : f32 to vector<8x128xf32>
    %233 = arith.maximumf %231, %232 : vector<8x128xf32>
    %c0_264 = arith.constant 0 : index
    %c0_265 = arith.constant 0 : index
    %234 = vector.load %arg10[%c0_264, %c0_265] : memref<128x64xf32, #tpu.memory_space<vmem>>, vector<128x64xf32>
    %cst_266 = arith.constant dense<0.000000e+00> : vector<8x64xf32>
    %235 = tpu.matmul %233, %234, %cst_266 {dimension_numbers = #tpu.dot_dimension_numbers<[1], [0], [0], [1], [0, 0, 1, 1], [], []>} : vector<8x128xf32>, vector<128x64xf32>, vector<8x64xf32> -> vector<8x64xf32>
    %c0_267 = arith.constant 0 : index
    %c0_268 = arith.constant 0 : index
    %236 = vector.load %arg11[%c0_267, %c0_268] : memref<1x64xf32, #tpu.memory_space<vmem>>, vector<1x64xf32>
    %237 = vector.broadcast %236 : vector<1x64xf32> to vector<8x64xf32>
    %238 = arith.addf %235, %237 : vector<8x64xf32>
    %cst_269 = arith.constant 0.000000e+00 : f32
    %239 = vector.broadcast %cst_269 : f32 to vector<8x64xf32>
    %240 = arith.maximumf %238, %239 : vector<8x64xf32>
    %c0_270 = arith.constant 0 : index
    %c0_271 = arith.constant 0 : index
    %241 = vector.load %arg12[%c0_270, %c0_271] : memref<64x10xf32, #tpu.memory_space<vmem>>, vector<64x10xf32>
    %cst_272 = arith.constant dense<0.000000e+00> : vector<8x10xf32>
    %242 = tpu.matmul %240, %241, %cst_272 {dimension_numbers = #tpu.dot_dimension_numbers<[1], [0], [0], [1], [0, 0, 1, 1], [], []>} : vector<8x64xf32>, vector<64x10xf32>, vector<8x10xf32> -> vector<8x10xf32>
    %c0_273 = arith.constant 0 : index
    %c0_274 = arith.constant 0 : index
    %243 = vector.load %arg13[%c0_273, %c0_274] : memref<1x10xf32, #tpu.memory_space<vmem>>, vector<1x10xf32>
    %244 = vector.broadcast %243 : vector<1x10xf32> to vector<8x10xf32>
    %245 = arith.addf %242, %244 : vector<8x10xf32>
    %cst_275 = arith.constant dense<0xFF800000> : vector<8xf32>
    %246 = vector.multi_reduction <maximumf>, %245, %cst_275 [1] : vector<8x10xf32> to vector<8xf32>
    %247 = vector.shape_cast %246 : vector<8xf32> to vector<8x1xf32>
    %248 = vector.broadcast %247 : vector<8x1xf32> to vector<8x10xf32>
    %249 = arith.subf %245, %248 : vector<8x10xf32>
    %250 = math.exp %249 : vector<8x10xf32>
    %cst_276 = arith.constant dense<0.000000e+00> : vector<8xf32>
    %251 = vector.multi_reduction <add>, %250, %cst_276 [1] : vector<8x10xf32> to vector<8xf32>
    %252 = vector.shape_cast %251 : vector<8xf32> to vector<8x1xf32>
    %253 = tpu.reciprocal %252 : vector<8x1xf32> -> vector<8x1xf32>
    %254 = vector.broadcast %253 : vector<8x1xf32> to vector<8x10xf32>
    %255 = arith.mulf %250, %254 : vector<8x10xf32>
    %256 = vector.extract_strided_slice %255 {offsets = [0, 0], sizes = [2, 10], strides = [1, 1]} : vector<8x10xf32> to vector<2x10xf32>
    %c0_277 = arith.constant 0 : index
    %c0_278 = arith.constant 0 : index
    %257 = vector.load %arg14[%c0_277, %c0_278] : memref<2x10xf32, #tpu.memory_space<vmem>>, vector<2x10xf32>
    tpu.vector_store %arg14[%c0_277, %c0_278], %256 {strides = array<i32>} : memref<2x10xf32, #tpu.memory_space<vmem>>, vector<2x10xf32>,
    return
  }
  func.func @transform_0(%arg0: i32) -> (i32, i32) {
    %c0_i32 = arith.constant 0 : i32
    %c0_i32_0 = arith.constant 0 : i32
    %c0_i32_1 = arith.constant 0 : i32
    return %c0_i32, %c0_i32_0 : i32, i32
  }
  func.func @transform_1(%arg0: i32) -> (i32, i32) {
    %c0_i32 = arith.constant 0 : i32
    %c0_i32_0 = arith.constant 0 : i32
    %c0_i32_1 = arith.constant 0 : i32
    return %c0_i32, %c0_i32_0 : i32, i32
  }
  func.func @transform_2(%arg0: i32) -> (i32, i32) {
    %c0_i32 = arith.constant 0 : i32
    %c0_i32_0 = arith.constant 0 : i32
    %c0_i32_1 = arith.constant 0 : i32
    return %c0_i32, %c0_i32_0 : i32, i32
  }
  func.func @transform_3(%arg0: i32) -> (i32, i32) {
    %c0_i32 = arith.constant 0 : i32
    %c0_i32_0 = arith.constant 0 : i32
    %c0_i32_1 = arith.constant 0 : i32
    return %c0_i32, %c0_i32_0 : i32, i32
  }
  func.func @transform_4(%arg0: i32) -> (i32, i32) {
    %c0_i32 = arith.constant 0 : i32
    %c0_i32_0 = arith.constant 0 : i32
    %c0_i32_1 = arith.constant 0 : i32
    return %c0_i32, %c0_i32_0 : i32, i32
  }
  func.func @transform_5(%arg0: i32) -> (i32, i32) {
    %c0_i32 = arith.constant 0 : i32
    %c0_i32_0 = arith.constant 0 : i32
    %c0_i32_1 = arith.constant 0 : i32
    return %c0_i32, %c0_i32_0 : i32, i32
  }
  func.func @transform_6(%arg0: i32) -> (i32, i32) {
    %c0_i32 = arith.constant 0 : i32
    %c0_i32_0 = arith.constant 0 : i32
    %c0_i32_1 = arith.constant 0 : i32
    return %c0_i32, %c0_i32_0 : i32, i32
  }
  func.func @transform_7(%arg0: i32) -> (i32, i32) {
    %c0_i32 = arith.constant 0 : i32
    %c0_i32_0 = arith.constant 0 : i32
    %c0_i32_1 = arith.constant 0 : i32
    return %c0_i32, %c0_i32_0 : i32, i32
  }
  func.func @transform_8(%arg0: i32) -> (i32, i32) {
    %c0_i32 = arith.constant 0 : i32
    %c0_i32_0 = arith.constant 0 : i32
    %c0_i32_1 = arith.constant 0 : i32
    return %c0_i32, %c0_i32_0 : i32, i32
  }
  func.func @transform_9(%arg0: i32) -> (i32, i32) {
    %c0_i32 = arith.constant 0 : i32
    %c0_i32_0 = arith.constant 0 : i32
    %c0_i32_1 = arith.constant 0 : i32
    return %c0_i32, %c0_i32_0 : i32, i32
  }
  func.func @transform_10(%arg0: i32) -> (i32, i32) {
    %c0_i32 = arith.constant 0 : i32
    %c0_i32_0 = arith.constant 0 : i32
    %c0_i32_1 = arith.constant 0 : i32
    return %c0_i32, %c0_i32_0 : i32, i32
  }
  func.func @transform_11(%arg0: i32) -> (i32, i32) {
    %c0_i32 = arith.constant 0 : i32
    %c0_i32_0 = arith.constant 0 : i32
    %c0_i32_1 = arith.constant 0 : i32
    return %c0_i32, %c0_i32_0 : i32, i32
  }
  func.func @transform_12(%arg0: i32) -> (i32, i32) {
    %c0_i32 = arith.constant 0 : i32
    %c0_i32_0 = arith.constant 0 : i32
    %c0_i32_1 = arith.constant 0 : i32
    return %c0_i32, %c0_i32_0 : i32, i32
  }
  func.func @transform_13(%arg0: i32) -> (i32, i32) {
    %c0_i32 = arith.constant 0 : i32
    %c0_i32_0 = arith.constant 0 : i32
    %c0_i32_1 = arith.constant 0 : i32
    return %c0_i32, %c0_i32_0 : i32, i32
  }
}

</mosaic_0001>

<llo_original>
// kernel: fused_forward.1
$region0: #{fused_forward.1}
  #allocation0 [shape = 'u32[]', space=smem, size = 0x4, offset = 0x4, fixed_abs, tag = 'smem constant byte address 0x4 - core index']
  #allocation1 [shape = 'u32[144,128]{1,0:T(1,128)}', space=vmem, size = 0x12000, scoped, tag = 'internal scratch']
  #allocation2 [shape = 'f32[32,1664]{1,0:T(8,128)}', space=vmem, size = 0x34000, scoped, tag = 'scratch operand']
  #allocation3 [shape = 'f32[8,1664]{1,0:T(8,128)}', space=vmem, size = 0xd000, scoped, tag = 'scratch operand']
  #allocation4 [shape = 'f32[8,448]{1,0:T(8,128)}', space=vmem, size = 0x4000, scoped, tag = 'scratch operand']
  #allocation5 [shape = 'f32[200,384]{1,0:T(8,128)}', space=vmem, size = 0x4b000, scoped, tag = 'scratch operand']
  #allocation6 [shape = 'f32[16,384]{1,0:T(8,128)}', space=vmem, size = 0x6000, scoped, tag = 'scratch operand']
  #allocation7 [shape = 'f32[8,256]{1,0:T(8,128)}', space=vmem, size = 0x2000, scoped, tag = 'scratch operand']
  %s0 = inlined_call_operand.vmem [shape: f32[1,1792], index: 0, kind: input, shape index: {}]
  %s1 = inlined_call_operand.vmem [shape: f32[8,32], index: 1, kind: input, shape index: {}]
  %s2 = inlined_call_operand.vmem [shape: f32[8,1], index: 2, kind: input, shape index: {}]
  %s3 = inlined_call_operand.vmem [shape: f32[784,144], index: 3, kind: input, shape index: {}]
  %s4 = inlined_call_operand.vmem [shape: f32[16,200], index: 4, kind: input, shape index: {}]
  %s5 = inlined_call_operand.vmem [shape: f32[16,1], index: 5, kind: input, shape index: {}]
  %s6 = inlined_call_operand.vmem [shape: f32[144,16], index: 6, kind: input, shape index: {}]
  %s7 = inlined_call_operand.vmem [shape: f32[256,128], index: 7, kind: input, shape index: {}]
  %s8 = inlined_call_operand.vmem [shape: f32[1,128], index: 8, kind: input, shape index: {}]
  %s9 = inlined_call_operand.vmem [shape: f32[128,64], index: 9, kind: input, shape index: {}]
  %s10 = inlined_call_operand.vmem [shape: f32[1,64], index: 10, kind: input, shape index: {}]
  %s11 = inlined_call_operand.vmem [shape: f32[64,10], index: 11, kind: input, shape index: {}]
  %s12 = inlined_call_operand.vmem [shape: f32[1,10], index: 12, kind: input, shape index: {}]
  %s13 = inlined_call_operand.hbm [shape: f32[2,10], index: 13, kind: output, shape index: {}]
  %s14 = sld [smem:[#allocation0]]
  $region62: #{fused_forward.1} parent=0
    _
  %s16 = ssub.s32 1, %s14
  %s17 = scalar_select 0, %s16, %s14
  $region1: #{fused_forward.1} parent=0
    #allocation8 [shape = 'u8[1024]{0}', space=vmem, size = 0x400, scoped, tag = 'output window, operand 0, single buffered']
    #allocation9 [shape = 's32[1]{0}', space=sflag, size = 0x4, scoped, tag = 'scoped memory for fused_forward.1']
    %18 = vsyncpa [#allocation9], 0
    // Predicated region
    $region2: #{fused_forward.1} parent=1 // pred_check
      _
    $region3: #{fused_forward.1} parent=1 // pred_check_branch
      %20 = sbr.rel (0) target = $region5
    $region4: #{fused_forward.1} parent=1 // pred_region
      _
    $region5: #{fused_forward.1} parent=1 // pred_fallthru
      _
    // Predicated region
    $region6: #{fused_forward.1} parent=1 // pred_check
      _
    $region7: #{fused_forward.1} parent=1 // pred_check_branch
      %22 = sbr.rel (0) target = $region9
    $region8: #{fused_forward.1} parent=1 // pred_region
      _
    $region9: #{fused_forward.1} parent=1 // pred_fallthru
      _
    // Predicated region
    $region10: #{fused_forward.1} parent=1 // pred_check
      _
    $region11: #{fused_forward.1} parent=1 // pred_check_branch
      %24 = sbr.rel (0) target = $region13
    $region12: #{fused_forward.1} parent=1 // pred_region
      _
    $region13: #{fused_forward.1} parent=1 // pred_fallthru
      _
    // Predicated region
    $region14: #{fused_forward.1} parent=1 // pred_check
      _
    $region15: #{fused_forward.1} parent=1 // pred_check_branch
      %26 = sbr.rel (0) target = $region17
    $region16: #{fused_forward.1} parent=1 // pred_region
      _
    $region17: #{fused_forward.1} parent=1 // pred_fallthru
      _
    // Predicated region
    $region18: #{fused_forward.1} parent=1 // pred_check
      _
    $region19: #{fused_forward.1} parent=1 // pred_check_branch
      %28 = sbr.rel (0) target = $region21
    $region20: #{fused_forward.1} parent=1 // pred_region
      _
    $region21: #{fused_forward.1} parent=1 // pred_fallthru
      _
    // Predicated region
    $region22: #{fused_forward.1} parent=1 // pred_check
      _
    $region23: #{fused_forward.1} parent=1 // pred_check_branch
      %30 = sbr.rel (0) target = $region25
    $region24: #{fused_forward.1} parent=1 // pred_region
      _
    $region25: #{fused_forward.1} parent=1 // pred_fallthru
      _
    // Predicated region
    $region26: #{fused_forward.1} parent=1 // pred_check
      _
    $region27: #{fused_forward.1} parent=1 // pred_check_branch
      %32 = sbr.rel (0) target = $region29
    $region28: #{fused_forward.1} parent=1 // pred_region
      _
    $region29: #{fused_forward.1} parent=1 // pred_fallthru
      _
    // Predicated region
    $region30: #{fused_forward.1} parent=1 // pred_check
      _
    $region31: #{fused_forward.1} parent=1 // pred_check_branch
      %34 = sbr.rel (0) target = $region33
    $region32: #{fused_forward.1} parent=1 // pred_region
      _
    $region33: #{fused_forward.1} parent=1 // pred_fallthru
      _
    // Predicated region
    $region34: #{fused_forward.1} parent=1 // pred_check
      _
    $region35: #{fused_forward.1} parent=1 // pred_check_branch
      %36 = sbr.rel (0) target = $region37
    $region36: #{fused_forward.1} parent=1 // pred_region
      _
    $region37: #{fused_forward.1} parent=1 // pred_fallthru
      _
    // Predicated region
    $region38: #{fused_forward.1} parent=1 // pred_check
      _
    $region39: #{fused_forward.1} parent=1 // pred_check_branch
      %38 = sbr.rel (0) target = $region41
    $region40: #{fused_forward.1} parent=1 // pred_region
      _
    $region41: #{fused_forward.1} parent=1 // pred_fallthru
      _
    // Predicated region
    $region42: #{fused_forward.1} parent=1 // pred_check
      _
    $region43: #{fused_forward.1} parent=1 // pred_check_branch
      %40 = sbr.rel (0) target = $region45
    $region44: #{fused_forward.1} parent=1 // pred_region
      _
    $region45: #{fused_forward.1} parent=1 // pred_fallthru
      _
    // Predicated region
    $region46: #{fused_forward.1} parent=1 // pred_check
      _
    $region47: #{fused_forward.1} parent=1 // pred_check_branch
      %42 = sbr.rel (0) target = $region49
    $region48: #{fused_forward.1} parent=1 // pred_region
      _
    $region49: #{fused_forward.1} parent=1 // pred_fallthru
      _
    // Predicated region
    $region50: #{fused_forward.1} parent=1 // pred_check
      _
    $region51: #{fused_forward.1} parent=1 // pred_check_branch
      %44 = sbr.rel (0) target = $region53
    $region52: #{fused_forward.1} parent=1 // pred_region
      _
    $region53: #{fused_forward.1} parent=1 // pred_fallthru
      _
    %v45 = vld [vmem:[%s0] sm:$0xff]
    %v46 = vld [vmem:[%s0 + $0x8] sm:$0x1f]
    %47 = vst [vmem:[#allocation2] ss:$8 sm:$0xf] %v45
    %48 = vst [vmem:[#allocation2] ss:$8 sm:$0xf0] %v45
    %v49 = vlaneseq
    %vm50 = vcmp.ge.s32.totalorder %v49, 0
    %vm51 = vcmp.lt.s32.totalorder %v49, 640
    %vm52 = vmand %vm50, %vm51
    %s53 = scalar_lea.vmem [#allocation2], 64
    %54 = vst.msk [vmem:[%s53] ss:$8 sm:$0xf] %vm52, %v46
    %55 = vst.msk [vmem:[%s53] ss:$8 sm:$0x10] %vm52, %v46
    %v56 = vld [vmem:[%s0] sm:$0xff]
    %v57 = vld [vmem:[%s0 + $0x8] sm:$0x3f]
    %60 = vrot.lane.b32.xlu0 %v56, 127
    %v61 = vpop.permute.xlu0 %60
    %62 = vrot.lane.b32.xlu0 %v57, 127
    %v63 = vpop.permute.xlu0 %62
    %v64 = vrot.slane %v61, 1
    %v65 = vrot.slane %v63, 1
    %vm66 = vcmask 1046528
    %v67 = vsel %vm66, %v64, %v65
    %vm68 = vcmask 1039360
    %v69 = vsel %vm68, %v61, %v67
    %v70 = vsel %vm68, %v63, %v65
    %s73 = scalar_lea.vmem [#allocation2], 1
    %74 = vst [vmem:[%s73] ss:$8 sm:$0xf] %v69
    %75 = vst [vmem:[%s73] ss:$8 sm:$0xf0] %v69
    %s76 = scalar_lea.vmem [#allocation2], 65
    %77 = vst.msk [vmem:[%s76] ss:$8 sm:$0xf] %vm52, %v70
    %78 = vst.msk [vmem:[%s76] ss:$8 sm:$0x10] %vm52, %v70
    %v79 = vld [vmem:[%s0] sm:$0xff]
    %v80 = vld [vmem:[%s0 + $0x8] sm:$0x3f]
    %83 = vrot.lane.b32.xlu0 %v79, 126
    %v84 = vpop.permute.xlu0 %83
    %85 = vrot.lane.b32.xlu0 %v80, 126
    %v86 = vpop.permute.xlu0 %85
    %v87 = vrot.slane %v84, 1
    %v88 = vrot.slane %v86, 1
    %v89 = vsel %vm66, %v87, %v88
    %vm90 = vcmask 1031168
    %v91 = vsel %vm90, %v84, %v89
    %v92 = vsel %vm90, %v86, %v88
    %s95 = scalar_lea.vmem [#allocation2], 2
    %96 = vst [vmem:[%s95] ss:$8 sm:$0xf] %v91
    %97 = vst [vmem:[%s95] ss:$8 sm:$0xf0] %v91
    %s98 = scalar_lea.vmem [#allocation2], 66
    %99 = vst.msk [vmem:[%s98] ss:$8 sm:$0xf] %vm52, %v92
    %100 = vst.msk [vmem:[%s98] ss:$8 sm:$0x10] %vm52, %v92
    %v101 = vld [vmem:[%s0] sm:$0xff]
    %v102 = vld [vmem:[%s0 + $0x8] sm:$0x3f]
    %105 = vrot.lane.b32.xlu0 %v101, 125
    %v106 = vpop.permute.xlu0 %105
    %107 = vrot.lane.b32.xlu0 %v102, 125
    %v108 = vpop.permute.xlu0 %107
    %v109 = vrot.slane %v106, 1
    %v110 = vrot.slane %v108, 1
    %v111 = vsel %vm66, %v109, %v110
    %vm112 = vcmask 1022976
    %v113 = vsel %vm112, %v106, %v111
    %v114 = vsel %vm112, %v108, %v110
    %s117 = scalar_lea.vmem [#allocation2], 3
    %118 = vst [vmem:[%s117] ss:$8 sm:$0xf] %v113
    %119 = vst [vmem:[%s117] ss:$8 sm:$0xf0] %v113
    %s120 = scalar_lea.vmem [#allocation2], 67
    %121 = vst.msk [vmem:[%s120] ss:$8 sm:$0xf] %vm52, %v114
    %122 = vst.msk [vmem:[%s120] ss:$8 sm:$0x10] %vm52, %v114
    %v123 = vld [vmem:[%s0] sm:$0xff]
    %v124 = vld [vmem:[%s0 + $0x8] sm:$0x3f]
    %127 = vrot.lane.b32.xlu0 %v123, 124
    %v128 = vpop.permute.xlu0 %127
    %129 = vrot.lane.b32.xlu0 %v124, 124
    %v130 = vpop.permute.xlu0 %129
    %v131 = vrot.slane %v128, 1
    %v132 = vrot.slane %v130, 1
    %v133 = vsel %vm66, %v131, %v132
    %vm134 = vcmask 1014784
    %v135 = vsel %vm134, %v128, %v133
    %v136 = vsel %vm134, %v130, %v132
    %s139 = scalar_lea.vmem [#allocation2], 4
    %140 = vst [vmem:[%s139] ss:$8 sm:$0xf] %v135
    %141 = vst [vmem:[%s139] ss:$8 sm:$0xf0] %v135
    %s142 = scalar_lea.vmem [#allocation2], 68
    %143 = vst.msk [vmem:[%s142] ss:$8 sm:$0xf] %vm52, %v136
    %144 = vst.msk [vmem:[%s142] ss:$8 sm:$0x10] %vm52, %v136
    %v145 = vld [vmem:[%s0] sm:$0xff]
    %v146 = vld [vmem:[%s0 + $0x8] sm:$0x3f]
    %149 = vrot.lane.b32.xlu0 %v145, 100
    %v150 = vpop.permute.xlu0 %149
    %151 = vrot.lane.b32.xlu0 %v146, 100
    %v152 = vpop.permute.xlu0 %151
    %v153 = vrot.slane %v150, 1
    %v154 = vrot.slane %v152, 1
    %v155 = vsel %vm66, %v153, %v154
    %vm156 = vcmask 818176
    %v157 = vsel %vm156, %v150, %v155
    %v158 = vsel %vm156, %v152, %v154
    %s161 = scalar_lea.vmem [#allocation2], 5
    %162 = vst [vmem:[%s161] ss:$8 sm:$0xf] %v157
    %163 = vst [vmem:[%s161] ss:$8 sm:$0xf0] %v157
    %s164 = scalar_lea.vmem [#allocation2], 69
    %165 = vst.msk [vmem:[%s164] ss:$8 sm:$0xf] %vm52, %v158
    %166 = vst.msk [vmem:[%s164] ss:$8 sm:$0x10] %vm52, %v158
    %v167 = vld [vmem:[%s0] sm:$0xff]
    %v168 = vld [vmem:[%s0 + $0x8] sm:$0x3f]
    %171 = vrot.lane.b32.xlu0 %v167, 99
    %v172 = vpop.permute.xlu0 %171
    %173 = vrot.lane.b32.xlu0 %v168, 99
    %v174 = vpop.permute.xlu0 %173
    %v175 = vrot.slane %v172, 1
    %v176 = vrot.slane %v174, 1
    %v177 = vsel %vm66, %v175, %v176
    %vm178 = vcmask 809984
    %v179 = vsel %vm178, %v172, %v177
    %v180 = vsel %vm178, %v174, %v176
    %s183 = scalar_lea.vmem [#allocation2], 6
    %184 = vst [vmem:[%s183] ss:$8 sm:$0xf] %v179
    %185 = vst [vmem:[%s183] ss:$8 sm:$0xf0] %v179
    %s186 = scalar_lea.vmem [#allocation2], 70
    %187 = vst.msk [vmem:[%s186] ss:$8 sm:$0xf] %vm52, %v180
    %188 = vst.msk [vmem:[%s186] ss:$8 sm:$0x10] %vm52, %v180
    %v189 = vld [vmem:[%s0] sm:$0xff]
    %v190 = vld [vmem:[%s0 + $0x8] sm:$0x3f]
    %193 = vrot.lane.b32.xlu0 %v189, 98
    %v194 = vpop.permute.xlu0 %193
    %195 = vrot.lane.b32.xlu0 %v190, 98
    %v196 = vpop.permute.xlu0 %195
    %v197 = vrot.slane %v194, 1
    %v198 = vrot.slane %v196, 1
    %v199 = vsel %vm66, %v197, %v198
    %vm200 = vcmask 801792
    %v201 = vsel %vm200, %v194, %v199
    %v202 = vsel %vm200, %v196, %v198
    %s205 = scalar_lea.vmem [#allocation2], 7
    %206 = vst [vmem:[%s205] ss:$8 sm:$0xf] %v201
    %207 = vst [vmem:[%s205] ss:$8 sm:$0xf0] %v201
    %s208 = scalar_lea.vmem [#allocation2], 71
    %209 = vst.msk [vmem:[%s208] ss:$8 sm:$0xf] %vm52, %v202
    %210 = vst.msk [vmem:[%s208] ss:$8 sm:$0x10] %vm52, %v202
    %v211 = vld [vmem:[%s0] sm:$0xff]
    %v212 = vld [vmem:[%s0 + $0x8] sm:$0x3f]
    %215 = vrot.lane.b32.xlu0 %v211, 97
    %v216 = vpop.permute.xlu0 %215
    %217 = vrot.lane.b32.xlu0 %v212, 97
    %v218 = vpop.permute.xlu0 %217
    %v219 = vrot.slane %v216, 1
    %v220 = vrot.slane %v218, 1
    %v221 = vsel %vm66, %v219, %v220
    %vm222 = vcmask 793600
    %v223 = vsel %vm222, %v216, %v221
    %v224 = vsel %vm222, %v218, %v220
    %s227 = scalar_lea.vmem [#allocation2], 104
    %228 = vst [vmem:[%s227] ss:$8 sm:$0xf] %v223
    %229 = vst [vmem:[%s227] ss:$8 sm:$0xf0] %v223
    %s230 = scalar_lea.vmem [#allocation2], 168
    %231 = vst.msk [vmem:[%s230] ss:$8 sm:$0xf] %vm52, %v224
    %232 = vst.msk [vmem:[%s230] ss:$8 sm:$0x10] %vm52, %v224
    %v233 = vld [vmem:[%s0] sm:$0xff]
    %v234 = vld [vmem:[%s0 + $0x8] sm:$0x3f]
    %237 = vrot.lane.b32.xlu0 %v233, 96
    %v238 = vpop.permute.xlu0 %237
    %239 = vrot.lane.b32.xlu0 %v234, 96
    %v240 = vpop.permute.xlu0 %239
    %v241 = vrot.slane %v238, 1
    %v242 = vrot.slane %v240, 1
    %v243 = vsel %vm66, %v241, %v242
    %vm244 = vcmask 785408
    %v245 = vsel %vm244, %v238, %v243
    %v246 = vsel %vm244, %v240, %v242
    %s249 = scalar_lea.vmem [#allocation2], 105
    %250 = vst [vmem:[%s249] ss:$8 sm:$0xf] %v245
    %251 = vst [vmem:[%s249] ss:$8 sm:$0xf0] %v245
    %s252 = scalar_lea.vmem [#allocation2], 169
    %253 = vst.msk [vmem:[%s252] ss:$8 sm:$0xf] %vm52, %v246
    %254 = vst.msk [vmem:[%s252] ss:$8 sm:$0x10] %vm52, %v246
    %v255 = vld [vmem:[%s0] sm:$0xff]
    %v256 = vld [vmem:[%s0 + $0x8] sm:$0x3f]
    %259 = vrot.lane.b32.xlu0 %v255, 72
    %v260 = vpop.permute.xlu0 %259
    %261 = vrot.lane.b32.xlu0 %v256, 72
    %v262 = vpop.permute.xlu0 %261
    %v263 = vrot.slane %v260, 1
    %v264 = vrot.slane %v262, 1
    %v265 = vsel %vm66, %v263, %v264
    %vm266 = vcmask 588800
    %v267 = vsel %vm266, %v260, %v265
    %v268 = vsel %vm266, %v262, %v264
    %s271 = scalar_lea.vmem [#allocation2], 106
    %272 = vst [vmem:[%s271] ss:$8 sm:$0xf] %v267
    %273 = vst [vmem:[%s271] ss:$8 sm:$0xf0] %v267
    %s274 = scalar_lea.vmem [#allocation2], 170
    %275 = vst.msk [vmem:[%s274] ss:$8 sm:$0xf] %vm52, %v268
    %276 = vst.msk [vmem:[%s274] ss:$8 sm:$0x10] %vm52, %v268
    %v277 = vld [vmem:[%s0] sm:$0xff]
    %v278 = vld [vmem:[%s0 + $0x8] sm:$0x3f]
    %281 = vrot.lane.b32.xlu0 %v277, 71
    %v282 = vpop.permute.xlu0 %281
    %283 = vrot.lane.b32.xlu0 %v278, 71
    %v284 = vpop.permute.xlu0 %283
    %v285 = vrot.slane %v282, 1
    %v286 = vrot.slane %v284, 1
    %v287 = vsel %vm66, %v285, %v286
    %vm288 = vcmask 580608
    %v289 = vsel %vm288, %v282, %v287
    %v290 = vsel %vm288, %v284, %v286
    %s293 = scalar_lea.vmem [#allocation2], 107
    %294 = vst [vmem:[%s293] ss:$8 sm:$0xf] %v289
    %295 = vst [vmem:[%s293] ss:$8 sm:$0xf0] %v289
    %s296 = scalar_lea.vmem [#allocation2], 171
    %297 = vst.msk [vmem:[%s296] ss:$8 sm:$0xf] %vm52, %v290
    %298 = vst.msk [vmem:[%s296] ss:$8 sm:$0x10] %vm52, %v290
    %v299 = vld [vmem:[%s0] sm:$0xff]
    %v300 = vld [vmem:[%s0 + $0x8] sm:$0x3f]
    %303 = vrot.lane.b32.xlu0 %v299, 70
    %v304 = vpop.permute.xlu0 %303
    %305 = vrot.lane.b32.xlu0 %v300, 70
    %v306 = vpop.permute.xlu0 %305
    %v307 = vrot.slane %v304, 1
    %v308 = vrot.slane %v306, 1
    %v309 = vsel %vm66, %v307, %v308
    %vm310 = vcmask 572416
    %v311 = vsel %vm310, %v304, %v309
    %v312 = vsel %vm310, %v306, %v308
    %s315 = scalar_lea.vmem [#allocation2], 108
    %316 = vst [vmem:[%s315] ss:$8 sm:$0xf] %v311
    %317 = vst [vmem:[%s315] ss:$8 sm:$0xf0] %v311
    %s318 = scalar_lea.vmem [#allocation2], 172
    %319 = vst.msk [vmem:[%s318] ss:$8 sm:$0xf] %vm52, %v312
    %320 = vst.msk [vmem:[%s318] ss:$8 sm:$0x10] %vm52, %v312
    %v321 = vld [vmem:[%s0] sm:$0xff]
    %v322 = vld [vmem:[%s0 + $0x8] sm:$0x3f]
    %325 = vrot.lane.b32.xlu0 %v321, 69
    %v326 = vpop.permute.xlu0 %325
    %327 = vrot.lane.b32.xlu0 %v322, 69
    %v328 = vpop.permute.xlu0 %327
    %v329 = vrot.slane %v326, 1
    %v330 = vrot.slane %v328, 1
    %v331 = vsel %vm66, %v329, %v330
    %vm332 = vcmask 564224
    %v333 = vsel %vm332, %v326, %v331
    %v334 = vsel %vm332, %v328, %v330
    %s337 = scalar_lea.vmem [#allocation2], 109
    %338 = vst [vmem:[%s337] ss:$8 sm:$0xf] %v333
    %339 = vst [vmem:[%s337] ss:$8 sm:$0xf0] %v333
    %s340 = scalar_lea.vmem [#allocation2], 173
    %341 = vst.msk [vmem:[%s340] ss:$8 sm:$0xf] %vm52, %v334
    %342 = vst.msk [vmem:[%s340] ss:$8 sm:$0x10] %vm52, %v334
    %v343 = vld [vmem:[%s0] sm:$0xff]
    %v344 = vld [vmem:[%s0 + $0x8] sm:$0x3f]
    %347 = vrot.lane.b32.xlu0 %v343, 68
    %v348 = vpop.permute.xlu0 %347
    %349 = vrot.lane.b32.xlu0 %v344, 68
    %v350 = vpop.permute.xlu0 %349
    %v351 = vrot.slane %v348, 1
    %v352 = vrot.slane %v350, 1
    %v353 = vsel %vm66, %v351, %v352
    %vm354 = vcmask 556032
    %v355 = vsel %vm354, %v348, %v353
    %v356 = vsel %vm354, %v350, %v352
    %s359 = scalar_lea.vmem [#allocation2], 110
    %360 = vst [vmem:[%s359] ss:$8 sm:$0xf] %v355
    %361 = vst [vmem:[%s359] ss:$8 sm:$0xf0] %v355
    %s362 = scalar_lea.vmem [#allocation2], 174
    %363 = vst.msk [vmem:[%s362] ss:$8 sm:$0xf] %vm52, %v356
    %364 = vst.msk [vmem:[%s362] ss:$8 sm:$0x10] %vm52, %v356
    %v365 = vld [vmem:[%s0] sm:$0xff]
    %v366 = vld [vmem:[%s0 + $0x8] sm:$0x3f]
    %369 = vrot.lane.b32.xlu0 %v365, 44
    %v370 = vpop.permute.xlu0 %369
    %371 = vrot.lane.b32.xlu0 %v366, 44
    %v372 = vpop.permute.xlu0 %371
    %v373 = vrot.slane %v370, 1
    %v374 = vrot.slane %v372, 1
    %v375 = vsel %vm66, %v373, %v374
    %vm376 = vcmask 359424
    %v377 = vsel %vm376, %v370, %v375
    %v378 = vsel %vm376, %v372, %v374
    %s381 = scalar_lea.vmem [#allocation2], 111
    %382 = vst [vmem:[%s381] ss:$8 sm:$0xf] %v377
    %383 = vst [vmem:[%s381] ss:$8 sm:$0xf0] %v377
    %s384 = scalar_lea.vmem [#allocation2], 175
    %385 = vst.msk [vmem:[%s384] ss:$8 sm:$0xf] %vm52, %v378
    %386 = vst.msk [vmem:[%s384] ss:$8 sm:$0x10] %vm52, %v378
    %v387 = vld [vmem:[%s0] sm:$0xff]
    %v388 = vld [vmem:[%s0 + $0x8] sm:$0x3f]
    %391 = vrot.lane.b32.xlu0 %v387, 43
    %v392 = vpop.permute.xlu0 %391
    %393 = vrot.lane.b32.xlu0 %v388, 43
    %v394 = vpop.permute.xlu0 %393
    %v395 = vrot.slane %v392, 1
    %v396 = vrot.slane %v394, 1
    %v397 = vsel %vm66, %v395, %v396
    %vm398 = vcmask 351232
    %v399 = vsel %vm398, %v392, %v397
    %v400 = vsel %vm398, %v394, %v396
    %s403 = scalar_lea.vmem [#allocation2], 208
    %404 = vst [vmem:[%s403] ss:$8 sm:$0xf] %v399
    %405 = vst [vmem:[%s403] ss:$8 sm:$0xf0] %v399
    %s406 = scalar_lea.vmem [#allocation2], 272
    %407 = vst.msk [vmem:[%s406] ss:$8 sm:$0xf] %vm52, %v400
    %408 = vst.msk [vmem:[%s406] ss:$8 sm:$0x10] %vm52, %v400
    %v409 = vld [vmem:[%s0] sm:$0xff]
    %v410 = vld [vmem:[%s0 + $0x8] sm:$0x3f]
    %413 = vrot.lane.b32.xlu0 %v409, 42
    %v414 = vpop.permute.xlu0 %413
    %415 = vrot.lane.b32.xlu0 %v410, 42
    %v416 = vpop.permute.xlu0 %415
    %v417 = vrot.slane %v414, 1
    %v418 = vrot.slane %v416, 1
    %v419 = vsel %vm66, %v417, %v418
    %vm420 = vcmask 343040
    %v421 = vsel %vm420, %v414, %v419
    %v422 = vsel %vm420, %v416, %v418
    %s425 = scalar_lea.vmem [#allocation2], 209
    %426 = vst [vmem:[%s425] ss:$8 sm:$0xf] %v421
    %427 = vst [vmem:[%s425] ss:$8 sm:$0xf0] %v421
    %s428 = scalar_lea.vmem [#allocation2], 273
    %429 = vst.msk [vmem:[%s428] ss:$8 sm:$0xf] %vm52, %v422
    %430 = vst.msk [vmem:[%s428] ss:$8 sm:$0x10] %vm52, %v422
    %v431 = vld [vmem:[%s0] sm:$0xff]
    %v432 = vld [vmem:[%s0 + $0x8] sm:$0x3f]
    %435 = vrot.lane.b32.xlu0 %v431, 41
    %v436 = vpop.permute.xlu0 %435
    %437 = vrot.lane.b32.xlu0 %v432, 41
    %v438 = vpop.permute.xlu0 %437
    %v439 = vrot.slane %v436, 1
    %v440 = vrot.slane %v438, 1
    %v441 = vsel %vm66, %v439, %v440
    %vm442 = vcmask 334848
    %v443 = vsel %vm442, %v436, %v441
    %v444 = vsel %vm442, %v438, %v440
    %s447 = scalar_lea.vmem [#allocation2], 210
    %448 = vst [vmem:[%s447] ss:$8 sm:$0xf] %v443
    %449 = vst [vmem:[%s447] ss:$8 sm:$0xf0] %v443
    %s450 = scalar_lea.vmem [#allocation2], 274
    %451 = vst.msk [vmem:[%s450] ss:$8 sm:$0xf] %vm52, %v444
    %452 = vst.msk [vmem:[%s450] ss:$8 sm:$0x10] %vm52, %v444
    %v453 = vld [vmem:[%s0] sm:$0xff]
    %v454 = vld [vmem:[%s0 + $0x8] sm:$0x3f]
    %457 = vrot.lane.b32.xlu0 %v453, 40
    %v458 = vpop.permute.xlu0 %457
    %459 = vrot.lane.b32.xlu0 %v454, 40
    %v460 = vpop.permute.xlu0 %459
    %v461 = vrot.slane %v458, 1
    %v462 = vrot.slane %v460, 1
    %v463 = vsel %vm66, %v461, %v462
    %vm464 = vcmask 326656
    %v465 = vsel %vm464, %v458, %v463
    %v466 = vsel %vm464, %v460, %v462
    %s469 = scalar_lea.vmem [#allocation2], 211
    %470 = vst [vmem:[%s469] ss:$8 sm:$0xf] %v465
    %471 = vst [vmem:[%s469] ss:$8 sm:$0xf0] %v465
    %s472 = scalar_lea.vmem [#allocation2], 275
    %473 = vst.msk [vmem:[%s472] ss:$8 sm:$0xf] %vm52, %v466
    %474 = vst.msk [vmem:[%s472] ss:$8 sm:$0x10] %vm52, %v466
    %v475 = vld [vmem:[%s0] sm:$0xff]
    %v476 = vld [vmem:[%s0 + $0x8] sm:$0x3f]
    %479 = vrot.lane.b32.xlu0 %v475, 16
    %v480 = vpop.permute.xlu0 %479
    %481 = vrot.lane.b32.xlu0 %v476, 16
    %v482 = vpop.permute.xlu0 %481
    %v483 = vrot.slane %v480, 1
    %v484 = vrot.slane %v482, 1
    %v485 = vsel %vm66, %v483, %v484
    %vm486 = vcmask 130048
    %v487 = vsel %vm486, %v480, %v485
    %v488 = vsel %vm486, %v482, %v484
    %s491 = scalar_lea.vmem [#allocation2], 212
    %492 = vst [vmem:[%s491] ss:$8 sm:$0xf] %v487
    %493 = vst [vmem:[%s491] ss:$8 sm:$0xf0] %v487
    %s494 = scalar_lea.vmem [#allocation2], 276
    %495 = vst.msk [vmem:[%s494] ss:$8 sm:$0xf] %vm52, %v488
    %496 = vst.msk [vmem:[%s494] ss:$8 sm:$0x10] %vm52, %v488
    %v497 = vld [vmem:[%s0] sm:$0xff]
    %v498 = vld [vmem:[%s0 + $0x8] sm:$0x3f]
    %501 = vrot.lane.b32.xlu0 %v497, 15
    %v502 = vpop.permute.xlu0 %501
    %503 = vrot.lane.b32.xlu0 %v498, 15
    %v504 = vpop.permute.xlu0 %503
    %v505 = vrot.slane %v502, 1
    %v506 = vrot.slane %v504, 1
    %v507 = vsel %vm66, %v505, %v506
    %vm508 = vcmask 121856
    %v509 = vsel %vm508, %v502, %v507
    %v510 = vsel %vm508, %v504, %v506
    %s513 = scalar_lea.vmem [#allocation2], 213
    %514 = vst [vmem:[%s513] ss:$8 sm:$0xf] %v509
    %515 = vst [vmem:[%s513] ss:$8 sm:$0xf0] %v509
    %s516 = scalar_lea.vmem [#allocation2], 277
    %517 = vst.msk [vmem:[%s516] ss:$8 sm:$0xf] %vm52, %v510
    %518 = vst.msk [vmem:[%s516] ss:$8 sm:$0x10] %vm52, %v510
    %v519 = vld [vmem:[%s0] sm:$0xff]
    %v520 = vld [vmem:[%s0 + $0x8] sm:$0x3f]
    %523 = vrot.lane.b32.xlu0 %v519, 14
    %v524 = vpop.permute.xlu0 %523
    %525 = vrot.lane.b32.xlu0 %v520, 14
    %v526 = vpop.permute.xlu0 %525
    %v527 = vrot.slane %v524, 1
    %v528 = vrot.slane %v526, 1
    %v529 = vsel %vm66, %v527, %v528
    %vm530 = vcmask 113664
    %v531 = vsel %vm530, %v524, %v529
    %v532 = vsel %vm530, %v526, %v528
    %s535 = scalar_lea.vmem [#allocation2], 214
    %536 = vst [vmem:[%s535] ss:$8 sm:$0xf] %v531
    %537 = vst [vmem:[%s535] ss:$8 sm:$0xf0] %v531
    %s538 = scalar_lea.vmem [#allocation2], 278
    %539 = vst.msk [vmem:[%s538] ss:$8 sm:$0xf] %vm52, %v532
    %540 = vst.msk [vmem:[%s538] ss:$8 sm:$0x10] %vm52, %v532
    %v541 = vld [vmem:[%s0] sm:$0xff]
    %v542 = vld [vmem:[%s0 + $0x8] sm:$0x3f]
    %545 = vrot.lane.b32.xlu0 %v541, 13
    %v546 = vpop.permute.xlu0 %545
    %547 = vrot.lane.b32.xlu0 %v542, 13
    %v548 = vpop.permute.xlu0 %547
    %v549 = vrot.slane %v546, 1
    %v550 = vrot.slane %v548, 1
    %v551 = vsel %vm66, %v549, %v550
    %vm552 = vcmask 105472
    %v553 = vsel %vm552, %v546, %v551
    %v554 = vsel %vm552, %v548, %v550
    %s557 = scalar_lea.vmem [#allocation2], 215
    %558 = vst [vmem:[%s557] ss:$8 sm:$0xf] %v553
    %559 = vst [vmem:[%s557] ss:$8 sm:$0xf0] %v553
    %s560 = scalar_lea.vmem [#allocation2], 279
    %561 = vst.msk [vmem:[%s560] ss:$8 sm:$0xf] %vm52, %v554
    %562 = vst.msk [vmem:[%s560] ss:$8 sm:$0x10] %vm52, %v554
    %v563 = vld [vmem:[%s0] sm:$0xff]
    %v564 = vld [vmem:[%s0 + $0x8] sm:$0x3f]
    %567 = vrot.lane.b32.xlu0 %v563, 12
    %v568 = vpop.permute.xlu0 %567
    %569 = vrot.lane.b32.xlu0 %v564, 12
    %v570 = vpop.permute.xlu0 %569
    %v571 = vrot.slane %v568, 1
    %v572 = vrot.slane %v570, 1
    %v573 = vsel %vm66, %v571, %v572
    %vm574 = vcmask 97280
    %v575 = vsel %vm574, %v568, %v573
    %v576 = vsel %vm574, %v570, %v572
    %s579 = scalar_lea.vmem [#allocation2], 312
    %580 = vst [vmem:[%s579] ss:$8 sm:$0xf] %v575
    %581 = vst [vmem:[%s579] ss:$8 sm:$0xf0] %v575
    %s582 = scalar_lea.vmem [#allocation2], 376
    %583 = vst.msk [vmem:[%s582] ss:$8 sm:$0xf] %vm52, %v576
    %584 = vst.msk [vmem:[%s582] ss:$8 sm:$0x10] %vm52, %v576
    %585 = vst [vmem:[#allocation2 + $0x138] sm:$0xfe] 0.0
    %586 = vst [vmem:[#allocation2 + $0x140] sm:$0xfe] 0.0
    %587 = vst [vmem:[#allocation2 + $0x148] sm:$0xfe] 0.0
    %588 = vst [vmem:[#allocation2 + $0x150] sm:$0xfe] 0.0
    %589 = vst [vmem:[#allocation2 + $0x158] sm:$0xfe] 0.0
    %590 = vst [vmem:[#allocation2 + $0x160] sm:$0xfe] 0.0
    %591 = vst [vmem:[#allocation2 + $0x168] sm:$0xfe] 0.0
    %592 = vst [vmem:[#allocation2 + $0x170] sm:$0xfe] 0.0
    %593 = vst [vmem:[#allocation2 + $0x178] sm:$0xfe] 0.0
    %594 = vst [vmem:[#allocation2 + $0x180] sm:$0xfe] 0.0
    %595 = vst [vmem:[#allocation2 + $0x188] sm:$0xfe] 0.0
    %596 = vst [vmem:[#allocation2 + $0x190] sm:$0xfe] 0.0
    %597 = vst [vmem:[#allocation2 + $0x198] sm:$0xfe] 0.0
    %v598 = vld [vmem:[%s1] sm:$0xff]
    %v599 = vld [vmem:[#allocation2] sm:$0xff]
    %v600 = vld [vmem:[#allocation2 + $0x8] sm:$0xff]
    %v601 = vld [vmem:[#allocation2 + $0x10] sm:$0xff]
    %v602 = vld [vmem:[#allocation2 + $0x18] sm:$0xff]
    %v603 = vld [vmem:[#allocation2 + $0x20] sm:$0xff]
    %v604 = vld [vmem:[#allocation2 + $0x28] sm:$0xff]
    %v605 = vld [vmem:[#allocation2 + $0x30] sm:$0xff]
    %v606 = vld [vmem:[#allocation2 + $0x38] sm:$0xff]
    %v607 = vld [vmem:[#allocation2 + $0x40] sm:$0xff]
    %v608 = vld [vmem:[#allocation2 + $0x48] sm:$0xff]
    %v609 = vld [vmem:[#allocation2 + $0x50] sm:$0xff]
    %v610 = vld [vmem:[#allocation2 + $0x58] sm:$0xff]
    %v611 = vld [vmem:[#allocation2 + $0x60] sm:$0xff]
    %v612 = vld [vmem:[#allocation2 + $0x68] sm:$0xff]
    %v613 = vld [vmem:[#allocation2 + $0x70] sm:$0xff]
    %v614 = vld [vmem:[#allocation2 + $0x78] sm:$0xff]
    %v615 = vld [vmem:[#allocation2 + $0x80] sm:$0xff]
    %v616 = vld [vmem:[#allocation2 + $0x88] sm:$0xff]
    %v617 = vld [vmem:[#allocation2 + $0x90] sm:$0xff]
    %v618 = vld [vmem:[#allocation2 + $0x98] sm:$0xff]
    %v619 = vld [vmem:[#allocation2 + $0xa0] sm:$0xff]
    %v620 = vld [vmem:[#allocation2 + $0xa8] sm:$0xff]
    %v621 = vld [vmem:[#allocation2 + $0xb0] sm:$0xff]
    %v622 = vld [vmem:[#allocation2 + $0xb8] sm:$0xff]
    %v623 = vld [vmem:[#allocation2 + $0xc0] sm:$0xff]
    %v624 = vld [vmem:[#allocation2 + $0xc8] sm:$0xff]
    %v625 = vld [vmem:[#allocation2 + $0xd0] sm:$0xff]
    %v626 = vld [vmem:[#allocation2 + $0xd8] sm:$0xff]
    %v627 = vld [vmem:[#allocation2 + $0xe0] sm:$0xff]
    %v628 = vld [vmem:[#allocation2 + $0xe8] sm:$0xff]
    %v629 = vld [vmem:[#allocation2 + $0xf0] sm:$0xff]
    %v630 = vld [vmem:[#allocation2 + $0xf8] sm:$0xff]
    %v631 = vld [vmem:[#allocation2 + $0x100] sm:$0xff]
    %v632 = vld [vmem:[#allocation2 + $0x108] sm:$0xff]
    %v633 = vld [vmem:[#allocation2 + $0x110] sm:$0xff]
    %v634 = vld [vmem:[#allocation2 + $0x118] sm:$0xff]
    %v635 = vld [vmem:[#allocation2 + $0x120] sm:$0xff]
    %v636 = vld [vmem:[#allocation2 + $0x128] sm:$0xff]
    %v637 = vld [vmem:[#allocation2 + $0x130] sm:$0xff]
    %v638 = vld [vmem:[#allocation2 + $0x138] sm:$0xff]
    %v639 = vld [vmem:[#allocation2 + $0x140] sm:$0xff]
    %v640 = vld [vmem:[#allocation2 + $0x148] sm:$0xff]
    %v641 = vld [vmem:[#allocation2 + $0x150] sm:$0xff]
    %v642 = vld [vmem:[#allocation2 + $0x158] sm:$0xff]
    %v643 = vld [vmem:[#allocation2 + $0x160] sm:$0xff]
    %v644 = vld [vmem:[#allocation2 + $0x168] sm:$0xff]
    %v645 = vld [vmem:[#allocation2 + $0x170] sm:$0xff]
    %v646 = vld [vmem:[#allocation2 + $0x178] sm:$0xff]
    %v647 = vld [vmem:[#allocation2 + $0x180] sm:$0xff]
    %v648 = vld [vmem:[#allocation2 + $0x188] sm:$0xff]
    %v649 = vld [vmem:[#allocation2 + $0x190] sm:$0xff]
    %v650 = vld [vmem:[#allocation2 + $0x198] sm:$0xff]
    %v651 = vld [vmem:[%s2] sm:$0xff]
    %653 = vset.pattern.permute.xlu0 0
    %654 = vperm.xlu0 %653, %v651
    %v655 = vpop.permute.xlu0 %654
    %vm657 = vcmask 261120
    %v659 = vsel %vm657, %v598, 0
    %661 = vmatprep.subr.mxu0 %v600
    %662 = vmatpush1.msra.mxu0 %v599
    %663 = vmatprep.subr.mxu0 %v613
    %664 = vmatpush1.msra.mxu0 %v612
    %665 = vmatprep.subr.mxu0 %v626
    %666 = vmatpush1.msra.mxu0 %v625
    %667 = vmatprep.subr.mxu0 %v639
    %668 = vmatpush1.msra.mxu0 %v638
    %669 = vmatprep.subr.mxu0 0.0
    %670 = vmatpush1.msra.mxu0 0.0
    %671 = vmatprep.subr.mxu0 0.0
    %672 = vmatpush1.msra.mxu0 0.0
    %673 = vmatprep.subr.mxu0 0.0
    %674 = vmatpush1.msra.mxu0 0.0
    %675 = vmatprep.subr.mxu0 0.0
    %676 = vmatpush1.msra.mxu0 0.0
    %677 = vmatprep.subr.mxu0 0.0
    %678 = vmatpush1.msra.mxu0 0.0
    %679 = vmatprep.subr.mxu0 0.0
    %680 = vmatpush1.msra.mxu0 0.0
    %681 = vmatprep.subr.mxu0 0.0
    %682 = vmatpush1.msra.mxu0 0.0
    %683 = vmatprep.subr.mxu0 0.0
    %684 = vmatpush1.msra.mxu0 0.0
    %685 = vmatprep.subr.mxu0 0.0
    %686 = vmatpush1.msra.mxu0 0.0
    %687 = vmatprep.subr.mxu0 0.0
    %688 = vmatpush1.msra.mxu0 0.0
    %689 = vmatprep.subr.mxu0 0.0
    %690 = vmatpush1.msra.mxu0 0.0
    %691 = vmatprep.subr.mxu0 0.0
    %692 = vmatpush1.msra.mxu0 0.0
    %693 = vmatprep.subr.mxu0 0.0
    %694 = vmatpush1.msra.mxu0 0.0
    %695 = vmatprep.subr.mxu0 0.0
    %696 = vmatpush1.msra.mxu0 0.0
    %697 = vmatprep.subr.mxu0 0.0
    %698 = vmatpush1.msra.mxu0 0.0
    %699 = vmatprep.subr.mxu0 0.0
    %700 = vmatpush1.msra.mxu0 0.0
    %701 = vmatprep.subr.mxu0 0.0
    %702 = vmatpush1.msra.mxu0 0.0
    %703 = vmatprep.subr.mxu0 0.0
    %704 = vmatpush1.msra.mxu0 0.0
    %705 = vmatprep.subr.mxu0 0.0
    %706 = vmatpush1.msra.mxu0 0.0
    %707 = vmatprep.subr.mxu0 0.0
    %708 = vmatpush1.msra.mxu0 0.0
    %709 = vmatprep.subr.mxu0 0.0
    %710 = vmatpush1.msra.mxu0 0.0
    %711 = vmatprep.subr.mxu0 0.0
    %712 = vmatpush1.msra.mxu0 0.0
    %713 = vmatprep.subr.mxu0 0.0
    %714 = vmatpush1.msra.mxu0 0.0
    %715 = vmatprep.subr.mxu0 0.0
    %716 = vmatpush1.msra.mxu0 0.0
    %717 = vmatprep.subr.mxu0 0.0
    %718 = vmatpush1.msra.mxu0 0.0
    %719 = vmatprep.subr.mxu0 0.0
    %720 = vmatpush1.msra.mxu0 0.0
    %721 = vmatprep.subr.mxu0 0.0
    %722 = vmatpush1.msra.mxu0 0.0
    %723 = vmatprep.subr.mxu0 0.0
    %724 = vmatpush1.msra.mxu0 0.0
    %725 = vmatprep.mubr.f32.mxu0 0.0
    %726 = vmatmul.mubr.f32.gmra.mrb[0].mxu0 %v659
    %v727 = vpop.f32.mrb[0].mxu0
    %v728 = vadd.f32 %v655, %v727
    %v729 = vpop.f32.mrb[0].mxu0
    %v730 = vadd.f32 %v655, %v729
    %731 = vdwg.mxu0
    %732 = vmatprep.subr.mxu0 %v602
    %733 = vmatpush1.msra.mxu0 %v601
    %734 = vmatprep.subr.mxu0 %v615
    %735 = vmatpush1.msra.mxu0 %v614
    %736 = vmatprep.subr.mxu0 %v628
    %737 = vmatpush1.msra.mxu0 %v627
    %738 = vmatprep.subr.mxu0 %v641
    %739 = vmatpush1.msra.mxu0 %v640
    %740 = vmatprep.subr.mxu0 0.0
    %741 = vmatpush1.msra.mxu0 0.0
    %742 = vmatprep.subr.mxu0 0.0
    %743 = vmatpush1.msra.mxu0 0.0
    %744 = vmatprep.subr.mxu0 0.0
    %745 = vmatpush1.msra.mxu0 0.0
    %746 = vmatprep.subr.mxu0 0.0
    %747 = vmatpush1.msra.mxu0 0.0
    %748 = vmatprep.subr.mxu0 0.0
    %749 = vmatpush1.msra.mxu0 0.0
    %750 = vmatprep.subr.mxu0 0.0
    %751 = vmatpush1.msra.mxu0 0.0
    %752 = vmatprep.subr.mxu0 0.0
    %753 = vmatpush1.msra.mxu0 0.0
    %754 = vmatprep.subr.mxu0 0.0
    %755 = vmatpush1.msra.mxu0 0.0
    %756 = vmatprep.subr.mxu0 0.0
    %757 = vmatpush1.msra.mxu0 0.0
    %758 = vmatprep.subr.mxu0 0.0
    %759 = vmatpush1.msra.mxu0 0.0
    %760 = vmatprep.subr.mxu0 0.0
    %761 = vmatpush1.msra.mxu0 0.0
    %762 = vmatprep.subr.mxu0 0.0
    %763 = vmatpush1.msra.mxu0 0.0
    %764 = vmatprep.subr.mxu0 0.0
    %765 = vmatpush1.msra.mxu0 0.0
    %766 = vmatprep.subr.mxu0 0.0
    %767 = vmatpush1.msra.mxu0 0.0
    %768 = vmatprep.subr.mxu0 0.0
    %769 = vmatpush1.msra.mxu0 0.0
    %770 = vmatprep.subr.mxu0 0.0
    %771 = vmatpush1.msra.mxu0 0.0
    %772 = vmatprep.subr.mxu0 0.0
    %773 = vmatpush1.msra.mxu0 0.0
    %774 = vmatprep.subr.mxu0 0.0
    %775 = vmatpush1.msra.mxu0 0.0
    %776 = vmatprep.subr.mxu0 0.0
    %777 = vmatpush1.msra.mxu0 0.0
    %778 = vmatprep.subr.mxu0 0.0
    %779 = vmatpush1.msra.mxu0 0.0
    %780 = vmatprep.subr.mxu0 0.0
    %781 = vmatpush1.msra.mxu0 0.0
    %782 = vmatprep.subr.mxu0 0.0
    %783 = vmatpush1.msra.mxu0 0.0
    %784 = vmatprep.subr.mxu0 0.0
    %785 = vmatpush1.msra.mxu0 0.0
    %786 = vmatprep.subr.mxu0 0.0
    %787 = vmatpush1.msra.mxu0 0.0
    %788 = vmatprep.subr.mxu0 0.0
    %789 = vmatpush1.msra.mxu0 0.0
    %790 = vmatprep.subr.mxu0 0.0
    %791 = vmatpush1.msra.mxu0 0.0
    %792 = vmatprep.subr.mxu0 0.0
    %793 = vmatpush1.msra.mxu0 0.0
    %794 = vmatprep.subr.mxu0 0.0
    %795 = vmatpush1.msra.mxu0 0.0
    %796 = vmatprep.mubr.f32.mxu0 0.0
    %797 = vmatmul.mubr.f32.gmra.mrb[0].mxu0 %v659
    %v798 = vpop.f32.mrb[0].mxu0
    %v799 = vadd.f32 %v655, %v798
    %v800 = vpop.f32.mrb[0].mxu0
    %v801 = vadd.f32 %v655, %v800
    %802 = vdwg.mxu0
    %803 = vmatprep.subr.mxu0 %v604
    %804 = vmatpush1.msra.mxu0 %v603
    %805 = vmatprep.subr.mxu0 %v617
    %806 = vmatpush1.msra.mxu0 %v616
    %807 = vmatprep.subr.mxu0 %v630
    %808 = vmatpush1.msra.mxu0 %v629
    %809 = vmatprep.subr.mxu0 %v643
    %810 = vmatpush1.msra.mxu0 %v642
    %811 = vmatprep.subr.mxu0 0.0
    %812 = vmatpush1.msra.mxu0 0.0
    %813 = vmatprep.subr.mxu0 0.0
    %814 = vmatpush1.msra.mxu0 0.0
    %815 = vmatprep.subr.mxu0 0.0
    %816 = vmatpush1.msra.mxu0 0.0
    %817 = vmatprep.subr.mxu0 0.0
    %818 = vmatpush1.msra.mxu0 0.0
    %819 = vmatprep.subr.mxu0 0.0
    %820 = vmatpush1.msra.mxu0 0.0
    %821 = vmatprep.subr.mxu0 0.0
    %822 = vmatpush1.msra.mxu0 0.0
    %823 = vmatprep.subr.mxu0 0.0
    %824 = vmatpush1.msra.mxu0 0.0
    %825 = vmatprep.subr.mxu0 0.0
    %826 = vmatpush1.msra.mxu0 0.0
    %827 = vmatprep.subr.mxu0 0.0
    %828 = vmatpush1.msra.mxu0 0.0
    %829 = vmatprep.subr.mxu0 0.0
    %830 = vmatpush1.msra.mxu0 0.0
    %831 = vmatprep.subr.mxu0 0.0
    %832 = vmatpush1.msra.mxu0 0.0
    %833 = vmatprep.subr.mxu0 0.0
    %834 = vmatpush1.msra.mxu0 0.0
    %835 = vmatprep.subr.mxu0 0.0
    %836 = vmatpush1.msra.mxu0 0.0
    %837 = vmatprep.subr.mxu0 0.0
    %838 = vmatpush1.msra.mxu0 0.0
    %839 = vmatprep.subr.mxu0 0.0
    %840 = vmatpush1.msra.mxu0 0.0
    %841 = vmatprep.subr.mxu0 0.0
    %842 = vmatpush1.msra.mxu0 0.0
    %843 = vmatprep.subr.mxu0 0.0
    %844 = vmatpush1.msra.mxu0 0.0
    %845 = vmatprep.subr.mxu0 0.0
    %846 = vmatpush1.msra.mxu0 0.0
    %847 = vmatprep.subr.mxu0 0.0
    %848 = vmatpush1.msra.mxu0 0.0
    %849 = vmatprep.subr.mxu0 0.0
    %850 = vmatpush1.msra.mxu0 0.0
    %851 = vmatprep.subr.mxu0 0.0
    %852 = vmatpush1.msra.mxu0 0.0
    %853 = vmatprep.subr.mxu0 0.0
    %854 = vmatpush1.msra.mxu0 0.0
    %855 = vmatprep.subr.mxu0 0.0
    %856 = vmatpush1.msra.mxu0 0.0
    %857 = vmatprep.subr.mxu0 0.0
    %858 = vmatpush1.msra.mxu0 0.0
    %859 = vmatprep.subr.mxu0 0.0
    %860 = vmatpush1.msra.mxu0 0.0
    %861 = vmatprep.subr.mxu0 0.0
    %862 = vmatpush1.msra.mxu0 0.0
    %863 = vmatprep.subr.mxu0 0.0
    %864 = vmatpush1.msra.mxu0 0.0
    %865 = vmatprep.subr.mxu0 0.0
    %866 = vmatpush1.msra.mxu0 0.0
    %867 = vmatprep.mubr.f32.mxu0 0.0
    %868 = vmatmul.mubr.f32.gmra.mrb[0].mxu0 %v659
    %v869 = vpop.f32.mrb[0].mxu0
    %v870 = vadd.f32 %v655, %v869
    %v871 = vpop.f32.mrb[0].mxu0
    %v872 = vadd.f32 %v655, %v871
    %873 = vdwg.mxu0
    %874 = vmatprep.subr.mxu0 %v606
    %875 = vmatpush1.msra.mxu0 %v605
    %876 = vmatprep.subr.mxu0 %v619
    %877 = vmatpush1.msra.mxu0 %v618
    %878 = vmatprep.subr.mxu0 %v632
    %879 = vmatpush1.msra.mxu0 %v631
    %880 = vmatprep.subr.mxu0 %v645
    %881 = vmatpush1.msra.mxu0 %v644
    %882 = vmatprep.subr.mxu0 0.0
    %883 = vmatpush1.msra.mxu0 0.0
    %884 = vmatprep.subr.mxu0 0.0
    %885 = vmatpush1.msra.mxu0 0.0
    %886 = vmatprep.subr.mxu0 0.0
    %887 = vmatpush1.msra.mxu0 0.0
    %888 = vmatprep.subr.mxu0 0.0
    %889 = vmatpush1.msra.mxu0 0.0
    %890 = vmatprep.subr.mxu0 0.0
    %891 = vmatpush1.msra.mxu0 0.0
    %892 = vmatprep.subr.mxu0 0.0
    %893 = vmatpush1.msra.mxu0 0.0
    %894 = vmatprep.subr.mxu0 0.0
    %895 = vmatpush1.msra.mxu0 0.0
    %896 = vmatprep.subr.mxu0 0.0
    %897 = vmatpush1.msra.mxu0 0.0
    %898 = vmatprep.subr.mxu0 0.0
    %899 = vmatpush1.msra.mxu0 0.0
    %900 = vmatprep.subr.mxu0 0.0
    %901 = vmatpush1.msra.mxu0 0.0
    %902 = vmatprep.subr.mxu0 0.0
    %903 = vmatpush1.msra.mxu0 0.0
    %904 = vmatprep.subr.mxu0 0.0
    %905 = vmatpush1.msra.mxu0 0.0
    %906 = vmatprep.subr.mxu0 0.0
    %907 = vmatpush1.msra.mxu0 0.0
    %908 = vmatprep.subr.mxu0 0.0
    %909 = vmatpush1.msra.mxu0 0.0
    %910 = vmatprep.subr.mxu0 0.0
    %911 = vmatpush1.msra.mxu0 0.0
    %912 = vmatprep.subr.mxu0 0.0
    %913 = vmatpush1.msra.mxu0 0.0
    %914 = vmatprep.subr.mxu0 0.0
    %915 = vmatpush1.msra.mxu0 0.0
    %916 = vmatprep.subr.mxu0 0.0
    %917 = vmatpush1.msra.mxu0 0.0
    %918 = vmatprep.subr.mxu0 0.0
    %919 = vmatpush1.msra.mxu0 0.0
    %920 = vmatprep.subr.mxu0 0.0
    %921 = vmatpush1.msra.mxu0 0.0
    %922 = vmatprep.subr.mxu0 0.0
    %923 = vmatpush1.msra.mxu0 0.0
    %924 = vmatprep.subr.mxu0 0.0
    %925 = vmatpush1.msra.mxu0 0.0
    %926 = vmatprep.subr.mxu0 0.0
    %927 = vmatpush1.msra.mxu0 0.0
    %928 = vmatprep.subr.mxu0 0.0
    %929 = vmatpush1.msra.mxu0 0.0
    %930 = vmatprep.subr.mxu0 0.0
    %931 = vmatpush1.msra.mxu0 0.0
    %932 = vmatprep.subr.mxu0 0.0
    %933 = vmatpush1.msra.mxu0 0.0
    %934 = vmatprep.subr.mxu0 0.0
    %935 = vmatpush1.msra.mxu0 0.0
    %936 = vmatprep.subr.mxu0 0.0
    %937 = vmatpush1.msra.mxu0 0.0
    %938 = vmatprep.mubr.f32.mxu0 0.0
    %939 = vmatmul.mubr.f32.gmra.mrb[0].mxu0 %v659
    %v940 = vpop.f32.mrb[0].mxu0
    %v941 = vadd.f32 %v655, %v940
    %v942 = vpop.f32.mrb[0].mxu0
    %v943 = vadd.f32 %v655, %v942
    %944 = vdwg.mxu0
    %945 = vmatprep.subr.mxu0 %v608
    %946 = vmatpush1.msra.mxu0 %v607
    %947 = vmatprep.subr.mxu0 %v621
    %948 = vmatpush1.msra.mxu0 %v620
    %949 = vmatprep.subr.mxu0 %v634
    %950 = vmatpush1.msra.mxu0 %v633
    %951 = vmatprep.subr.mxu0 %v647
    %952 = vmatpush1.msra.mxu0 %v646
    %953 = vmatprep.subr.mxu0 0.0
    %954 = vmatpush1.msra.mxu0 0.0
    %955 = vmatprep.subr.mxu0 0.0
    %956 = vmatpush1.msra.mxu0 0.0
    %957 = vmatprep.subr.mxu0 0.0
    %958 = vmatpush1.msra.mxu0 0.0
    %959 = vmatprep.subr.mxu0 0.0
    %960 = vmatpush1.msra.mxu0 0.0
    %961 = vmatprep.subr.mxu0 0.0
    %962 = vmatpush1.msra.mxu0 0.0
    %963 = vmatprep.subr.mxu0 0.0
    %964 = vmatpush1.msra.mxu0 0.0
    %965 = vmatprep.subr.mxu0 0.0
    %966 = vmatpush1.msra.mxu0 0.0
    %967 = vmatprep.subr.mxu0 0.0
    %968 = vmatpush1.msra.mxu0 0.0
    %969 = vmatprep.subr.mxu0 0.0
    %970 = vmatpush1.msra.mxu0 0.0
    %971 = vmatprep.subr.mxu0 0.0
    %972 = vmatpush1.msra.mxu0 0.0
    %973 = vmatprep.subr.mxu0 0.0
    %974 = vmatpush1.msra.mxu0 0.0
    %975 = vmatprep.subr.mxu0 0.0
    %976 = vmatpush1.msra.mxu0 0.0
    %977 = vmatprep.subr.mxu0 0.0
    %978 = vmatpush1.msra.mxu0 0.0
    %979 = vmatprep.subr.mxu0 0.0
    %980 = vmatpush1.msra.mxu0 0.0
    %981 = vmatprep.subr.mxu0 0.0
    %982 = vmatpush1.msra.mxu0 0.0
    %983 = vmatprep.subr.mxu0 0.0
    %984 = vmatpush1.msra.mxu0 0.0
    %985 = vmatprep.subr.mxu0 0.0
    %986 = vmatpush1.msra.mxu0 0.0
    %987 = vmatprep.subr.mxu0 0.0
    %988 = vmatpush1.msra.mxu0 0.0
    %989 = vmatprep.subr.mxu0 0.0
    %990 = vmatpush1.msra.mxu0 0.0
    %991 = vmatprep.subr.mxu0 0.0
    %992 = vmatpush1.msra.mxu0 0.0
    %993 = vmatprep.subr.mxu0 0.0
    %994 = vmatpush1.msra.mxu0 0.0
    %995 = vmatprep.subr.mxu0 0.0
    %996 = vmatpush1.msra.mxu0 0.0
    %997 = vmatprep.subr.mxu0 0.0
    %998 = vmatpush1.msra.mxu0 0.0
    %999 = vmatprep.subr.mxu0 0.0
    %1000 = vmatpush1.msra.mxu0 0.0
    %1001 = vmatprep.subr.mxu0 0.0
    %1002 = vmatpush1.msra.mxu0 0.0
    %1003 = vmatprep.subr.mxu0 0.0
    %1004 = vmatpush1.msra.mxu0 0.0
    %1005 = vmatprep.subr.mxu0 0.0
    %1006 = vmatpush1.msra.mxu0 0.0
    %1007 = vmatprep.subr.mxu0 0.0
    %1008 = vmatpush1.msra.mxu0 0.0
    %1009 = vmatprep.mubr.f32.mxu0 0.0
    %1010 = vmatmul.mubr.f32.gmra.mrb[0].mxu0 %v659
    %v1011 = vpop.f32.mrb[0].mxu0
    %v1012 = vadd.f32 %v655, %v1011
    %v1013 = vpop.f32.mrb[0].mxu0
    %v1014 = vadd.f32 %v655, %v1013
    %1015 = vdwg.mxu0
    %1016 = vmatprep.subr.mxu0 %v610
    %1017 = vmatpush1.msra.mxu0 %v609
    %1018 = vmatprep.subr.mxu0 %v623
    %1019 = vmatpush1.msra.mxu0 %v622
    %1020 = vmatprep.subr.mxu0 %v636
    %1021 = vmatpush1.msra.mxu0 %v635
    %1022 = vmatprep.subr.mxu0 %v649
    %1023 = vmatpush1.msra.mxu0 %v648
    %1024 = vmatprep.subr.mxu0 0.0
    %1025 = vmatpush1.msra.mxu0 0.0
    %1026 = vmatprep.subr.mxu0 0.0
    %1027 = vmatpush1.msra.mxu0 0.0
    %1028 = vmatprep.subr.mxu0 0.0
    %1029 = vmatpush1.msra.mxu0 0.0
    %1030 = vmatprep.subr.mxu0 0.0
    %1031 = vmatpush1.msra.mxu0 0.0
    %1032 = vmatprep.subr.mxu0 0.0
    %1033 = vmatpush1.msra.mxu0 0.0
    %1034 = vmatprep.subr.mxu0 0.0
    %1035 = vmatpush1.msra.mxu0 0.0
    %1036 = vmatprep.subr.mxu0 0.0
    %1037 = vmatpush1.msra.mxu0 0.0
    %1038 = vmatprep.subr.mxu0 0.0
    %1039 = vmatpush1.msra.mxu0 0.0
    %1040 = vmatprep.subr.mxu0 0.0
    %1041 = vmatpush1.msra.mxu0 0.0
    %1042 = vmatprep.subr.mxu0 0.0
    %1043 = vmatpush1.msra.mxu0 0.0
    %1044 = vmatprep.subr.mxu0 0.0
    %1045 = vmatpush1.msra.mxu0 0.0
    %1046 = vmatprep.subr.mxu0 0.0
    %1047 = vmatpush1.msra.mxu0 0.0
    %1048 = vmatprep.subr.mxu0 0.0
    %1049 = vmatpush1.msra.mxu0 0.0
    %1050 = vmatprep.subr.mxu0 0.0
    %1051 = vmatpush1.msra.mxu0 0.0
    %1052 = vmatprep.subr.mxu0 0.0
    %1053 = vmatpush1.msra.mxu0 0.0
    %1054 = vmatprep.subr.mxu0 0.0
    %1055 = vmatpush1.msra.mxu0 0.0
    %1056 = vmatprep.subr.mxu0 0.0
    %1057 = vmatpush1.msra.mxu0 0.0
    %1058 = vmatprep.subr.mxu0 0.0
    %1059 = vmatpush1.msra.mxu0 0.0
    %1060 = vmatprep.subr.mxu0 0.0
    %1061 = vmatpush1.msra.mxu0 0.0
    %1062 = vmatprep.subr.mxu0 0.0
    %1063 = vmatpush1.msra.mxu0 0.0
    %1064 = vmatprep.subr.mxu0 0.0
    %1065 = vmatpush1.msra.mxu0 0.0
    %1066 = vmatprep.subr.mxu0 0.0
    %1067 = vmatpush1.msra.mxu0 0.0
    %1068 = vmatprep.subr.mxu0 0.0
    %1069 = vmatpush1.msra.mxu0 0.0
    %1070 = vmatprep.subr.mxu0 0.0
    %1071 = vmatpush1.msra.mxu0 0.0
    %1072 = vmatprep.subr.mxu0 0.0
    %1073 = vmatpush1.msra.mxu0 0.0
    %1074 = vmatprep.subr.mxu0 0.0
    %1075 = vmatpush1.msra.mxu0 0.0
    %1076 = vmatprep.subr.mxu0 0.0
    %1077 = vmatpush1.msra.mxu0 0.0
    %1078 = vmatprep.subr.mxu0 0.0
    %1079 = vmatpush1.msra.mxu0 0.0
    %1080 = vmatprep.mubr.f32.mxu0 0.0
    %1081 = vmatmul.mubr.f32.gmra.mrb[0].mxu0 %v659
    %v1082 = vpop.f32.mrb[0].mxu0
    %v1083 = vadd.f32 %v655, %v1082
    %v1084 = vpop.f32.mrb[0].mxu0
    %v1085 = vadd.f32 %v655, %v1084
    %1086 = vdwg.mxu0
    %1087 = vmatprep.subr.mxu0 0.0
    %1088 = vmatpush1.msra.mxu0 %v611
    %1089 = vmatprep.subr.mxu0 0.0
    %1090 = vmatpush1.msra.mxu0 %v624
    %1091 = vmatprep.subr.mxu0 0.0
    %1092 = vmatpush1.msra.mxu0 %v637
    %1093 = vmatprep.subr.mxu0 0.0
    %1094 = vmatpush1.msra.mxu0 %v650
    %1095 = vmatprep.subr.mxu0 0.0
    %1096 = vmatpush1.msra.mxu0 0.0
    %1097 = vmatprep.subr.mxu0 0.0
    %1098 = vmatpush1.msra.mxu0 0.0
    %1099 = vmatprep.subr.mxu0 0.0
    %1100 = vmatpush1.msra.mxu0 0.0
    %1101 = vmatprep.subr.mxu0 0.0
    %1102 = vmatpush1.msra.mxu0 0.0
    %1103 = vmatprep.subr.mxu0 0.0
    %1104 = vmatpush1.msra.mxu0 0.0
    %1105 = vmatprep.subr.mxu0 0.0
    %1106 = vmatpush1.msra.mxu0 0.0
    %1107 = vmatprep.subr.mxu0 0.0
    %1108 = vmatpush1.msra.mxu0 0.0
    %1109 = vmatprep.subr.mxu0 0.0
    %1110 = vmatpush1.msra.mxu0 0.0
    %1111 = vmatprep.subr.mxu0 0.0
    %1112 = vmatpush1.msra.mxu0 0.0
    %1113 = vmatprep.subr.mxu0 0.0
    %1114 = vmatpush1.msra.mxu0 0.0
    %1115 = vmatprep.subr.mxu0 0.0
    %1116 = vmatpush1.msra.mxu0 0.0
    %1117 = vmatprep.subr.mxu0 0.0
    %1118 = vmatpush1.msra.mxu0 0.0
    %1119 = vmatprep.subr.mxu0 0.0
    %1120 = vmatpush1.msra.mxu0 0.0
    %1121 = vmatprep.subr.mxu0 0.0
    %1122 = vmatpush1.msra.mxu0 0.0
    %1123 = vmatprep.subr.mxu0 0.0
    %1124 = vmatpush1.msra.mxu0 0.0
    %1125 = vmatprep.subr.mxu0 0.0
    %1126 = vmatpush1.msra.mxu0 0.0
    %1127 = vmatprep.subr.mxu0 0.0
    %1128 = vmatpush1.msra.mxu0 0.0
    %1129 = vmatprep.subr.mxu0 0.0
    %1130 = vmatpush1.msra.mxu0 0.0
    %1131 = vmatprep.subr.mxu0 0.0
    %1132 = vmatpush1.msra.mxu0 0.0
    %1133 = vmatprep.subr.mxu0 0.0
    %1134 = vmatpush1.msra.mxu0 0.0
    %1135 = vmatprep.subr.mxu0 0.0
    %1136 = vmatpush1.msra.mxu0 0.0
    %1137 = vmatprep.subr.mxu0 0.0
    %1138 = vmatpush1.msra.mxu0 0.0
    %1139 = vmatprep.subr.mxu0 0.0
    %1140 = vmatpush1.msra.mxu0 0.0
    %1141 = vmatprep.subr.mxu0 0.0
    %1142 = vmatpush1.msra.mxu0 0.0
    %1143 = vmatprep.subr.mxu0 0.0
    %1144 = vmatpush1.msra.mxu0 0.0
    %1145 = vmatprep.subr.mxu0 0.0
    %1146 = vmatpush1.msra.mxu0 0.0
    %1147 = vmatprep.subr.mxu0 0.0
    %1148 = vmatpush1.msra.mxu0 0.0
    %1149 = vmatprep.subr.mxu0 0.0
    %1150 = vmatpush1.msra.mxu0 0.0
    %1151 = vmatprep.mubr.f32.mxu0 0.0
    %1152 = vmatmul.mubr.f32.gmra.mrb[0].mxu0 %v659
    %v1153 = vpop.f32.mrb[0].mxu0
    %v1154 = vadd.f32 %v655, %v1153
    %v1155 = vpop.f32.mrb[0].mxu0
    %1156 = vdwg.mxu0
    %v1157 = vmax.f32 %v728, 0.0
    %v1158 = vmax.f32 %v730, 0.0
    %v1159 = vmax.f32 %v799, 0.0
    %v1160 = vmax.f32 %v801, 0.0
    %v1161 = vmax.f32 %v870, 0.0
    %v1162 = vmax.f32 %v872, 0.0
    %v1163 = vmax.f32 %v941, 0.0
    %v1164 = vmax.f32 %v943, 0.0
    %v1165 = vmax.f32 %v1012, 0.0
    %v1166 = vmax.f32 %v1014, 0.0
    %v1167 = vmax.f32 %v1083, 0.0
    %v1168 = vmax.f32 %v1085, 0.0
    %v1169 = vmax.f32 %v1154, 0.0
    %1170 = vst [vmem:[#allocation3] sm:$0xff] %v1157
    %1171 = vst [vmem:[#allocation3 + $0x8] sm:$0xff] %v1158
    %1172 = vst [vmem:[#allocation3 + $0x10] sm:$0xff] %v1159
    %1173 = vst [vmem:[#allocation3 + $0x18] sm:$0xff] %v1160
    %1174 = vst [vmem:[#allocation3 + $0x20] sm:$0xff] %v1161
    %1175 = vst [vmem:[#allocation3 + $0x28] sm:$0xff] %v1162
    %1176 = vst [vmem:[#allocation3 + $0x30] sm:$0xff] %v1163
    %1177 = vst [vmem:[#allocation3 + $0x38] sm:$0xff] %v1164
    %1178 = vst [vmem:[#allocation3 + $0x40] sm:$0xff] %v1165
    %1179 = vst [vmem:[#allocation3 + $0x48] sm:$0xff] %v1166
    %1180 = vst [vmem:[#allocation3 + $0x50] sm:$0xff] %v1167
    %1181 = vst [vmem:[#allocation3 + $0x58] sm:$0xff] %v1168
    %1182 = vst [vmem:[#allocation3 + $0x60] sm:$0xff] %v1169
    %vm1183 = vcmask 1047808
    %1184 = vst.msk [vmem:[#allocation4 + $0x10] sm:$0xff] %vm1183, 0.0
    %vm1185 = vcmask 523264
    %1186 = vst.msk [vmem:[#allocation4 + $0x18] sm:$0xff] %vm1185, 0.0
    %v1187 = vld [vmem:[#allocation3] sm:$0xff]
    %v1188 = vld [vmem:[#allocation3 + $0x8] sm:$0xff]
    %v1189 = vld [vmem:[#allocation3 + $0x10] sm:$0xff]
    %v1190 = vld [vmem:[#allocation3 + $0x18] sm:$0xff]
    %v1191 = vld [vmem:[#allocation3 + $0x20] sm:$0xff]
    %v1192 = vld [vmem:[#allocation3 + $0x28] sm:$0xff]
    %v1193 = vld [vmem:[#allocation3 + $0x30] sm:$0xff]
    %1201 = vrot.lane.b32.xlu0 %v1187, 127
    %v1202 = vpop.permute.xlu0 %1201
    %1203 = vrot.lane.b32.xlu0 %v1188, 127
    %v1204 = vpop.permute.xlu0 %1203
    %1205 = vrot.lane.b32.xlu0 %v1189, 127
    %v1206 = vpop.permute.xlu0 %1205
    %1207 = vrot.lane.b32.xlu0 %v1190, 127
    %v1208 = vpop.permute.xlu0 %1207
    %1209 = vrot.lane.b32.xlu0 %v1191, 127
    %v1210 = vpop.permute.xlu0 %1209
    %1211 = vrot.lane.b32.xlu0 %v1192, 127
    %v1212 = vpop.permute.xlu0 %1211
    %1213 = vrot.lane.b32.xlu0 %v1193, 127
    %v1214 = vpop.permute.xlu0 %1213
    %v1215 = vsel %vm68, %v1202, %v1204
    %v1216 = vsel %vm68, %v1204, %v1206
    %v1217 = vsel %vm68, %v1206, %v1208
    %v1218 = vsel %vm68, %v1208, %v1210
    %v1219 = vsel %vm68, %v1210, %v1212
    %v1220 = vsel %vm68, %v1212, %v1214
    %v1228 = vmax.f32 %v1187, %v1215
    %v1229 = vmax.f32 %v1188, %v1216
    %v1230 = vmax.f32 %v1189, %v1217
    %v1231 = vmax.f32 %v1190, %v1218
    %v1232 = vmax.f32 %v1191, %v1219
    %v1233 = vmax.f32 %v1192, %v1220
    %v1234 = vmax.f32 %v1193, %v1214
    %1242 = vrot.lane.b32.xlu0 %v1228, 100
    %v1243 = vpop.permute.xlu0 %1242
    %1244 = vrot.lane.b32.xlu0 %v1229, 100
    %v1245 = vpop.permute.xlu0 %1244
    %1246 = vrot.lane.b32.xlu0 %v1230, 100
    %v1247 = vpop.permute.xlu0 %1246
    %1248 = vrot.lane.b32.xlu0 %v1231, 100
    %v1249 = vpop.permute.xlu0 %1248
    %1250 = vrot.lane.b32.xlu0 %v1232, 100
    %v1251 = vpop.permute.xlu0 %1250
    %1252 = vrot.lane.b32.xlu0 %v1233, 100
    %v1253 = vpop.permute.xlu0 %1252
    %1254 = vrot.lane.b32.xlu0 %v1234, 100
    %v1255 = vpop.permute.xlu0 %1254
    %v1256 = vsel %vm156, %v1243, %v1245
    %v1257 = vsel %vm156, %v1245, %v1247
    %v1258 = vsel %vm156, %v1247, %v1249
    %v1259 = vsel %vm156, %v1249, %v1251
    %v1260 = vsel %vm156, %v1251, %v1253
    %v1261 = vsel %vm156, %v1253, %v1255
    %v1269 = vmax.f32 %v1228, %v1256
    %v1270 = vmax.f32 %v1229, %v1257
    %v1271 = vmax.f32 %v1230, %v1258
    %v1272 = vmax.f32 %v1231, %v1259
    %v1273 = vmax.f32 %v1232, %v1260
    %v1274 = vmax.f32 %v1233, %v1261
    %v1275 = vmax.f32 %v1234, %v1255
    %v1276 = vld [vmem:[%s3] sm:$0xff]
    %v1277 = vld [vmem:[%s3 + $0x8] sm:$0xff]
    %v1278 = vld [vmem:[%s3 + $0x10] sm:$0xff]
    %v1279 = vld [vmem:[%s3 + $0x18] sm:$0xff]
    %v1280 = vld [vmem:[%s3 + $0x20] sm:$0xff]
    %v1281 = vld [vmem:[%s3 + $0x28] sm:$0xff]
    %v1282 = vld [vmem:[%s3 + $0x30] sm:$0xff]
    %v1283 = vld [vmem:[%s3 + $0x38] sm:$0xff]
    %v1284 = vld [vmem:[%s3 + $0x40] sm:$0xff]
    %v1285 = vld [vmem:[%s3 + $0x48] sm:$0xff]
    %v1286 = vld [vmem:[%s3 + $0x50] sm:$0xff]
    %v1287 = vld [vmem:[%s3 + $0x58] sm:$0xff]
    %v1288 = vld [vmem:[%s3 + $0x60] sm:$0xff]
    %v1289 = vld [vmem:[%s3 + $0x68] sm:$0xff]
    %v1290 = vld [vmem:[%s3 + $0x70] sm:$0xff]
    %v1291 = vld [vmem:[%s3 + $0x78] sm:$0xff]
    %v1292 = vld [vmem:[%s3 + $0x80] sm:$0xff]
    %v1293 = vld [vmem:[%s3 + $0x88] sm:$0xff]
    %v1294 = vld [vmem:[%s3 + $0x90] sm:$0xff]
    %v1295 = vld [vmem:[%s3 + $0x98] sm:$0xff]
    %v1296 = vld [vmem:[%s3 + $0xa0] sm:$0xff]
    %v1297 = vld [vmem:[%s3 + $0xa8] sm:$0xff]
    %v1298 = vld [vmem:[%s3 + $0xb0] sm:$0xff]
    %v1299 = vld [vmem:[%s3 + $0xb8] sm:$0xff]
    %v1300 = vld [vmem:[%s3 + $0xc0] sm:$0xff]
    %v1301 = vld [vmem:[%s3 + $0xc8] sm:$0xff]
    %v1302 = vld [vmem:[%s3 + $0xd0] sm:$0xff]
    %v1303 = vld [vmem:[%s3 + $0xd8] sm:$0xff]
    %v1304 = vld [vmem:[%s3 + $0xe0] sm:$0xff]
    %v1305 = vld [vmem:[%s3 + $0xe8] sm:$0xff]
    %v1306 = vld [vmem:[%s3 + $0xf0] sm:$0xff]
    %v1307 = vld [vmem:[%s3 + $0xf8] sm:$0xff]
    %v1308 = vld [vmem:[%s3 + $0x100] sm:$0xff]
    %v1309 = vld [vmem:[%s3 + $0x108] sm:$0xff]
    %v1310 = vld [vmem:[%s3 + $0x110] sm:$0xff]
    %v1311 = vld [vmem:[%s3 + $0x118] sm:$0xff]
    %v1312 = vld [vmem:[%s3 + $0x120] sm:$0xff]
    %v1313 = vld [vmem:[%s3 + $0x128] sm:$0xff]
    %v1314 = vld [vmem:[%s3 + $0x130] sm:$0xff]
    %v1315 = vld [vmem:[%s3 + $0x138] sm:$0xff]
    %v1316 = vld [vmem:[%s3 + $0x140] sm:$0xff]
    %v1317 = vld [vmem:[%s3 + $0x148] sm:$0xff]
    %v1318 = vld [vmem:[%s3 + $0x150] sm:$0xff]
    %v1319 = vld [vmem:[%s3 + $0x158] sm:$0xff]
    %v1320 = vld [vmem:[%s3 + $0x160] sm:$0xff]
    %v1321 = vld [vmem:[%s3 + $0x168] sm:$0xff]
    %v1322 = vld [vmem:[%s3 + $0x170] sm:$0xff]
    %v1323 = vld [vmem:[%s3 + $0x178] sm:$0xff]
    %v1324 = vld [vmem:[%s3 + $0x180] sm:$0xff]
    %v1325 = vld [vmem:[%s3 + $0x188] sm:$0xff]
    %v1326 = vld [vmem:[%s3 + $0x190] sm:$0xff]
    %v1327 = vld [vmem:[%s3 + $0x198] sm:$0xff]
    %v1328 = vld [vmem:[%s3 + $0x1a0] sm:$0xff]
    %v1329 = vld [vmem:[%s3 + $0x1a8] sm:$0xff]
    %v1330 = vld [vmem:[%s3 + $0x1b0] sm:$0xff]
    %v1331 = vld [vmem:[%s3 + $0x1b8] sm:$0xff]
    %v1332 = vld [vmem:[%s3 + $0x1c0] sm:$0xff]
    %v1333 = vld [vmem:[%s3 + $0x1c8] sm:$0xff]
    %v1334 = vld [vmem:[%s3 + $0x1d0] sm:$0xff]
    %v1335 = vld [vmem:[%s3 + $0x1d8] sm:$0xff]
    %v1336 = vld [vmem:[%s3 + $0x1e0] sm:$0xff]
    %v1337 = vld [vmem:[%s3 + $0x1e8] sm:$0xff]
    %v1338 = vld [vmem:[%s3 + $0x1f0] sm:$0xff]
    %v1339 = vld [vmem:[%s3 + $0x1f8] sm:$0xff]
    %v1340 = vld [vmem:[%s3 + $0x200] sm:$0xff]
    %v1341 = vld [vmem:[%s3 + $0x208] sm:$0xff]
    %v1342 = vld [vmem:[%s3 + $0x210] sm:$0xff]
    %v1343 = vld [vmem:[%s3 + $0x218] sm:$0xff]
    %v1344 = vld [vmem:[%s3 + $0x220] sm:$0xff]
    %v1345 = vld [vmem:[%s3 + $0x228] sm:$0xff]
    %v1346 = vld [vmem:[%s3 + $0x230] sm:$0xff]
    %v1347 = vld [vmem:[%s3 + $0x238] sm:$0xff]
    %v1348 = vld [vmem:[%s3 + $0x240] sm:$0xff]
    %v1349 = vld [vmem:[%s3 + $0x248] sm:$0xff]
    %v1350 = vld [vmem:[%s3 + $0x250] sm:$0xff]
    %v1351 = vld [vmem:[%s3 + $0x258] sm:$0xff]
    %v1352 = vld [vmem:[%s3 + $0x260] sm:$0xff]
    %v1353 = vld [vmem:[%s3 + $0x268] sm:$0xff]
    %v1354 = vld [vmem:[%s3 + $0x270] sm:$0xff]
    %v1355 = vld [vmem:[%s3 + $0x278] sm:$0xff]
    %v1356 = vld [vmem:[%s3 + $0x280] sm:$0xff]
    %v1357 = vld [vmem:[%s3 + $0x288] sm:$0xff]
    %v1358 = vld [vmem:[%s3 + $0x290] sm:$0xff]
    %v1359 = vld [vmem:[%s3 + $0x298] sm:$0xff]
    %v1360 = vld [vmem:[%s3 + $0x2a0] sm:$0xff]
    %v1361 = vld [vmem:[%s3 + $0x2a8] sm:$0xff]
    %v1362 = vld [vmem:[%s3 + $0x2b0] sm:$0xff]
    %v1363 = vld [vmem:[%s3 + $0x2b8] sm:$0xff]
    %v1364 = vld [vmem:[%s3 + $0x2c0] sm:$0xff]
    %v1365 = vld [vmem:[%s3 + $0x2c8] sm:$0xff]
    %v1366 = vld [vmem:[%s3 + $0x2d0] sm:$0xff]
    %v1367 = vld [vmem:[%s3 + $0x2d8] sm:$0xff]
    %v1368 = vld [vmem:[%s3 + $0x2e0] sm:$0xff]
    %v1369 = vld [vmem:[%s3 + $0x2e8] sm:$0xff]
    %v1370 = vld [vmem:[%s3 + $0x2f0] sm:$0xff]
    %v1371 = vld [vmem:[%s3 + $0x2f8] sm:$0xff]
    %v1372 = vld [vmem:[%s3 + $0x300] sm:$0xff]
    %v1373 = vld [vmem:[%s3 + $0x308] sm:$0xff]
    %v1374 = vld [vmem:[%s3 + $0x310] sm:$0xff]
    %v1375 = vld [vmem:[%s3 + $0x318] sm:$0xff]
    %v1376 = vld [vmem:[%s3 + $0x320] sm:$0xff]
    %v1377 = vld [vmem:[%s3 + $0x328] sm:$0xff]
    %v1378 = vld [vmem:[%s3 + $0x330] sm:$0xff]
    %v1379 = vld [vmem:[%s3 + $0x338] sm:$0xff]
    %v1380 = vld [vmem:[%s3 + $0x340] sm:$0xff]
    %v1381 = vld [vmem:[%s3 + $0x348] sm:$0xff]
    %v1382 = vld [vmem:[%s3 + $0x350] sm:$0xff]
    %v1383 = vld [vmem:[%s3 + $0x358] sm:$0xff]
    %v1384 = vld [vmem:[%s3 + $0x360] sm:$0xff]
    %v1385 = vld [vmem:[%s3 + $0x368] sm:$0xff]
    %v1386 = vld [vmem:[%s3 + $0x370] sm:$0xff]
    %v1387 = vld [vmem:[%s3 + $0x378] sm:$0xff]
    %v1388 = vld [vmem:[%s3 + $0x380] sm:$0xff]
    %v1389 = vld [vmem:[%s3 + $0x388] sm:$0xff]
    %v1390 = vld [vmem:[%s3 + $0x390] sm:$0xff]
    %v1391 = vld [vmem:[%s3 + $0x398] sm:$0xff]
    %v1392 = vld [vmem:[%s3 + $0x3a0] sm:$0xff]
    %v1393 = vld [vmem:[%s3 + $0x3a8] sm:$0xff]
    %v1394 = vld [vmem:[%s3 + $0x3b0] sm:$0xff]
    %v1395 = vld [vmem:[%s3 + $0x3b8] sm:$0xff]
    %v1396 = vld [vmem:[%s3 + $0x3c0] sm:$0xff]
    %v1397 = vld [vmem:[%s3 + $0x3c8] sm:$0xff]
    %v1398 = vld [vmem:[%s3 + $0x3d0] sm:$0xff]
    %v1399 = vld [vmem:[%s3 + $0x3d8] sm:$0xff]
    %v1400 = vld [vmem:[%s3 + $0x3e0] sm:$0xff]
    %v1401 = vld [vmem:[%s3 + $0x3e8] sm:$0xff]
    %v1402 = vld [vmem:[%s3 + $0x3f0] sm:$0xff]
    %v1403 = vld [vmem:[%s3 + $0x3f8] sm:$0xff]
    %v1404 = vld [vmem:[%s3 + $0x400] sm:$0xff]
    %v1405 = vld [vmem:[%s3 + $0x408] sm:$0xff]
    %v1406 = vld [vmem:[%s3 + $0x410] sm:$0xff]
    %v1407 = vld [vmem:[%s3 + $0x418] sm:$0xff]
    %v1408 = vld [vmem:[%s3 + $0x420] sm:$0xff]
    %v1409 = vld [vmem:[%s3 + $0x428] sm:$0xff]
    %v1410 = vld [vmem:[%s3 + $0x430] sm:$0xff]
    %v1411 = vld [vmem:[%s3 + $0x438] sm:$0xff]
    %v1412 = vld [vmem:[%s3 + $0x440] sm:$0xff]
    %v1413 = vld [vmem:[%s3 + $0x448] sm:$0xff]
    %v1414 = vld [vmem:[%s3 + $0x450] sm:$0xff]
    %v1415 = vld [vmem:[%s3 + $0x458] sm:$0xff]
    %v1416 = vld [vmem:[%s3 + $0x460] sm:$0xff]
    %v1417 = vld [vmem:[%s3 + $0x468] sm:$0xff]
    %v1418 = vld [vmem:[%s3 + $0x470] sm:$0xff]
    %v1419 = vld [vmem:[%s3 + $0x478] sm:$0xff]
    %v1420 = vld [vmem:[%s3 + $0x480] sm:$0xff]
    %v1421 = vld [vmem:[%s3 + $0x488] sm:$0xff]
    %v1422 = vld [vmem:[%s3 + $0x490] sm:$0xff]
    %v1423 = vld [vmem:[%s3 + $0x498] sm:$0xff]
    %v1424 = vld [vmem:[%s3 + $0x4a0] sm:$0xff]
    %v1425 = vld [vmem:[%s3 + $0x4a8] sm:$0xff]
    %v1426 = vld [vmem:[%s3 + $0x4b0] sm:$0xff]
    %v1427 = vld [vmem:[%s3 + $0x4b8] sm:$0xff]
    %v1428 = vld [vmem:[%s3 + $0x4c0] sm:$0xff]
    %v1429 = vld [vmem:[%s3 + $0x4c8] sm:$0xff]
    %v1430 = vld [vmem:[%s3 + $0x4d0] sm:$0xff]
    %v1431 = vld [vmem:[%s3 + $0x4d8] sm:$0xff]
    %v1432 = vld [vmem:[%s3 + $0x4e0] sm:$0xff]
    %v1433 = vld [vmem:[%s3 + $0x4e8] sm:$0xff]
    %v1434 = vld [vmem:[%s3 + $0x4f0] sm:$0xff]
    %v1435 = vld [vmem:[%s3 + $0x4f8] sm:$0xff]
    %v1436 = vld [vmem:[%s3 + $0x500] sm:$0xff]
    %v1437 = vld [vmem:[%s3 + $0x508] sm:$0xff]
    %v1438 = vld [vmem:[%s3 + $0x510] sm:$0xff]
    %v1439 = vld [vmem:[%s3 + $0x518] sm:$0xff]
    %v1440 = vld [vmem:[%s3 + $0x520] sm:$0xff]
    %v1441 = vld [vmem:[%s3 + $0x528] sm:$0xff]
    %v1442 = vld [vmem:[%s3 + $0x530] sm:$0xff]
    %v1443 = vld [vmem:[%s3 + $0x538] sm:$0xff]
    %v1444 = vld [vmem:[%s3 + $0x540] sm:$0xff]
    %v1445 = vld [vmem:[%s3 + $0x548] sm:$0xff]
    %v1446 = vld [vmem:[%s3 + $0x550] sm:$0xff]
    %v1447 = vld [vmem:[%s3 + $0x558] sm:$0xff]
    %v1448 = vld [vmem:[%s3 + $0x560] sm:$0xff]
    %v1449 = vld [vmem:[%s3 + $0x568] sm:$0xff]
    %v1450 = vld [vmem:[%s3 + $0x570] sm:$0xff]
    %v1451 = vld [vmem:[%s3 + $0x578] sm:$0xff]
    %v1452 = vld [vmem:[%s3 + $0x580] sm:$0xff]
    %v1453 = vld [vmem:[%s3 + $0x588] sm:$0xff]
    %v1454 = vld [vmem:[%s3 + $0x590] sm:$0xff]
    %v1455 = vld [vmem:[%s3 + $0x598] sm:$0xff]
    %v1456 = vld [vmem:[%s3 + $0x5a0] sm:$0xff]
    %v1457 = vld [vmem:[%s3 + $0x5a8] sm:$0xff]
    %v1458 = vld [vmem:[%s3 + $0x5b0] sm:$0xff]
    %v1459 = vld [vmem:[%s3 + $0x5b8] sm:$0xff]
    %v1460 = vld [vmem:[%s3 + $0x5c0] sm:$0xff]
    %v1461 = vld [vmem:[%s3 + $0x5c8] sm:$0xff]
    %v1462 = vld [vmem:[%s3 + $0x5d0] sm:$0xff]
    %v1463 = vld [vmem:[%s3 + $0x5d8] sm:$0xff]
    %v1464 = vld [vmem:[%s3 + $0x5e0] sm:$0xff]
    %v1465 = vld [vmem:[%s3 + $0x5e8] sm:$0xff]
    %v1466 = vld [vmem:[%s3 + $0x5f0] sm:$0xff]
    %v1467 = vld [vmem:[%s3 + $0x5f8] sm:$0xff]
    %v1468 = vld [vmem:[%s3 + $0x600] sm:$0xff]
    %v1469 = vld [vmem:[%s3 + $0x608] sm:$0xff]
    %v1470 = vld [vmem:[%s3 + $0x610] sm:$0xff]
    %v1471 = vld [vmem:[%s3 + $0x618] sm:$0xff]
    %v1473 = vsel %vm486, %v1275, 0
    %1475 = vmatprep.subr.mxu0 %v1277
    %1476 = vmatpush1.msra.mxu0 %v1276
    %1477 = vmatprep.subr.mxu0 %v1279
    %1478 = vmatpush1.msra.mxu0 %v1278
    %1479 = vmatprep.subr.mxu0 %v1281
    %1480 = vmatpush1.msra.mxu0 %v1280
    %1481 = vmatprep.subr.mxu0 %v1283
    %1482 = vmatpush1.msra.mxu0 %v1282
    %1483 = vmatprep.subr.mxu0 %v1285
    %1484 = vmatpush1.msra.mxu0 %v1284
    %1485 = vmatprep.subr.mxu0 %v1287
    %1486 = vmatpush1.msra.mxu0 %v1286
    %1487 = vmatprep.subr.mxu0 %v1289
    %1488 = vmatpush1.msra.mxu0 %v1288
    %1489 = vmatprep.subr.mxu0 %v1291
    %1490 = vmatpush1.msra.mxu0 %v1290
    %1491 = vmatprep.subr.mxu0 %v1293
    %1492 = vmatpush1.msra.mxu0 %v1292
    %1493 = vmatprep.subr.mxu0 %v1295
    %1494 = vmatpush1.msra.mxu0 %v1294
    %1495 = vmatprep.subr.mxu0 %v1297
    %1496 = vmatpush1.msra.mxu0 %v1296
    %1497 = vmatprep.subr.mxu0 %v1299
    %1498 = vmatpush1.msra.mxu0 %v1298
    %1499 = vmatprep.subr.mxu0 %v1301
    %1500 = vmatpush1.msra.mxu0 %v1300
    %1501 = vmatprep.subr.mxu0 %v1303
    %1502 = vmatpush1.msra.mxu0 %v1302
    %1503 = vmatprep.subr.mxu0 %v1305
    %1504 = vmatpush1.msra.mxu0 %v1304
    %1505 = vmatprep.subr.mxu0 %v1307
    %1506 = vmatpush1.msra.mxu0 %v1306
    %1507 = vmatprep.subr.mxu0 %v1309
    %1508 = vmatpush1.msra.mxu0 %v1308
    %1509 = vmatprep.subr.mxu0 %v1311
    %1510 = vmatpush1.msra.mxu0 %v1310
    %1511 = vmatprep.subr.mxu0 %v1313
    %1512 = vmatpush1.msra.mxu0 %v1312
    %1513 = vmatprep.subr.mxu0 %v1315
    %1514 = vmatpush1.msra.mxu0 %v1314
    %1515 = vmatprep.subr.mxu0 %v1317
    %1516 = vmatpush1.msra.mxu0 %v1316
    %1517 = vmatprep.subr.mxu0 %v1319
    %1518 = vmatpush1.msra.mxu0 %v1318
    %1519 = vmatprep.subr.mxu0 %v1321
    %1520 = vmatpush1.msra.mxu0 %v1320
    %1521 = vmatprep.subr.mxu0 %v1323
    %1522 = vmatpush1.msra.mxu0 %v1322
    %1523 = vmatprep.subr.mxu0 %v1325
    %1524 = vmatpush1.msra.mxu0 %v1324
    %1525 = vmatprep.subr.mxu0 %v1327
    %1526 = vmatpush1.msra.mxu0 %v1326
    %1527 = vmatprep.subr.mxu0 %v1329
    %1528 = vmatpush1.msra.mxu0 %v1328
    %1529 = vmatprep.subr.mxu0 %v1331
    %1530 = vmatpush1.msra.mxu0 %v1330
    %1531 = vmatprep.subr.mxu0 %v1333
    %1532 = vmatpush1.msra.mxu0 %v1332
    %1533 = vmatprep.subr.mxu0 %v1335
    %1534 = vmatpush1.msra.mxu0 %v1334
    %1535 = vmatprep.subr.mxu0 %v1337
    %1536 = vmatpush1.msra.mxu0 %v1336
    %1537 = vmatprep.subr.mxu0 %v1339
    %1538 = vmatpush1.msra.mxu0 %v1338
    %1539 = vmatprep.mubr.f32.mxu0 %v1270
    %1540 = vmatmul.mubr.f32.gmra.mrb[0].mxu0 %v1269
    %v1541 = vpop.f32.mrb[0].mxu0
    %v1542 = vadd.f32 0.0, %v1541
    %v1543 = vpop.f32.mrb[0].mxu0
    %v1544 = vadd.f32 0.0, %v1543
    %1545 = vdwg.mxu0
    %1546 = vmatprep.subr.mxu0 %v1341
    %1547 = vmatpush1.msra.mxu0 %v1340
    %1548 = vmatprep.subr.mxu0 %v1343
    %1549 = vmatpush1.msra.mxu0 %v1342
    %1550 = vmatprep.subr.mxu0 %v1345
    %1551 = vmatpush1.msra.mxu0 %v1344
    %1552 = vmatprep.subr.mxu0 %v1347
    %1553 = vmatpush1.msra.mxu0 %v1346
    %1554 = vmatprep.subr.mxu0 %v1349
    %1555 = vmatpush1.msra.mxu0 %v1348
    %1556 = vmatprep.subr.mxu0 %v1351
    %1557 = vmatpush1.msra.mxu0 %v1350
    %1558 = vmatprep.subr.mxu0 %v1353
    %1559 = vmatpush1.msra.mxu0 %v1352
    %1560 = vmatprep.subr.mxu0 %v1355
    %1561 = vmatpush1.msra.mxu0 %v1354
    %1562 = vmatprep.subr.mxu0 %v1357
    %1563 = vmatpush1.msra.mxu0 %v1356
    %1564 = vmatprep.subr.mxu0 %v1359
    %1565 = vmatpush1.msra.mxu0 %v1358
    %1566 = vmatprep.subr.mxu0 %v1361
    %1567 = vmatpush1.msra.mxu0 %v1360
    %1568 = vmatprep.subr.mxu0 %v1363
    %1569 = vmatpush1.msra.mxu0 %v1362
    %1570 = vmatprep.subr.mxu0 %v1365
    %1571 = vmatpush1.msra.mxu0 %v1364
    %1572 = vmatprep.subr.mxu0 %v1367
    %1573 = vmatpush1.msra.mxu0 %v1366
    %1574 = vmatprep.subr.mxu0 %v1369
    %1575 = vmatpush1.msra.mxu0 %v1368
    %1576 = vmatprep.subr.mxu0 %v1371
    %1577 = vmatpush1.msra.mxu0 %v1370
    %1578 = vmatprep.subr.mxu0 %v1373
    %1579 = vmatpush1.msra.mxu0 %v1372
    %1580 = vmatprep.subr.mxu0 %v1375
    %1581 = vmatpush1.msra.mxu0 %v1374
    %1582 = vmatprep.subr.mxu0 %v1377
    %1583 = vmatpush1.msra.mxu0 %v1376
    %1584 = vmatprep.subr.mxu0 %v1379
    %1585 = vmatpush1.msra.mxu0 %v1378
    %1586 = vmatprep.subr.mxu0 %v1381
    %1587 = vmatpush1.msra.mxu0 %v1380
    %1588 = vmatprep.subr.mxu0 %v1383
    %1589 = vmatpush1.msra.mxu0 %v1382
    %1590 = vmatprep.subr.mxu0 %v1385
    %1591 = vmatpush1.msra.mxu0 %v1384
    %1592 = vmatprep.subr.mxu0 %v1387
    %1593 = vmatpush1.msra.mxu0 %v1386
    %1594 = vmatprep.subr.mxu0 %v1389
    %1595 = vmatpush1.msra.mxu0 %v1388
    %1596 = vmatprep.subr.mxu0 %v1391
    %1597 = vmatpush1.msra.mxu0 %v1390
    %1598 = vmatprep.subr.mxu0 %v1393
    %1599 = vmatpush1.msra.mxu0 %v1392
    %1600 = vmatprep.subr.mxu0 %v1395
    %1601 = vmatpush1.msra.mxu0 %v1394
    %1602 = vmatprep.subr.mxu0 %v1397
    %1603 = vmatpush1.msra.mxu0 %v1396
    %1604 = vmatprep.subr.mxu0 %v1399
    %1605 = vmatpush1.msra.mxu0 %v1398
    %1606 = vmatprep.subr.mxu0 %v1401
    %1607 = vmatpush1.msra.mxu0 %v1400
    %1608 = vmatprep.subr.mxu0 %v1403
    %1609 = vmatpush1.msra.mxu0 %v1402
    %1610 = vmatprep.mubr.f32.mxu0 %v1272
    %1611 = vmatmul.mubr.f32.gmra.mrb[0].mxu0 %v1271
    %v1612 = vpop.f32.mrb[0].mxu0
    %v1613 = vadd.f32 %v1542, %v1612
    %v1614 = vpop.f32.mrb[0].mxu0
    %v1615 = vadd.f32 %v1544, %v1614
    %1616 = vdwg.mxu0
    %1617 = vmatprep.subr.mxu0 %v1405
    %1618 = vmatpush1.msra.mxu0 %v1404
    %1619 = vmatprep.subr.mxu0 %v1407
    %1620 = vmatpush1.msra.mxu0 %v1406
    %1621 = vmatprep.subr.mxu0 %v1409
    %1622 = vmatpush1.msra.mxu0 %v1408
    %1623 = vmatprep.subr.mxu0 %v1411
    %1624 = vmatpush1.msra.mxu0 %v1410
    %1625 = vmatprep.subr.mxu0 %v1413
    %1626 = vmatpush1.msra.mxu0 %v1412
    %1627 = vmatprep.subr.mxu0 %v1415
    %1628 = vmatpush1.msra.mxu0 %v1414
    %1629 = vmatprep.subr.mxu0 %v1417
    %1630 = vmatpush1.msra.mxu0 %v1416
    %1631 = vmatprep.subr.mxu0 %v1419
    %1632 = vmatpush1.msra.mxu0 %v1418
    %1633 = vmatprep.subr.mxu0 %v1421
    %1634 = vmatpush1.msra.mxu0 %v1420
    %1635 = vmatprep.subr.mxu0 %v1423
    %1636 = vmatpush1.msra.mxu0 %v1422
    %1637 = vmatprep.subr.mxu0 %v1425
    %1638 = vmatpush1.msra.mxu0 %v1424
    %1639 = vmatprep.subr.mxu0 %v1427
    %1640 = vmatpush1.msra.mxu0 %v1426
    %1641 = vmatprep.subr.mxu0 %v1429
    %1642 = vmatpush1.msra.mxu0 %v1428
    %1643 = vmatprep.subr.mxu0 %v1431
    %1644 = vmatpush1.msra.mxu0 %v1430
    %1645 = vmatprep.subr.mxu0 %v1433
    %1646 = vmatpush1.msra.mxu0 %v1432
    %1647 = vmatprep.subr.mxu0 %v1435
    %1648 = vmatpush1.msra.mxu0 %v1434
    %1649 = vmatprep.subr.mxu0 %v1437
    %1650 = vmatpush1.msra.mxu0 %v1436
    %1651 = vmatprep.subr.mxu0 %v1439
    %1652 = vmatpush1.msra.mxu0 %v1438
    %1653 = vmatprep.subr.mxu0 %v1441
    %1654 = vmatpush1.msra.mxu0 %v1440
    %1655 = vmatprep.subr.mxu0 %v1443
    %1656 = vmatpush1.msra.mxu0 %v1442
    %1657 = vmatprep.subr.mxu0 %v1445
    %1658 = vmatpush1.msra.mxu0 %v1444
    %1659 = vmatprep.subr.mxu0 %v1447
    %1660 = vmatpush1.msra.mxu0 %v1446
    %1661 = vmatprep.subr.mxu0 %v1449
    %1662 = vmatpush1.msra.mxu0 %v1448
    %1663 = vmatprep.subr.mxu0 %v1451
    %1664 = vmatpush1.msra.mxu0 %v1450
    %1665 = vmatprep.subr.mxu0 %v1453
    %1666 = vmatpush1.msra.mxu0 %v1452
    %1667 = vmatprep.subr.mxu0 %v1455
    %1668 = vmatpush1.msra.mxu0 %v1454
    %1669 = vmatprep.subr.mxu0 %v1457
    %1670 = vmatpush1.msra.mxu0 %v1456
    %1671 = vmatprep.subr.mxu0 %v1459
    %1672 = vmatpush1.msra.mxu0 %v1458
    %1673 = vmatprep.subr.mxu0 %v1461
    %1674 = vmatpush1.msra.mxu0 %v1460
    %1675 = vmatprep.subr.mxu0 %v1463
    %1676 = vmatpush1.msra.mxu0 %v1462
    %1677 = vmatprep.subr.mxu0 %v1465
    %1678 = vmatpush1.msra.mxu0 %v1464
    %1679 = vmatprep.subr.mxu0 %v1467
    %1680 = vmatpush1.msra.mxu0 %v1466
    %1681 = vmatprep.mubr.f32.mxu0 %v1274
    %1682 = vmatmul.mubr.f32.gmra.mrb[0].mxu0 %v1273
    %v1683 = vpop.f32.mrb[0].mxu0
    %v1684 = vadd.f32 %v1613, %v1683
    %v1685 = vpop.f32.mrb[0].mxu0
    %v1686 = vadd.f32 %v1615, %v1685
    %1687 = vdwg.mxu0
    %1688 = vmatprep.subr.mxu0 %v1469
    %1689 = vmatpush1.msra.mxu0 %v1468
    %1690 = vmatprep.subr.mxu0 %v1471
    %1691 = vmatpush1.msra.mxu0 %v1470
    %1692 = vmatprep.subr.mxu0 0.0
    %1693 = vmatpush1.msra.mxu0 0.0
    %1694 = vmatprep.subr.mxu0 0.0
    %1695 = vmatpush1.msra.mxu0 0.0
    %1696 = vmatprep.subr.mxu0 0.0
    %1697 = vmatpush1.msra.mxu0 0.0
    %1698 = vmatprep.subr.mxu0 0.0
    %1699 = vmatpush1.msra.mxu0 0.0
    %1700 = vmatprep.subr.mxu0 0.0
    %1701 = vmatpush1.msra.mxu0 0.0
    %1702 = vmatprep.subr.mxu0 0.0
    %1703 = vmatpush1.msra.mxu0 0.0
    %1704 = vmatprep.subr.mxu0 0.0
    %1705 = vmatpush1.msra.mxu0 0.0
    %1706 = vmatprep.subr.mxu0 0.0
    %1707 = vmatpush1.msra.mxu0 0.0
    %1708 = vmatprep.subr.mxu0 0.0
    %1709 = vmatpush1.msra.mxu0 0.0
    %1710 = vmatprep.subr.mxu0 0.0
    %1711 = vmatpush1.msra.mxu0 0.0
    %1712 = vmatprep.subr.mxu0 0.0
    %1713 = vmatpush1.msra.mxu0 0.0
    %1714 = vmatprep.subr.mxu0 0.0
    %1715 = vmatpush1.msra.mxu0 0.0
    %1716 = vmatprep.subr.mxu0 0.0
    %1717 = vmatpush1.msra.mxu0 0.0
    %1718 = vmatprep.subr.mxu0 0.0
    %1719 = vmatpush1.msra.mxu0 0.0
    %1720 = vmatprep.subr.mxu0 0.0
    %1721 = vmatpush1.msra.mxu0 0.0
    %1722 = vmatprep.subr.mxu0 0.0
    %1723 = vmatpush1.msra.mxu0 0.0
    %1724 = vmatprep.subr.mxu0 0.0
    %1725 = vmatpush1.msra.mxu0 0.0
    %1726 = vmatprep.subr.mxu0 0.0
    %1727 = vmatpush1.msra.mxu0 0.0
    %1728 = vmatprep.subr.mxu0 0.0
    %1729 = vmatpush1.msra.mxu0 0.0
    %1730 = vmatprep.subr.mxu0 0.0
    %1731 = vmatpush1.msra.mxu0 0.0
    %1732 = vmatprep.subr.mxu0 0.0
    %1733 = vmatpush1.msra.mxu0 0.0
    %1734 = vmatprep.subr.mxu0 0.0
    %1735 = vmatpush1.msra.mxu0 0.0
    %1736 = vmatprep.subr.mxu0 0.0
    %1737 = vmatpush1.msra.mxu0 0.0
    %1738 = vmatprep.subr.mxu0 0.0
    %1739 = vmatpush1.msra.mxu0 0.0
    %1740 = vmatprep.subr.mxu0 0.0
    %1741 = vmatpush1.msra.mxu0 0.0
    %1742 = vmatprep.subr.mxu0 0.0
    %1743 = vmatpush1.msra.mxu0 0.0
    %1744 = vmatprep.subr.mxu0 0.0
    %1745 = vmatpush1.msra.mxu0 0.0
    %1746 = vmatprep.subr.mxu0 0.0
    %1747 = vmatpush1.msra.mxu0 0.0
    %1748 = vmatprep.subr.mxu0 0.0
    %1749 = vmatpush1.msra.mxu0 0.0
    %1750 = vmatprep.subr.mxu0 0.0
    %1751 = vmatpush1.msra.mxu0 0.0
    %1752 = vmatprep.mubr.f32.mxu0 0.0
    %1753 = vmatmul.mubr.f32.gmra.mrb[0].mxu0 %v1473
    %v1754 = vpop.f32.mrb[0].mxu0
    %v1755 = vadd.f32 %v1684, %v1754
    %v1756 = vpop.f32.mrb[0].mxu0
    %v1757 = vadd.f32 %v1686, %v1756
    %1758 = vdwg.mxu0
    %1759 = vst [vmem:[#allocation4] sm:$0xff] %v1755
    %1760 = vst.msk [vmem:[#allocation4 + $0x8] sm:$0xff] %vm486, %v1757
    %v1761 = vld [vmem:[#allocation3 + $0x30] sm:$0xff]
    %v1762 = vld [vmem:[#allocation3 + $0x38] sm:$0xff]
    %v1763 = vld [vmem:[#allocation3 + $0x40] sm:$0xff]
    %v1764 = vld [vmem:[#allocation3 + $0x48] sm:$0xff]
    %v1765 = vld [vmem:[#allocation3 + $0x50] sm:$0xff]
    %v1766 = vld [vmem:[#allocation3 + $0x58] sm:$0xff]
    %v1767 = vld [vmem:[#allocation3 + $0x60] sm:$0xff]
    %1775 = vrot.lane.b32.xlu0 %v1761, 127
    %v1776 = vpop.permute.xlu0 %1775
    %1777 = vrot.lane.b32.xlu0 %v1762, 127
    %v1778 = vpop.permute.xlu0 %1777
    %1779 = vrot.lane.b32.xlu0 %v1763, 127
    %v1780 = vpop.permute.xlu0 %1779
    %1781 = vrot.lane.b32.xlu0 %v1764, 127
    %v1782 = vpop.permute.xlu0 %1781
    %1783 = vrot.lane.b32.xlu0 %v1765, 127
    %v1784 = vpop.permute.xlu0 %1783
    %1785 = vrot.lane.b32.xlu0 %v1766, 127
    %v1786 = vpop.permute.xlu0 %1785
    %1787 = vrot.lane.b32.xlu0 %v1767, 127
    %v1788 = vpop.permute.xlu0 %1787
    %v1789 = vsel %vm68, %v1776, %v1778
    %v1790 = vsel %vm68, %v1778, %v1780
    %v1791 = vsel %vm68, %v1780, %v1782
    %v1792 = vsel %vm68, %v1782, %v1784
    %v1793 = vsel %vm68, %v1784, %v1786
    %v1794 = vsel %vm68, %v1786, %v1788
    %v1802 = vmax.f32 %v1761, %v1789
    %v1803 = vmax.f32 %v1762, %v1790
    %v1804 = vmax.f32 %v1763, %v1791
    %v1805 = vmax.f32 %v1764, %v1792
    %v1806 = vmax.f32 %v1765, %v1793
    %v1807 = vmax.f32 %v1766, %v1794
    %v1808 = vmax.f32 %v1767, %v1788
    %1816 = vrot.lane.b32.xlu0 %v1802, 100
    %v1817 = vpop.permute.xlu0 %1816
    %1818 = vrot.lane.b32.xlu0 %v1803, 100
    %v1819 = vpop.permute.xlu0 %1818
    %1820 = vrot.lane.b32.xlu0 %v1804, 100
    %v1821 = vpop.permute.xlu0 %1820
    %1822 = vrot.lane.b32.xlu0 %v1805, 100
    %v1823 = vpop.permute.xlu0 %1822
    %1824 = vrot.lane.b32.xlu0 %v1806, 100
    %v1825 = vpop.permute.xlu0 %1824
    %1826 = vrot.lane.b32.xlu0 %v1807, 100
    %v1827 = vpop.permute.xlu0 %1826
    %1828 = vrot.lane.b32.xlu0 %v1808, 100
    %v1829 = vpop.permute.xlu0 %1828
    %v1830 = vsel %vm156, %v1817, %v1819
    %v1831 = vsel %vm156, %v1819, %v1821
    %v1832 = vsel %vm156, %v1821, %v1823
    %v1833 = vsel %vm156, %v1823, %v1825
    %v1834 = vsel %vm156, %v1825, %v1827
    %v1835 = vsel %vm156, %v1827, %v1829
    %v1843 = vmax.f32 %v1802, %v1830
    %v1844 = vmax.f32 %v1803, %v1831
    %v1845 = vmax.f32 %v1804, %v1832
    %v1846 = vmax.f32 %v1805, %v1833
    %v1847 = vmax.f32 %v1806, %v1834
    %v1848 = vmax.f32 %v1807, %v1835
    %v1849 = vmax.f32 %v1808, %v1829
    %v1850 = vld [vmem:[%s3] sm:$0xff]
    %v1851 = vld [vmem:[%s3 + $0x8] sm:$0xff]
    %v1852 = vld [vmem:[%s3 + $0x10] sm:$0xff]
    %v1853 = vld [vmem:[%s3 + $0x18] sm:$0xff]
    %v1854 = vld [vmem:[%s3 + $0x20] sm:$0xff]
    %v1855 = vld [vmem:[%s3 + $0x28] sm:$0xff]
    %v1856 = vld [vmem:[%s3 + $0x30] sm:$0xff]
    %v1857 = vld [vmem:[%s3 + $0x38] sm:$0xff]
    %v1858 = vld [vmem:[%s3 + $0x40] sm:$0xff]
    %v1859 = vld [vmem:[%s3 + $0x48] sm:$0xff]
    %v1860 = vld [vmem:[%s3 + $0x50] sm:$0xff]
    %v1861 = vld [vmem:[%s3 + $0x58] sm:$0xff]
    %v1862 = vld [vmem:[%s3 + $0x60] sm:$0xff]
    %v1863 = vld [vmem:[%s3 + $0x68] sm:$0xff]
    %v1864 = vld [vmem:[%s3 + $0x70] sm:$0xff]
    %v1865 = vld [vmem:[%s3 + $0x78] sm:$0xff]
    %v1866 = vld [vmem:[%s3 + $0x80] sm:$0xff]
    %v1867 = vld [vmem:[%s3 + $0x88] sm:$0xff]
    %v1868 = vld [vmem:[%s3 + $0x90] sm:$0xff]
    %v1869 = vld [vmem:[%s3 + $0x98] sm:$0xff]
    %v1870 = vld [vmem:[%s3 + $0xa0] sm:$0xff]
    %v1871 = vld [vmem:[%s3 + $0xa8] sm:$0xff]
    %v1872 = vld [vmem:[%s3 + $0xb0] sm:$0xff]
    %v1873 = vld [vmem:[%s3 + $0xb8] sm:$0xff]
    %v1874 = vld [vmem:[%s3 + $0xc0] sm:$0xff]
    %v1875 = vld [vmem:[%s3 + $0xc8] sm:$0xff]
    %v1876 = vld [vmem:[%s3 + $0xd0] sm:$0xff]
    %v1877 = vld [vmem:[%s3 + $0xd8] sm:$0xff]
    %v1878 = vld [vmem:[%s3 + $0xe0] sm:$0xff]
    %v1879 = vld [vmem:[%s3 + $0xe8] sm:$0xff]
    %v1880 = vld [vmem:[%s3 + $0xf0] sm:$0xff]
    %v1881 = vld [vmem:[%s3 + $0xf8] sm:$0xff]
    %v1882 = vld [vmem:[%s3 + $0x100] sm:$0xff]
    %v1883 = vld [vmem:[%s3 + $0x108] sm:$0xff]
    %v1884 = vld [vmem:[%s3 + $0x110] sm:$0xff]
    %v1885 = vld [vmem:[%s3 + $0x118] sm:$0xff]
    %v1886 = vld [vmem:[%s3 + $0x120] sm:$0xff]
    %v1887 = vld [vmem:[%s3 + $0x128] sm:$0xff]
    %v1888 = vld [vmem:[%s3 + $0x130] sm:$0xff]
    %v1889 = vld [vmem:[%s3 + $0x138] sm:$0xff]
    %v1890 = vld [vmem:[%s3 + $0x140] sm:$0xff]
    %v1891 = vld [vmem:[%s3 + $0x148] sm:$0xff]
    %v1892 = vld [vmem:[%s3 + $0x150] sm:$0xff]
    %v1893 = vld [vmem:[%s3 + $0x158] sm:$0xff]
    %v1894 = vld [vmem:[%s3 + $0x160] sm:$0xff]
    %v1895 = vld [vmem:[%s3 + $0x168] sm:$0xff]
    %v1896 = vld [vmem:[%s3 + $0x170] sm:$0xff]
    %v1897 = vld [vmem:[%s3 + $0x178] sm:$0xff]
    %v1898 = vld [vmem:[%s3 + $0x180] sm:$0xff]
    %v1899 = vld [vmem:[%s3 + $0x188] sm:$0xff]
    %v1900 = vld [vmem:[%s3 + $0x190] sm:$0xff]
    %v1901 = vld [vmem:[%s3 + $0x198] sm:$0xff]
    %v1902 = vld [vmem:[%s3 + $0x1a0] sm:$0xff]
    %v1903 = vld [vmem:[%s3 + $0x1a8] sm:$0xff]
    %v1904 = vld [vmem:[%s3 + $0x1b0] sm:$0xff]
    %v1905 = vld [vmem:[%s3 + $0x1b8] sm:$0xff]
    %v1906 = vld [vmem:[%s3 + $0x1c0] sm:$0xff]
    %v1907 = vld [vmem:[%s3 + $0x1c8] sm:$0xff]
    %v1908 = vld [vmem:[%s3 + $0x1d0] sm:$0xff]
    %v1909 = vld [vmem:[%s3 + $0x1d8] sm:$0xff]
    %v1910 = vld [vmem:[%s3 + $0x1e0] sm:$0xff]
    %v1911 = vld [vmem:[%s3 + $0x1e8] sm:$0xff]
    %v1912 = vld [vmem:[%s3 + $0x1f0] sm:$0xff]
    %v1913 = vld [vmem:[%s3 + $0x1f8] sm:$0xff]
    %v1914 = vld [vmem:[%s3 + $0x200] sm:$0xff]
    %v1915 = vld [vmem:[%s3 + $0x208] sm:$0xff]
    %v1916 = vld [vmem:[%s3 + $0x210] sm:$0xff]
    %v1917 = vld [vmem:[%s3 + $0x218] sm:$0xff]
    %v1918 = vld [vmem:[%s3 + $0x220] sm:$0xff]
    %v1919 = vld [vmem:[%s3 + $0x228] sm:$0xff]
    %v1920 = vld [vmem:[%s3 + $0x230] sm:$0xff]
    %v1921 = vld [vmem:[%s3 + $0x238] sm:$0xff]
    %v1922 = vld [vmem:[%s3 + $0x240] sm:$0xff]
    %v1923 = vld [vmem:[%s3 + $0x248] sm:$0xff]
    %v1924 = vld [vmem:[%s3 + $0x250] sm:$0xff]
    %v1925 = vld [vmem:[%s3 + $0x258] sm:$0xff]
    %v1926 = vld [vmem:[%s3 + $0x260] sm:$0xff]
    %v1927 = vld [vmem:[%s3 + $0x268] sm:$0xff]
    %v1928 = vld [vmem:[%s3 + $0x270] sm:$0xff]
    %v1929 = vld [vmem:[%s3 + $0x278] sm:$0xff]
    %v1930 = vld [vmem:[%s3 + $0x280] sm:$0xff]
    %v1931 = vld [vmem:[%s3 + $0x288] sm:$0xff]
    %v1932 = vld [vmem:[%s3 + $0x290] sm:$0xff]
    %v1933 = vld [vmem:[%s3 + $0x298] sm:$0xff]
    %v1934 = vld [vmem:[%s3 + $0x2a0] sm:$0xff]
    %v1935 = vld [vmem:[%s3 + $0x2a8] sm:$0xff]
    %v1936 = vld [vmem:[%s3 + $0x2b0] sm:$0xff]
    %v1937 = vld [vmem:[%s3 + $0x2b8] sm:$0xff]
    %v1938 = vld [vmem:[%s3 + $0x2c0] sm:$0xff]
    %v1939 = vld [vmem:[%s3 + $0x2c8] sm:$0xff]
    %v1940 = vld [vmem:[%s3 + $0x2d0] sm:$0xff]
    %v1941 = vld [vmem:[%s3 + $0x2d8] sm:$0xff]
    %v1942 = vld [vmem:[%s3 + $0x2e0] sm:$0xff]
    %v1943 = vld [vmem:[%s3 + $0x2e8] sm:$0xff]
    %v1944 = vld [vmem:[%s3 + $0x2f0] sm:$0xff]
    %v1945 = vld [vmem:[%s3 + $0x2f8] sm:$0xff]
    %v1946 = vld [vmem:[%s3 + $0x300] sm:$0xff]
    %v1947 = vld [vmem:[%s3 + $0x308] sm:$0xff]
    %v1948 = vld [vmem:[%s3 + $0x310] sm:$0xff]
    %v1949 = vld [vmem:[%s3 + $0x318] sm:$0xff]
    %v1950 = vld [vmem:[%s3 + $0x320] sm:$0xff]
    %v1951 = vld [vmem:[%s3 + $0x328] sm:$0xff]
    %v1952 = vld [vmem:[%s3 + $0x330] sm:$0xff]
    %v1953 = vld [vmem:[%s3 + $0x338] sm:$0xff]
    %v1954 = vld [vmem:[%s3 + $0x340] sm:$0xff]
    %v1955 = vld [vmem:[%s3 + $0x348] sm:$0xff]
    %v1956 = vld [vmem:[%s3 + $0x350] sm:$0xff]
    %v1957 = vld [vmem:[%s3 + $0x358] sm:$0xff]
    %v1958 = vld [vmem:[%s3 + $0x360] sm:$0xff]
    %v1959 = vld [vmem:[%s3 + $0x368] sm:$0xff]
    %v1960 = vld [vmem:[%s3 + $0x370] sm:$0xff]
    %v1961 = vld [vmem:[%s3 + $0x378] sm:$0xff]
    %v1962 = vld [vmem:[%s3 + $0x380] sm:$0xff]
    %v1963 = vld [vmem:[%s3 + $0x388] sm:$0xff]
    %v1964 = vld [vmem:[%s3 + $0x390] sm:$0xff]
    %v1965 = vld [vmem:[%s3 + $0x398] sm:$0xff]
    %v1966 = vld [vmem:[%s3 + $0x3a0] sm:$0xff]
    %v1967 = vld [vmem:[%s3 + $0x3a8] sm:$0xff]
    %v1968 = vld [vmem:[%s3 + $0x3b0] sm:$0xff]
    %v1969 = vld [vmem:[%s3 + $0x3b8] sm:$0xff]
    %v1970 = vld [vmem:[%s3 + $0x3c0] sm:$0xff]
    %v1971 = vld [vmem:[%s3 + $0x3c8] sm:$0xff]
    %v1972 = vld [vmem:[%s3 + $0x3d0] sm:$0xff]
    %v1973 = vld [vmem:[%s3 + $0x3d8] sm:$0xff]
    %v1974 = vld [vmem:[%s3 + $0x3e0] sm:$0xff]
    %v1975 = vld [vmem:[%s3 + $0x3e8] sm:$0xff]
    %v1976 = vld [vmem:[%s3 + $0x3f0] sm:$0xff]
    %v1977 = vld [vmem:[%s3 + $0x3f8] sm:$0xff]
    %v1978 = vld [vmem:[%s3 + $0x400] sm:$0xff]
    %v1979 = vld [vmem:[%s3 + $0x408] sm:$0xff]
    %v1980 = vld [vmem:[%s3 + $0x410] sm:$0xff]
    %v1981 = vld [vmem:[%s3 + $0x418] sm:$0xff]
    %v1982 = vld [vmem:[%s3 + $0x420] sm:$0xff]
    %v1983 = vld [vmem:[%s3 + $0x428] sm:$0xff]
    %v1984 = vld [vmem:[%s3 + $0x430] sm:$0xff]
    %v1985 = vld [vmem:[%s3 + $0x438] sm:$0xff]
    %v1986 = vld [vmem:[%s3 + $0x440] sm:$0xff]
    %v1987 = vld [vmem:[%s3 + $0x448] sm:$0xff]
    %v1988 = vld [vmem:[%s3 + $0x450] sm:$0xff]
    %v1989 = vld [vmem:[%s3 + $0x458] sm:$0xff]
    %v1990 = vld [vmem:[%s3 + $0x460] sm:$0xff]
    %v1991 = vld [vmem:[%s3 + $0x468] sm:$0xff]
    %v1992 = vld [vmem:[%s3 + $0x470] sm:$0xff]
    %v1993 = vld [vmem:[%s3 + $0x478] sm:$0xff]
    %v1994 = vld [vmem:[%s3 + $0x480] sm:$0xff]
    %v1995 = vld [vmem:[%s3 + $0x488] sm:$0xff]
    %v1996 = vld [vmem:[%s3 + $0x490] sm:$0xff]
    %v1997 = vld [vmem:[%s3 + $0x498] sm:$0xff]
    %v1998 = vld [vmem:[%s3 + $0x4a0] sm:$0xff]
    %v1999 = vld [vmem:[%s3 + $0x4a8] sm:$0xff]
    %v2000 = vld [vmem:[%s3 + $0x4b0] sm:$0xff]
    %v2001 = vld [vmem:[%s3 + $0x4b8] sm:$0xff]
    %v2002 = vld [vmem:[%s3 + $0x4c0] sm:$0xff]
    %v2003 = vld [vmem:[%s3 + $0x4c8] sm:$0xff]
    %v2004 = vld [vmem:[%s3 + $0x4d0] sm:$0xff]
    %v2005 = vld [vmem:[%s3 + $0x4d8] sm:$0xff]
    %v2006 = vld [vmem:[%s3 + $0x4e0] sm:$0xff]
    %v2007 = vld [vmem:[%s3 + $0x4e8] sm:$0xff]
    %v2008 = vld [vmem:[%s3 + $0x4f0] sm:$0xff]
    %v2009 = vld [vmem:[%s3 + $0x4f8] sm:$0xff]
    %v2010 = vld [vmem:[%s3 + $0x500] sm:$0xff]
    %v2011 = vld [vmem:[%s3 + $0x508] sm:$0xff]
    %v2012 = vld [vmem:[%s3 + $0x510] sm:$0xff]
    %v2013 = vld [vmem:[%s3 + $0x518] sm:$0xff]
    %v2014 = vld [vmem:[%s3 + $0x520] sm:$0xff]
    %v2015 = vld [vmem:[%s3 + $0x528] sm:$0xff]
    %v2016 = vld [vmem:[%s3 + $0x530] sm:$0xff]
    %v2017 = vld [vmem:[%s3 + $0x538] sm:$0xff]
    %v2018 = vld [vmem:[%s3 + $0x540] sm:$0xff]
    %v2019 = vld [vmem:[%s3 + $0x548] sm:$0xff]
    %v2020 = vld [vmem:[%s3 + $0x550] sm:$0xff]
    %v2021 = vld [vmem:[%s3 + $0x558] sm:$0xff]
    %v2022 = vld [vmem:[%s3 + $0x560] sm:$0xff]
    %v2023 = vld [vmem:[%s3 + $0x568] sm:$0xff]
    %v2024 = vld [vmem:[%s3 + $0x570] sm:$0xff]
    %v2025 = vld [vmem:[%s3 + $0x578] sm:$0xff]
    %v2026 = vld [vmem:[%s3 + $0x580] sm:$0xff]
    %v2027 = vld [vmem:[%s3 + $0x588] sm:$0xff]
    %v2028 = vld [vmem:[%s3 + $0x590] sm:$0xff]
    %v2029 = vld [vmem:[%s3 + $0x598] sm:$0xff]
    %v2030 = vld [vmem:[%s3 + $0x5a0] sm:$0xff]
    %v2031 = vld [vmem:[%s3 + $0x5a8] sm:$0xff]
    %v2032 = vld [vmem:[%s3 + $0x5b0] sm:$0xff]
    %v2033 = vld [vmem:[%s3 + $0x5b8] sm:$0xff]
    %v2034 = vld [vmem:[%s3 + $0x5c0] sm:$0xff]
    %v2035 = vld [vmem:[%s3 + $0x5c8] sm:$0xff]
    %v2036 = vld [vmem:[%s3 + $0x5d0] sm:$0xff]
    %v2037 = vld [vmem:[%s3 + $0x5d8] sm:$0xff]
    %v2038 = vld [vmem:[%s3 + $0x5e0] sm:$0xff]
    %v2039 = vld [vmem:[%s3 + $0x5e8] sm:$0xff]
    %v2040 = vld [vmem:[%s3 + $0x5f0] sm:$0xff]
    %v2041 = vld [vmem:[%s3 + $0x5f8] sm:$0xff]
    %v2042 = vld [vmem:[%s3 + $0x600] sm:$0xff]
    %v2043 = vld [vmem:[%s3 + $0x608] sm:$0xff]
    %v2044 = vld [vmem:[%s3 + $0x610] sm:$0xff]
    %v2045 = vld [vmem:[%s3 + $0x618] sm:$0xff]
    %2053 = vrot.lane.b32.xlu0 %v1843, 112
    %v2054 = vpop.permute.xlu0 %2053
    %2055 = vrot.lane.b32.xlu0 %v1844, 112
    %v2056 = vpop.permute.xlu0 %2055
    %2057 = vrot.lane.b32.xlu0 %v1845, 112
    %v2058 = vpop.permute.xlu0 %2057
    %2059 = vrot.lane.b32.xlu0 %v1846, 112
    %v2060 = vpop.permute.xlu0 %2059
    %2061 = vrot.lane.b32.xlu0 %v1847, 112
    %v2062 = vpop.permute.xlu0 %2061
    %2063 = vrot.lane.b32.xlu0 %v1848, 112
    %v2064 = vpop.permute.xlu0 %2063
    %2065 = vrot.lane.b32.xlu0 %v1849, 112
    %v2066 = vpop.permute.xlu0 %2065
    %vm2067 = vcmask 916480
    %v2068 = vsel %vm2067, %v2054, %v2056
    %v2069 = vsel %vm2067, %v2056, %v2058
    %v2070 = vsel %vm2067, %v2058, %v2060
    %v2071 = vsel %vm2067, %v2060, %v2062
    %v2072 = vsel %vm2067, %v2062, %v2064
    %v2073 = vsel %vm2067, %v2064, %v2066
    %v2080 = vsel %vm486, %v2066, 0
    %2082 = vmatprep.subr.mxu0 %v1851
    %2083 = vmatpush1.msra.mxu0 %v1850
    %2084 = vmatprep.subr.mxu0 %v1853
    %2085 = vmatpush1.msra.mxu0 %v1852
    %2086 = vmatprep.subr.mxu0 %v1855
    %2087 = vmatpush1.msra.mxu0 %v1854
    %2088 = vmatprep.subr.mxu0 %v1857
    %2089 = vmatpush1.msra.mxu0 %v1856
    %2090 = vmatprep.subr.mxu0 %v1859
    %2091 = vmatpush1.msra.mxu0 %v1858
    %2092 = vmatprep.subr.mxu0 %v1861
    %2093 = vmatpush1.msra.mxu0 %v1860
    %2094 = vmatprep.subr.mxu0 %v1863
    %2095 = vmatpush1.msra.mxu0 %v1862
    %2096 = vmatprep.subr.mxu0 %v1865
    %2097 = vmatpush1.msra.mxu0 %v1864
    %2098 = vmatprep.subr.mxu0 %v1867
    %2099 = vmatpush1.msra.mxu0 %v1866
    %2100 = vmatprep.subr.mxu0 %v1869
    %2101 = vmatpush1.msra.mxu0 %v1868
    %2102 = vmatprep.subr.mxu0 %v1871
    %2103 = vmatpush1.msra.mxu0 %v1870
    %2104 = vmatprep.subr.mxu0 %v1873
    %2105 = vmatpush1.msra.mxu0 %v1872
    %2106 = vmatprep.subr.mxu0 %v1875
    %2107 = vmatpush1.msra.mxu0 %v1874
    %2108 = vmatprep.subr.mxu0 %v1877
    %2109 = vmatpush1.msra.mxu0 %v1876
    %2110 = vmatprep.subr.mxu0 %v1879
    %2111 = vmatpush1.msra.mxu0 %v1878
    %2112 = vmatprep.subr.mxu0 %v1881
    %2113 = vmatpush1.msra.mxu0 %v1880
    %2114 = vmatprep.subr.mxu0 %v1883
    %2115 = vmatpush1.msra.mxu0 %v1882
    %2116 = vmatprep.subr.mxu0 %v1885
    %2117 = vmatpush1.msra.mxu0 %v1884
    %2118 = vmatprep.subr.mxu0 %v1887
    %2119 = vmatpush1.msra.mxu0 %v1886
    %2120 = vmatprep.subr.mxu0 %v1889
    %2121 = vmatpush1.msra.mxu0 %v1888
    %2122 = vmatprep.subr.mxu0 %v1891
    %2123 = vmatpush1.msra.mxu0 %v1890
    %2124 = vmatprep.subr.mxu0 %v1893
    %2125 = vmatpush1.msra.mxu0 %v1892
    %2126 = vmatprep.subr.mxu0 %v1895
    %2127 = vmatpush1.msra.mxu0 %v1894
    %2128 = vmatprep.subr.mxu0 %v1897
    %2129 = vmatpush1.msra.mxu0 %v1896
    %2130 = vmatprep.subr.mxu0 %v1899
    %2131 = vmatpush1.msra.mxu0 %v1898
    %2132 = vmatprep.subr.mxu0 %v1901
    %2133 = vmatpush1.msra.mxu0 %v1900
    %2134 = vmatprep.subr.mxu0 %v1903
    %2135 = vmatpush1.msra.mxu0 %v1902
    %2136 = vmatprep.subr.mxu0 %v1905
    %2137 = vmatpush1.msra.mxu0 %v1904
    %2138 = vmatprep.subr.mxu0 %v1907
    %2139 = vmatpush1.msra.mxu0 %v1906
    %2140 = vmatprep.subr.mxu0 %v1909
    %2141 = vmatpush1.msra.mxu0 %v1908
    %2142 = vmatprep.subr.mxu0 %v1911
    %2143 = vmatpush1.msra.mxu0 %v1910
    %2144 = vmatprep.subr.mxu0 %v1913
    %2145 = vmatpush1.msra.mxu0 %v1912
    %2146 = vmatprep.mubr.f32.mxu0 %v2069
    %2147 = vmatmul.mubr.f32.gmra.mrb[0].mxu0 %v2068
    %v2148 = vpop.f32.mrb[0].mxu0
    %v2149 = vadd.f32 0.0, %v2148
    %v2150 = vpop.f32.mrb[0].mxu0
    %v2151 = vadd.f32 0.0, %v2150
    %2152 = vdwg.mxu0
    %2153 = vmatprep.subr.mxu0 %v1915
    %2154 = vmatpush1.msra.mxu0 %v1914
    %2155 = vmatprep.subr.mxu0 %v1917
    %2156 = vmatpush1.msra.mxu0 %v1916
    %2157 = vmatprep.subr.mxu0 %v1919
    %2158 = vmatpush1.msra.mxu0 %v1918
    %2159 = vmatprep.subr.mxu0 %v1921
    %2160 = vmatpush1.msra.mxu0 %v1920
    %2161 = vmatprep.subr.mxu0 %v1923
    %2162 = vmatpush1.msra.mxu0 %v1922
    %2163 = vmatprep.subr.mxu0 %v1925
    %2164 = vmatpush1.msra.mxu0 %v1924
    %2165 = vmatprep.subr.mxu0 %v1927
    %2166 = vmatpush1.msra.mxu0 %v1926
    %2167 = vmatprep.subr.mxu0 %v1929
    %2168 = vmatpush1.msra.mxu0 %v1928
    %2169 = vmatprep.subr.mxu0 %v1931
    %2170 = vmatpush1.msra.mxu0 %v1930
    %2171 = vmatprep.subr.mxu0 %v1933
    %2172 = vmatpush1.msra.mxu0 %v1932
    %2173 = vmatprep.subr.mxu0 %v1935
    %2174 = vmatpush1.msra.mxu0 %v1934
    %2175 = vmatprep.subr.mxu0 %v1937
    %2176 = vmatpush1.msra.mxu0 %v1936
    %2177 = vmatprep.subr.mxu0 %v1939
    %2178 = vmatpush1.msra.mxu0 %v1938
    %2179 = vmatprep.subr.mxu0 %v1941
    %2180 = vmatpush1.msra.mxu0 %v1940
    %2181 = vmatprep.subr.mxu0 %v1943
    %2182 = vmatpush1.msra.mxu0 %v1942
    %2183 = vmatprep.subr.mxu0 %v1945
    %2184 = vmatpush1.msra.mxu0 %v1944
    %2185 = vmatprep.subr.mxu0 %v1947
    %2186 = vmatpush1.msra.mxu0 %v1946
    %2187 = vmatprep.subr.mxu0 %v1949
    %2188 = vmatpush1.msra.mxu0 %v1948
    %2189 = vmatprep.subr.mxu0 %v1951
    %2190 = vmatpush1.msra.mxu0 %v1950
    %2191 = vmatprep.subr.mxu0 %v1953
    %2192 = vmatpush1.msra.mxu0 %v1952
    %2193 = vmatprep.subr.mxu0 %v1955
    %2194 = vmatpush1.msra.mxu0 %v1954
    %2195 = vmatprep.subr.mxu0 %v1957
    %2196 = vmatpush1.msra.mxu0 %v1956
    %2197 = vmatprep.subr.mxu0 %v1959
    %2198 = vmatpush1.msra.mxu0 %v1958
    %2199 = vmatprep.subr.mxu0 %v1961
    %2200 = vmatpush1.msra.mxu0 %v1960
    %2201 = vmatprep.subr.mxu0 %v1963
    %2202 = vmatpush1.msra.mxu0 %v1962
    %2203 = vmatprep.subr.mxu0 %v1965
    %2204 = vmatpush1.msra.mxu0 %v1964
    %2205 = vmatprep.subr.mxu0 %v1967
    %2206 = vmatpush1.msra.mxu0 %v1966
    %2207 = vmatprep.subr.mxu0 %v1969
    %2208 = vmatpush1.msra.mxu0 %v1968
    %2209 = vmatprep.subr.mxu0 %v1971
    %2210 = vmatpush1.msra.mxu0 %v1970
    %2211 = vmatprep.subr.mxu0 %v1973
    %2212 = vmatpush1.msra.mxu0 %v1972
    %2213 = vmatprep.subr.mxu0 %v1975
    %2214 = vmatpush1.msra.mxu0 %v1974
    %2215 = vmatprep.subr.mxu0 %v1977
    %2216 = vmatpush1.msra.mxu0 %v1976
    %2217 = vmatprep.mubr.f32.mxu0 %v2071
    %2218 = vmatmul.mubr.f32.gmra.mrb[0].mxu0 %v2070
    %v2219 = vpop.f32.mrb[0].mxu0
    %v2220 = vadd.f32 %v2149, %v2219
    %v2221 = vpop.f32.mrb[0].mxu0
    %v2222 = vadd.f32 %v2151, %v2221
    %2223 = vdwg.mxu0
    %2224 = vmatprep.subr.mxu0 %v1979
    %2225 = vmatpush1.msra.mxu0 %v1978
    %2226 = vmatprep.subr.mxu0 %v1981
    %2227 = vmatpush1.msra.mxu0 %v1980
    %2228 = vmatprep.subr.mxu0 %v1983
    %2229 = vmatpush1.msra.mxu0 %v1982
    %2230 = vmatprep.subr.mxu0 %v1985
    %2231 = vmatpush1.msra.mxu0 %v1984
    %2232 = vmatprep.subr.mxu0 %v1987
    %2233 = vmatpush1.msra.mxu0 %v1986
    %2234 = vmatprep.subr.mxu0 %v1989
    %2235 = vmatpush1.msra.mxu0 %v1988
    %2236 = vmatprep.subr.mxu0 %v1991
    %2237 = vmatpush1.msra.mxu0 %v1990
    %2238 = vmatprep.subr.mxu0 %v1993
    %2239 = vmatpush1.msra.mxu0 %v1992
    %2240 = vmatprep.subr.mxu0 %v1995
    %2241 = vmatpush1.msra.mxu0 %v1994
    %2242 = vmatprep.subr.mxu0 %v1997
    %2243 = vmatpush1.msra.mxu0 %v1996
    %2244 = vmatprep.subr.mxu0 %v1999
    %2245 = vmatpush1.msra.mxu0 %v1998
    %2246 = vmatprep.subr.mxu0 %v2001
    %2247 = vmatpush1.msra.mxu0 %v2000
    %2248 = vmatprep.subr.mxu0 %v2003
    %2249 = vmatpush1.msra.mxu0 %v2002
    %2250 = vmatprep.subr.mxu0 %v2005
    %2251 = vmatpush1.msra.mxu0 %v2004
    %2252 = vmatprep.subr.mxu0 %v2007
    %2253 = vmatpush1.msra.mxu0 %v2006
    %2254 = vmatprep.subr.mxu0 %v2009
    %2255 = vmatpush1.msra.mxu0 %v2008
    %2256 = vmatprep.subr.mxu0 %v2011
    %2257 = vmatpush1.msra.mxu0 %v2010
    %2258 = vmatprep.subr.mxu0 %v2013
    %2259 = vmatpush1.msra.mxu0 %v2012
    %2260 = vmatprep.subr.mxu0 %v2015
    %2261 = vmatpush1.msra.mxu0 %v2014
    %2262 = vmatprep.subr.mxu0 %v2017
    %2263 = vmatpush1.msra.mxu0 %v2016
    %2264 = vmatprep.subr.mxu0 %v2019
    %2265 = vmatpush1.msra.mxu0 %v2018
    %2266 = vmatprep.subr.mxu0 %v2021
    %2267 = vmatpush1.msra.mxu0 %v2020
    %2268 = vmatprep.subr.mxu0 %v2023
    %2269 = vmatpush1.msra.mxu0 %v2022
    %2270 = vmatprep.subr.mxu0 %v2025
    %2271 = vmatpush1.msra.mxu0 %v2024
    %2272 = vmatprep.subr.mxu0 %v2027
    %2273 = vmatpush1.msra.mxu0 %v2026
    %2274 = vmatprep.subr.mxu0 %v2029
    %2275 = vmatpush1.msra.mxu0 %v2028
    %2276 = vmatprep.subr.mxu0 %v2031
    %2277 = vmatpush1.msra.mxu0 %v2030
    %2278 = vmatprep.subr.mxu0 %v2033
    %2279 = vmatpush1.msra.mxu0 %v2032
    %2280 = vmatprep.subr.mxu0 %v2035
    %2281 = vmatpush1.msra.mxu0 %v2034
    %2282 = vmatprep.subr.mxu0 %v2037
    %2283 = vmatpush1.msra.mxu0 %v2036
    %2284 = vmatprep.subr.mxu0 %v2039
    %2285 = vmatpush1.msra.mxu0 %v2038
    %2286 = vmatprep.subr.mxu0 %v2041
    %2287 = vmatpush1.msra.mxu0 %v2040
    %2288 = vmatprep.mubr.f32.mxu0 %v2073
    %2289 = vmatmul.mubr.f32.gmra.mrb[0].mxu0 %v2072
    %v2290 = vpop.f32.mrb[0].mxu0
    %v2291 = vadd.f32 %v2220, %v2290
    %v2292 = vpop.f32.mrb[0].mxu0
    %v2293 = vadd.f32 %v2222, %v2292
    %2294 = vdwg.mxu0
    %2295 = vmatprep.subr.mxu0 %v2043
    %2296 = vmatpush1.msra.mxu0 %v2042
    %2297 = vmatprep.subr.mxu0 %v2045
    %2298 = vmatpush1.msra.mxu0 %v2044
    %2299 = vmatprep.subr.mxu0 0.0
    %2300 = vmatpush1.msra.mxu0 0.0
    %2301 = vmatprep.subr.mxu0 0.0
    %2302 = vmatpush1.msra.mxu0 0.0
    %2303 = vmatprep.subr.mxu0 0.0
    %2304 = vmatpush1.msra.mxu0 0.0
    %2305 = vmatprep.subr.mxu0 0.0
    %2306 = vmatpush1.msra.mxu0 0.0
    %2307 = vmatprep.subr.mxu0 0.0
    %2308 = vmatpush1.msra.mxu0 0.0
    %2309 = vmatprep.subr.mxu0 0.0
    %2310 = vmatpush1.msra.mxu0 0.0
    %2311 = vmatprep.subr.mxu0 0.0
    %2312 = vmatpush1.msra.mxu0 0.0
    %2313 = vmatprep.subr.mxu0 0.0
    %2314 = vmatpush1.msra.mxu0 0.0
    %2315 = vmatprep.subr.mxu0 0.0
    %2316 = vmatpush1.msra.mxu0 0.0
    %2317 = vmatprep.subr.mxu0 0.0
    %2318 = vmatpush1.msra.mxu0 0.0
    %2319 = vmatprep.subr.mxu0 0.0
    %2320 = vmatpush1.msra.mxu0 0.0
    %2321 = vmatprep.subr.mxu0 0.0
    %2322 = vmatpush1.msra.mxu0 0.0
    %2323 = vmatprep.subr.mxu0 0.0
    %2324 = vmatpush1.msra.mxu0 0.0
    %2325 = vmatprep.subr.mxu0 0.0
    %2326 = vmatpush1.msra.mxu0 0.0
    %2327 = vmatprep.subr.mxu0 0.0
    %2328 = vmatpush1.msra.mxu0 0.0
    %2329 = vmatprep.subr.mxu0 0.0
    %2330 = vmatpush1.msra.mxu0 0.0
    %2331 = vmatprep.subr.mxu0 0.0
    %2332 = vmatpush1.msra.mxu0 0.0
    %2333 = vmatprep.subr.mxu0 0.0
    %2334 = vmatpush1.msra.mxu0 0.0
    %2335 = vmatprep.subr.mxu0 0.0
    %2336 = vmatpush1.msra.mxu0 0.0
    %2337 = vmatprep.subr.mxu0 0.0
    %2338 = vmatpush1.msra.mxu0 0.0
    %2339 = vmatprep.subr.mxu0 0.0
    %2340 = vmatpush1.msra.mxu0 0.0
    %2341 = vmatprep.subr.mxu0 0.0
    %2342 = vmatpush1.msra.mxu0 0.0
    %2343 = vmatprep.subr.mxu0 0.0
    %2344 = vmatpush1.msra.mxu0 0.0
    %2345 = vmatprep.subr.mxu0 0.0
    %2346 = vmatpush1.msra.mxu0 0.0
    %2347 = vmatprep.subr.mxu0 0.0
    %2348 = vmatpush1.msra.mxu0 0.0
    %2349 = vmatprep.subr.mxu0 0.0
    %2350 = vmatpush1.msra.mxu0 0.0
    %2351 = vmatprep.subr.mxu0 0.0
    %2352 = vmatpush1.msra.mxu0 0.0
    %2353 = vmatprep.subr.mxu0 0.0
    %2354 = vmatpush1.msra.mxu0 0.0
    %2355 = vmatprep.subr.mxu0 0.0
    %2356 = vmatpush1.msra.mxu0 0.0
    %2357 = vmatprep.subr.mxu0 0.0
    %2358 = vmatpush1.msra.mxu0 0.0
    %2359 = vmatprep.mubr.f32.mxu0 0.0
    %2360 = vmatmul.mubr.f32.gmra.mrb[0].mxu0 %v2080
    %v2361 = vpop.f32.mrb[0].mxu0
    %v2362 = vadd.f32 %v2291, %v2361
    %v2363 = vpop.f32.mrb[0].mxu0
    %v2364 = vadd.f32 %v2293, %v2363
    %2365 = vdwg.mxu0
    %2368 = vrot.lane.b32.xlu0 %v2362, 16
    %v2369 = vpop.permute.xlu0 %2368
    %2370 = vrot.lane.b32.xlu0 %v2364, 16
    %v2371 = vpop.permute.xlu0 %2370
    %v2372 = vsel %vm486, %v2369, %v2371
    %vm2375 = vcmask 1047680
    %2376 = vst.msk [vmem:[#allocation4 + $0x8] sm:$0xff] %vm2375, %v2369
    %2377 = vst.msk [vmem:[#allocation4 + $0x10] sm:$0xff] %vm657, %v2372
    %v2378 = vld [vmem:[#allocation4] sm:$0xff]
    %v2379 = vld [vmem:[#allocation4 + $0x8] sm:$0xff]
    %v2380 = vld [vmem:[#allocation4 + $0x10] sm:$0xff]
    %2381 = vst [vmem:[#allocation5] sm:$0xff] %v2378
    %2382 = vst [vmem:[#allocation5 + $0x8] sm:$0xff] %v2379
    %2383 = vst [vmem:[#allocation5 + $0x10] sm:$0xff] %v2380
    %v2384 = vld [vmem:[#allocation4] sm:$0xff]
    %v2385 = vld [vmem:[#allocation4 + $0x8] sm:$0xff]
    %v2386 = vld [vmem:[#allocation4 + $0x10] sm:$0xff]
    %v2387 = vld [vmem:[#allocation4 + $0x18] sm:$0xff]
    %2392 = vrot.lane.b32.xlu0 %v2384, 127
    %v2393 = vpop.permute.xlu0 %2392
    %2394 = vrot.lane.b32.xlu0 %v2385, 127
    %v2395 = vpop.permute.xlu0 %2394
    %2396 = vrot.lane.b32.xlu0 %v2386, 127
    %v2397 = vpop.permute.xlu0 %2396
    %2398 = vrot.lane.b32.xlu0 %v2387, 127
    %v2399 = vpop.permute.xlu0 %2398
    %v2400 = vsel %vm68, %v2393, %v2395
    %v2401 = vsel %vm68, %v2395, %v2397
    %v2402 = vsel %vm68, %v2397, %v2399
    %2406 = vst [vmem:[#allocation5 + $0x18] sm:$0xff] %v2400
    %2407 = vst [vmem:[#allocation5 + $0x20] sm:$0xff] %v2401
    %2408 = vst [vmem:[#allocation5 + $0x28] sm:$0xff] %v2402
    %v2409 = vld [vmem:[#allocation4] sm:$0xff]
    %v2410 = vld [vmem:[#allocation4 + $0x8] sm:$0xff]
    %v2411 = vld [vmem:[#allocation4 + $0x10] sm:$0xff]
    %v2412 = vld [vmem:[#allocation4 + $0x18] sm:$0xff]
    %2417 = vrot.lane.b32.xlu0 %v2409, 126
    %v2418 = vpop.permute.xlu0 %2417
    %2419 = vrot.lane.b32.xlu0 %v2410, 126
    %v2420 = vpop.permute.xlu0 %2419
    %2421 = vrot.lane.b32.xlu0 %v2411, 126
    %v2422 = vpop.permute.xlu0 %2421
    %2423 = vrot.lane.b32.xlu0 %v2412, 126
    %v2424 = vpop.permute.xlu0 %2423
    %v2425 = vsel %vm90, %v2418, %v2420
    %v2426 = vsel %vm90, %v2420, %v2422
    %v2427 = vsel %vm90, %v2422, %v2424
    %2431 = vst [vmem:[#allocation5 + $0x30] sm:$0xff] %v2425
    %2432 = vst [vmem:[#allocation5 + $0x38] sm:$0xff] %v2426
    %2433 = vst [vmem:[#allocation5 + $0x40] sm:$0xff] %v2427
    %v2434 = vld [vmem:[#allocation4] sm:$0xff]
    %v2435 = vld [vmem:[#allocation4 + $0x8] sm:$0xff]
    %v2436 = vld [vmem:[#allocation4 + $0x10] sm:$0xff]
    %v2437 = vld [vmem:[#allocation4 + $0x18] sm:$0xff]
    %2442 = vrot.lane.b32.xlu0 %v2434, 125
    %v2443 = vpop.permute.xlu0 %2442
    %2444 = vrot.lane.b32.xlu0 %v2435, 125
    %v2445 = vpop.permute.xlu0 %2444
    %2446 = vrot.lane.b32.xlu0 %v2436, 125
    %v2447 = vpop.permute.xlu0 %2446
    %2448 = vrot.lane.b32.xlu0 %v2437, 125
    %v2449 = vpop.permute.xlu0 %2448
    %v2450 = vsel %vm112, %v2443, %v2445
    %v2451 = vsel %vm112, %v2445, %v2447
    %v2452 = vsel %vm112, %v2447, %v2449
    %2456 = vst [vmem:[#allocation5 + $0x48] sm:$0xff] %v2450
    %2457 = vst [vmem:[#allocation5 + $0x50] sm:$0xff] %v2451
    %2458 = vst [vmem:[#allocation5 + $0x58] sm:$0xff] %v2452
    %v2459 = vld [vmem:[#allocation4] sm:$0xff]
    %v2460 = vld [vmem:[#allocation4 + $0x8] sm:$0xff]
    %v2461 = vld [vmem:[#allocation4 + $0x10] sm:$0xff]
    %v2462 = vld [vmem:[#allocation4 + $0x18] sm:$0xff]
    %2467 = vrot.lane.b32.xlu0 %v2459, 124
    %v2468 = vpop.permute.xlu0 %2467
    %2469 = vrot.lane.b32.xlu0 %v2460, 124
    %v2470 = vpop.permute.xlu0 %2469
    %2471 = vrot.lane.b32.xlu0 %v2461, 124
    %v2472 = vpop.permute.xlu0 %2471
    %2473 = vrot.lane.b32.xlu0 %v2462, 124
    %v2474 = vpop.permute.xlu0 %2473
    %v2475 = vsel %vm134, %v2468, %v2470
    %v2476 = vsel %vm134, %v2470, %v2472
    %v2477 = vsel %vm134, %v2472, %v2474
    %2481 = vst [vmem:[#allocation5 + $0x60] sm:$0xff] %v2475
    %2482 = vst [vmem:[#allocation5 + $0x68] sm:$0xff] %v2476
    %2483 = vst [vmem:[#allocation5 + $0x70] sm:$0xff] %v2477
    %v2484 = vld [vmem:[#allocation4] sm:$0xff]
    %v2485 = vld [vmem:[#allocation4 + $0x8] sm:$0xff]
    %v2486 = vld [vmem:[#allocation4 + $0x10] sm:$0xff]
    %v2487 = vld [vmem:[#allocation4 + $0x18] sm:$0xff]
    %2492 = vrot.lane.b32.xlu0 %v2484, 116
    %v2493 = vpop.permute.xlu0 %2492
    %2494 = vrot.lane.b32.xlu0 %v2485, 116
    %v2495 = vpop.permute.xlu0 %2494
    %2496 = vrot.lane.b32.xlu0 %v2486, 116
    %v2497 = vpop.permute.xlu0 %2496
    %2498 = vrot.lane.b32.xlu0 %v2487, 116
    %v2499 = vpop.permute.xlu0 %2498
    %vm2500 = vcmask 949248
    %v2501 = vsel %vm2500, %v2493, %v2495
    %v2502 = vsel %vm2500, %v2495, %v2497
    %v2503 = vsel %vm2500, %v2497, %v2499
    %2507 = vst [vmem:[#allocation5 + $0x78] sm:$0xff] %v2501
    %2508 = vst [vmem:[#allocation5 + $0x80] sm:$0xff] %v2502
    %2509 = vst [vmem:[#allocation5 + $0x88] sm:$0xff] %v2503
    %v2510 = vld [vmem:[#allocation4] sm:$0xff]
    %v2511 = vld [vmem:[#allocation4 + $0x8] sm:$0xff]
    %v2512 = vld [vmem:[#allocation4 + $0x10] sm:$0xff]
    %v2513 = vld [vmem:[#allocation4 + $0x18] sm:$0xff]
    %2518 = vrot.lane.b32.xlu0 %v2510, 115
    %v2519 = vpop.permute.xlu0 %2518
    %2520 = vrot.lane.b32.xlu0 %v2511, 115
    %v2521 = vpop.permute.xlu0 %2520
    %2522 = vrot.lane.b32.xlu0 %v2512, 115
    %v2523 = vpop.permute.xlu0 %2522
    %2524 = vrot.lane.b32.xlu0 %v2513, 115
    %v2525 = vpop.permute.xlu0 %2524
    %vm2526 = vcmask 941056
    %v2527 = vsel %vm2526, %v2519, %v2521
    %v2528 = vsel %vm2526, %v2521, %v2523
    %v2529 = vsel %vm2526, %v2523, %v2525
    %2533 = vst [vmem:[#allocation5 + $0x90] sm:$0xff] %v2527
    %2534 = vst [vmem:[#allocation5 + $0x98] sm:$0xff] %v2528
    %2535 = vst [vmem:[#allocation5 + $0xa0] sm:$0xff] %v2529
    %v2536 = vld [vmem:[#allocation4] sm:$0xff]
    %v2537 = vld [vmem:[#allocation4 + $0x8] sm:$0xff]
    %v2538 = vld [vmem:[#allocation4 + $0x10] sm:$0xff]
    %v2539 = vld [vmem:[#allocation4 + $0x18] sm:$0xff]
    %2544 = vrot.lane.b32.xlu0 %v2536, 114
    %v2545 = vpop.permute.xlu0 %2544
    %2546 = vrot.lane.b32.xlu0 %v2537, 114
    %v2547 = vpop.permute.xlu0 %2546
    %2548 = vrot.lane.b32.xlu0 %v2538, 114
    %v2549 = vpop.permute.xlu0 %2548
    %2550 = vrot.lane.b32.xlu0 %v2539, 114
    %v2551 = vpop.permute.xlu0 %2550
    %vm2552 = vcmask 932864
    %v2553 = vsel %vm2552, %v2545, %v2547
    %v2554 = vsel %vm2552, %v2547, %v2549
    %v2555 = vsel %vm2552, %v2549, %v2551
    %2559 = vst [vmem:[#allocation5 + $0xa8] sm:$0xff] %v2553
    %2560 = vst [vmem:[#allocation5 + $0xb0] sm:$0xff] %v2554
    %2561 = vst [vmem:[#allocation5 + $0xb8] sm:$0xff] %v2555
    %v2562 = vld [vmem:[#allocation4] sm:$0xff]
    %v2563 = vld [vmem:[#allocation4 + $0x8] sm:$0xff]
    %v2564 = vld [vmem:[#allocation4 + $0x10] sm:$0xff]
    %v2565 = vld [vmem:[#allocation4 + $0x18] sm:$0xff]
    %2570 = vrot.lane.b32.xlu0 %v2562, 113
    %v2571 = vpop.permute.xlu0 %2570
    %2572 = vrot.lane.b32.xlu0 %v2563, 113
    %v2573 = vpop.permute.xlu0 %2572
    %2574 = vrot.lane.b32.xlu0 %v2564, 113
    %v2575 = vpop.permute.xlu0 %2574
    %2576 = vrot.lane.b32.xlu0 %v2565, 113
    %v2577 = vpop.permute.xlu0 %2576
    %vm2578 = vcmask 924672
    %v2579 = vsel %vm2578, %v2571, %v2573
    %v2580 = vsel %vm2578, %v2573, %v2575
    %v2581 = vsel %vm2578, %v2575, %v2577
    %2585 = vst [vmem:[#allocation5 + $0xc0] sm:$0xff] %v2579
    %2586 = vst [vmem:[#allocation5 + $0xc8] sm:$0xff] %v2580
    %2587 = vst [vmem:[#allocation5 + $0xd0] sm:$0xff] %v2581
    %v2588 = vld [vmem:[#allocation4] sm:$0xff]
    %v2589 = vld [vmem:[#allocation4 + $0x8] sm:$0xff]
    %v2590 = vld [vmem:[#allocation4 + $0x10] sm:$0xff]
    %v2591 = vld [vmem:[#allocation4 + $0x18] sm:$0xff]
    %2596 = vrot.lane.b32.xlu0 %v2588, 112
    %v2597 = vpop.permute.xlu0 %2596
    %2598 = vrot.lane.b32.xlu0 %v2589, 112
    %v2599 = vpop.permute.xlu0 %2598
    %2600 = vrot.lane.b32.xlu0 %v2590, 112
    %v2601 = vpop.permute.xlu0 %2600
    %2602 = vrot.lane.b32.xlu0 %v2591, 112
    %v2603 = vpop.permute.xlu0 %2602
    %v2604 = vsel %vm2067, %v2597, %v2599
    %v2605 = vsel %vm2067, %v2599, %v2601
    %v2606 = vsel %vm2067, %v2601, %v2603
    %2610 = vst [vmem:[#allocation5 + $0xd8] sm:$0xff] %v2604
    %2611 = vst [vmem:[#allocation5 + $0xe0] sm:$0xff] %v2605
    %2612 = vst [vmem:[#allocation5 + $0xe8] sm:$0xff] %v2606
    %v2613 = vld [vmem:[#allocation4] sm:$0xff]
    %v2614 = vld [vmem:[#allocation4 + $0x8] sm:$0xff]
    %v2615 = vld [vmem:[#allocation4 + $0x10] sm:$0xff]
    %v2616 = vld [vmem:[#allocation4 + $0x18] sm:$0xff]
    %2621 = vrot.lane.b32.xlu0 %v2613, 104
    %v2622 = vpop.permute.xlu0 %2621
    %2623 = vrot.lane.b32.xlu0 %v2614, 104
    %v2624 = vpop.permute.xlu0 %2623
    %2625 = vrot.lane.b32.xlu0 %v2615, 104
    %v2626 = vpop.permute.xlu0 %2625
    %2627 = vrot.lane.b32.xlu0 %v2616, 104
    %v2628 = vpop.permute.xlu0 %2627
    %vm2629 = vcmask 850944
    %v2630 = vsel %vm2629, %v2622, %v2624
    %v2631 = vsel %vm2629, %v2624, %v2626
    %v2632 = vsel %vm2629, %v2626, %v2628
    %2636 = vst [vmem:[#allocation5 + $0xf0] sm:$0xff] %v2630
    %2637 = vst [vmem:[#allocation5 + $0xf8] sm:$0xff] %v2631
    %2638 = vst [vmem:[#allocation5 + $0x100] sm:$0xff] %v2632
    %v2639 = vld [vmem:[#allocation4] sm:$0xff]
    %v2640 = vld [vmem:[#allocation4 + $0x8] sm:$0xff]
    %v2641 = vld [vmem:[#allocation4 + $0x10] sm:$0xff]
    %v2642 = vld [vmem:[#allocation4 + $0x18] sm:$0xff]
    %2647 = vrot.lane.b32.xlu0 %v2639, 103
    %v2648 = vpop.permute.xlu0 %2647
    %2649 = vrot.lane.b32.xlu0 %v2640, 103
    %v2650 = vpop.permute.xlu0 %2649
    %2651 = vrot.lane.b32.xlu0 %v2641, 103
    %v2652 = vpop.permute.xlu0 %2651
    %2653 = vrot.lane.b32.xlu0 %v2642, 103
    %v2654 = vpop.permute.xlu0 %2653
    %vm2655 = vcmask 842752
    %v2656 = vsel %vm2655, %v2648, %v2650
    %v2657 = vsel %vm2655, %v2650, %v2652
    %v2658 = vsel %vm2655, %v2652, %v2654
    %2662 = vst [vmem:[#allocation5 + $0x108] sm:$0xff] %v2656
    %2663 = vst [vmem:[#allocation5 + $0x110] sm:$0xff] %v2657
    %2664 = vst [vmem:[#allocation5 + $0x118] sm:$0xff] %v2658
    %v2665 = vld [vmem:[#allocation4] sm:$0xff]
    %v2666 = vld [vmem:[#allocation4 + $0x8] sm:$0xff]
    %v2667 = vld [vmem:[#allocation4 + $0x10] sm:$0xff]
    %v2668 = vld [vmem:[#allocation4 + $0x18] sm:$0xff]
    %2673 = vrot.lane.b32.xlu0 %v2665, 102
    %v2674 = vpop.permute.xlu0 %2673
    %2675 = vrot.lane.b32.xlu0 %v2666, 102
    %v2676 = vpop.permute.xlu0 %2675
    %2677 = vrot.lane.b32.xlu0 %v2667, 102
    %v2678 = vpop.permute.xlu0 %2677
    %2679 = vrot.lane.b32.xlu0 %v2668, 102
    %v2680 = vpop.permute.xlu0 %2679
    %vm2681 = vcmask 834560
    %v2682 = vsel %vm2681, %v2674, %v2676
    %v2683 = vsel %vm2681, %v2676, %v2678
    %v2684 = vsel %vm2681, %v2678, %v2680
    %2688 = vst [vmem:[#allocation5 + $0x120] sm:$0xff] %v2682
    %2689 = vst [vmem:[#allocation5 + $0x128] sm:$0xff] %v2683
    %2690 = vst [vmem:[#allocation5 + $0x130] sm:$0xff] %v2684
    %v2691 = vld [vmem:[#allocation4] sm:$0xff]
    %v2692 = vld [vmem:[#allocation4 + $0x8] sm:$0xff]
    %v2693 = vld [vmem:[#allocation4 + $0x10] sm:$0xff]
    %v2694 = vld [vmem:[#allocation4 + $0x18] sm:$0xff]
    %2699 = vrot.lane.b32.xlu0 %v2691, 101
    %v2700 = vpop.permute.xlu0 %2699
    %2701 = vrot.lane.b32.xlu0 %v2692, 101
    %v2702 = vpop.permute.xlu0 %2701
    %2703 = vrot.lane.b32.xlu0 %v2693, 101
    %v2704 = vpop.permute.xlu0 %2703
    %2705 = vrot.lane.b32.xlu0 %v2694, 101
    %v2706 = vpop.permute.xlu0 %2705
    %vm2707 = vcmask 826368
    %v2708 = vsel %vm2707, %v2700, %v2702
    %v2709 = vsel %vm2707, %v2702, %v2704
    %v2710 = vsel %vm2707, %v2704, %v2706
    %2714 = vst [vmem:[#allocation5 + $0x138] sm:$0xff] %v2708
    %2715 = vst [vmem:[#allocation5 + $0x140] sm:$0xff] %v2709
    %2716 = vst [vmem:[#allocation5 + $0x148] sm:$0xff] %v2710
    %v2717 = vld [vmem:[#allocation4] sm:$0xff]
    %v2718 = vld [vmem:[#allocation4 + $0x8] sm:$0xff]
    %v2719 = vld [vmem:[#allocation4 + $0x10] sm:$0xff]
    %v2720 = vld [vmem:[#allocation4 + $0x18] sm:$0xff]
    %2725 = vrot.lane.b32.xlu0 %v2717, 100
    %v2726 = vpop.permute.xlu0 %2725
    %2727 = vrot.lane.b32.xlu0 %v2718, 100
    %v2728 = vpop.permute.xlu0 %2727
    %2729 = vrot.lane.b32.xlu0 %v2719, 100
    %v2730 = vpop.permute.xlu0 %2729
    %2731 = vrot.lane.b32.xlu0 %v2720, 100
    %v2732 = vpop.permute.xlu0 %2731
    %v2733 = vsel %vm156, %v2726, %v2728
    %v2734 = vsel %vm156, %v2728, %v2730
    %v2735 = vsel %vm156, %v2730, %v2732
    %2739 = vst [vmem:[#allocation5 + $0x150] sm:$0xff] %v2733
    %2740 = vst [vmem:[#allocation5 + $0x158] sm:$0xff] %v2734
    %2741 = vst [vmem:[#allocation5 + $0x160] sm:$0xff] %v2735
    %v2742 = vld [vmem:[#allocation4] sm:$0xff]
    %v2743 = vld [vmem:[#allocation4 + $0x8] sm:$0xff]
    %v2744 = vld [vmem:[#allocation4 + $0x10] sm:$0xff]
    %v2745 = vld [vmem:[#allocation4 + $0x18] sm:$0xff]
    %2750 = vrot.lane.b32.xlu0 %v2742, 92
    %v2751 = vpop.permute.xlu0 %2750
    %2752 = vrot.lane.b32.xlu0 %v2743, 92
    %v2753 = vpop.permute.xlu0 %2752
    %2754 = vrot.lane.b32.xlu0 %v2744, 92
    %v2755 = vpop.permute.xlu0 %2754
    %2756 = vrot.lane.b32.xlu0 %v2745, 92
    %v2757 = vpop.permute.xlu0 %2756
    %vm2758 = vcmask 752640
    %v2759 = vsel %vm2758, %v2751, %v2753
    %v2760 = vsel %vm2758, %v2753, %v2755
    %v2761 = vsel %vm2758, %v2755, %v2757
    %2765 = vst [vmem:[#allocation5 + $0x168] sm:$0xff] %v2759
    %2766 = vst [vmem:[#allocation5 + $0x170] sm:$0xff] %v2760
    %2767 = vst [vmem:[#allocation5 + $0x178] sm:$0xff] %v2761
    %v2768 = vld [vmem:[#allocation4] sm:$0xff]
    %v2769 = vld [vmem:[#allocation4 + $0x8] sm:$0xff]
    %v2770 = vld [vmem:[#allocation4 + $0x10] sm:$0xff]
    %v2771 = vld [vmem:[#allocation4 + $0x18] sm:$0xff]
    %2776 = vrot.lane.b32.xlu0 %v2768, 91
    %v2777 = vpop.permute.xlu0 %2776
    %2778 = vrot.lane.b32.xlu0 %v2769, 91
    %v2779 = vpop.permute.xlu0 %2778
    %2780 = vrot.lane.b32.xlu0 %v2770, 91
    %v2781 = vpop.permute.xlu0 %2780
    %2782 = vrot.lane.b32.xlu0 %v2771, 91
    %v2783 = vpop.permute.xlu0 %2782
    %vm2784 = vcmask 744448
    %v2785 = vsel %vm2784, %v2777, %v2779
    %v2786 = vsel %vm2784, %v2779, %v2781
    %v2787 = vsel %vm2784, %v2781, %v2783
    %2791 = vst [vmem:[#allocation5 + $0x180] sm:$0xff] %v2785
    %2792 = vst [vmem:[#allocation5 + $0x188] sm:$0xff] %v2786
    %2793 = vst [vmem:[#allocation5 + $0x190] sm:$0xff] %v2787
    %v2794 = vld [vmem:[#allocation4] sm:$0xff]
    %v2795 = vld [vmem:[#allocation4 + $0x8] sm:$0xff]
    %v2796 = vld [vmem:[#allocation4 + $0x10] sm:$0xff]
    %v2797 = vld [vmem:[#allocation4 + $0x18] sm:$0xff]
    %2802 = vrot.lane.b32.xlu0 %v2794, 90
    %v2803 = vpop.permute.xlu0 %2802
    %2804 = vrot.lane.b32.xlu0 %v2795, 90
    %v2805 = vpop.permute.xlu0 %2804
    %2806 = vrot.lane.b32.xlu0 %v2796, 90
    %v2807 = vpop.permute.xlu0 %2806
    %2808 = vrot.lane.b32.xlu0 %v2797, 90
    %v2809 = vpop.permute.xlu0 %2808
    %vm2810 = vcmask 736256
    %v2811 = vsel %vm2810, %v2803, %v2805
    %v2812 = vsel %vm2810, %v2805, %v2807
    %v2813 = vsel %vm2810, %v2807, %v2809
    %2817 = vst [vmem:[#allocation5 + $0x198] sm:$0xff] %v2811
    %2818 = vst [vmem:[#allocation5 + $0x1a0] sm:$0xff] %v2812
    %2819 = vst [vmem:[#allocation5 + $0x1a8] sm:$0xff] %v2813
    %v2820 = vld [vmem:[#allocation4] sm:$0xff]
    %v2821 = vld [vmem:[#allocation4 + $0x8] sm:$0xff]
    %v2822 = vld [vmem:[#allocation4 + $0x10] sm:$0xff]
    %v2823 = vld [vmem:[#allocation4 + $0x18] sm:$0xff]
    %2828 = vrot.lane.b32.xlu0 %v2820, 89
    %v2829 = vpop.permute.xlu0 %2828
    %2830 = vrot.lane.b32.xlu0 %v2821, 89
    %v2831 = vpop.permute.xlu0 %2830
    %2832 = vrot.lane.b32.xlu0 %v2822, 89
    %v2833 = vpop.permute.xlu0 %2832
    %2834 = vrot.lane.b32.xlu0 %v2823, 89
    %v2835 = vpop.permute.xlu0 %2834
    %vm2836 = vcmask 728064
    %v2837 = vsel %vm2836, %v2829, %v2831
    %v2838 = vsel %vm2836, %v2831, %v2833
    %v2839 = vsel %vm2836, %v2833, %v2835
    %2843 = vst [vmem:[#allocation5 + $0x1b0] sm:$0xff] %v2837
    %2844 = vst [vmem:[#allocation5 + $0x1b8] sm:$0xff] %v2838
    %2845 = vst [vmem:[#allocation5 + $0x1c0] sm:$0xff] %v2839
    %v2846 = vld [vmem:[#allocation4] sm:$0xff]
    %v2847 = vld [vmem:[#allocation4 + $0x8] sm:$0xff]
    %v2848 = vld [vmem:[#allocation4 + $0x10] sm:$0xff]
    %v2849 = vld [vmem:[#allocation4 + $0x18] sm:$0xff]
    %2854 = vrot.lane.b32.xlu0 %v2846, 88
    %v2855 = vpop.permute.xlu0 %2854
    %2856 = vrot.lane.b32.xlu0 %v2847, 88
    %v2857 = vpop.permute.xlu0 %2856
    %2858 = vrot.lane.b32.xlu0 %v2848, 88
    %v2859 = vpop.permute.xlu0 %2858
    %2860 = vrot.lane.b32.xlu0 %v2849, 88
    %v2861 = vpop.permute.xlu0 %2860
    %vm2862 = vcmask 719872
    %v2863 = vsel %vm2862, %v2855, %v2857
    %v2864 = vsel %vm2862, %v2857, %v2859
    %v2865 = vsel %vm2862, %v2859, %v2861
    %2869 = vst [vmem:[#allocation5 + $0x1c8] sm:$0xff] %v2863
    %2870 = vst [vmem:[#allocation5 + $0x1d0] sm:$0xff] %v2864
    %2871 = vst [vmem:[#allocation5 + $0x1d8] sm:$0xff] %v2865
    %v2872 = vld [vmem:[#allocation4] sm:$0xff]
    %v2873 = vld [vmem:[#allocation4 + $0x8] sm:$0xff]
    %v2874 = vld [vmem:[#allocation4 + $0x10] sm:$0xff]
    %v2875 = vld [vmem:[#allocation4 + $0x18] sm:$0xff]
    %2880 = vrot.lane.b32.xlu0 %v2872, 80
    %v2881 = vpop.permute.xlu0 %2880
    %2882 = vrot.lane.b32.xlu0 %v2873, 80
    %v2883 = vpop.permute.xlu0 %2882
    %2884 = vrot.lane.b32.xlu0 %v2874, 80
    %v2885 = vpop.permute.xlu0 %2884
    %2886 = vrot.lane.b32.xlu0 %v2875, 80
    %v2887 = vpop.permute.xlu0 %2886
    %vm2888 = vcmask 654336
    %v2889 = vsel %vm2888, %v2881, %v2883
    %v2890 = vsel %vm2888, %v2883, %v2885
    %v2891 = vsel %vm2888, %v2885, %v2887
    %2895 = vst [vmem:[#allocation5 + $0x1e0] sm:$0xff] %v2889
    %2896 = vst [vmem:[#allocation5 + $0x1e8] sm:$0xff] %v2890
    %2897 = vst [vmem:[#allocation5 + $0x1f0] sm:$0xff] %v2891
    %v2898 = vld [vmem:[#allocation4] sm:$0xff]
    %v2899 = vld [vmem:[#allocation4 + $0x8] sm:$0xff]
    %v2900 = vld [vmem:[#allocation4 + $0x10] sm:$0xff]
    %v2901 = vld [vmem:[#allocation4 + $0x18] sm:$0xff]
    %2906 = vrot.lane.b32.xlu0 %v2898, 79
    %v2907 = vpop.permute.xlu0 %2906
    %2908 = vrot.lane.b32.xlu0 %v2899, 79
    %v2909 = vpop.permute.xlu0 %2908
    %2910 = vrot.lane.b32.xlu0 %v2900, 79
    %v2911 = vpop.permute.xlu0 %2910
    %2912 = vrot.lane.b32.xlu0 %v2901, 79
    %v2913 = vpop.permute.xlu0 %2912
    %vm2914 = vcmask 646144
    %v2915 = vsel %vm2914, %v2907, %v2909
    %v2916 = vsel %vm2914, %v2909, %v2911
    %v2917 = vsel %vm2914, %v2911, %v2913
    %2921 = vst [vmem:[#allocation5 + $0x1f8] sm:$0xff] %v2915
    %2922 = vst [vmem:[#allocation5 + $0x200] sm:$0xff] %v2916
    %2923 = vst [vmem:[#allocation5 + $0x208] sm:$0xff] %v2917
    %v2924 = vld [vmem:[#allocation4] sm:$0xff]
    %v2925 = vld [vmem:[#allocation4 + $0x8] sm:$0xff]
    %v2926 = vld [vmem:[#allocation4 + $0x10] sm:$0xff]
    %v2927 = vld [vmem:[#allocation4 + $0x18] sm:$0xff]
    %2932 = vrot.lane.b32.xlu0 %v2924, 78
    %v2933 = vpop.permute.xlu0 %2932
    %2934 = vrot.lane.b32.xlu0 %v2925, 78
    %v2935 = vpop.permute.xlu0 %2934
    %2936 = vrot.lane.b32.xlu0 %v2926, 78
    %v2937 = vpop.permute.xlu0 %2936
    %2938 = vrot.lane.b32.xlu0 %v2927, 78
    %v2939 = vpop.permute.xlu0 %2938
    %vm2940 = vcmask 637952
    %v2941 = vsel %vm2940, %v2933, %v2935
    %v2942 = vsel %vm2940, %v2935, %v2937
    %v2943 = vsel %vm2940, %v2937, %v2939
    %2947 = vst [vmem:[#allocation5 + $0x210] sm:$0xff] %v2941
    %2948 = vst [vmem:[#allocation5 + $0x218] sm:$0xff] %v2942
    %2949 = vst [vmem:[#allocation5 + $0x220] sm:$0xff] %v2943
    %v2950 = vld [vmem:[#allocation4] sm:$0xff]
    %v2951 = vld [vmem:[#allocation4 + $0x8] sm:$0xff]
    %v2952 = vld [vmem:[#allocation4 + $0x10] sm:$0xff]
    %v2953 = vld [vmem:[#allocation4 + $0x18] sm:$0xff]
    %2958 = vrot.lane.b32.xlu0 %v2950, 77
    %v2959 = vpop.permute.xlu0 %2958
    %2960 = vrot.lane.b32.xlu0 %v2951, 77
    %v2961 = vpop.permute.xlu0 %2960
    %2962 = vrot.lane.b32.xlu0 %v2952, 77
    %v2963 = vpop.permute.xlu0 %2962
    %2964 = vrot.lane.b32.xlu0 %v2953, 77
    %v2965 = vpop.permute.xlu0 %2964
    %vm2966 = vcmask 629760
    %v2967 = vsel %vm2966, %v2959, %v2961
    %v2968 = vsel %vm2966, %v2961, %v2963
    %v2969 = vsel %vm2966, %v2963, %v2965
    %2973 = vst [vmem:[#allocation5 + $0x228] sm:$0xff] %v2967
    %2974 = vst [vmem:[#allocation5 + $0x230] sm:$0xff] %v2968
    %2975 = vst [vmem:[#allocation5 + $0x238] sm:$0xff] %v2969
    %v2976 = vld [vmem:[#allocation4] sm:$0xff]
    %v2977 = vld [vmem:[#allocation4 + $0x8] sm:$0xff]
    %v2978 = vld [vmem:[#allocation4 + $0x10] sm:$0xff]
    %v2979 = vld [vmem:[#allocation4 + $0x18] sm:$0xff]
    %2984 = vrot.lane.b32.xlu0 %v2976, 76
    %v2985 = vpop.permute.xlu0 %2984
    %2986 = vrot.lane.b32.xlu0 %v2977, 76
    %v2987 = vpop.permute.xlu0 %2986
    %2988 = vrot.lane.b32.xlu0 %v2978, 76
    %v2989 = vpop.permute.xlu0 %2988
    %2990 = vrot.lane.b32.xlu0 %v2979, 76
    %v2991 = vpop.permute.xlu0 %2990
    %vm2992 = vcmask 621568
    %v2993 = vsel %vm2992, %v2985, %v2987
    %v2994 = vsel %vm2992, %v2987, %v2989
    %v2995 = vsel %vm2992, %v2989, %v2991
    %2999 = vst [vmem:[#allocation5 + $0x240] sm:$0xff] %v2993
    %3000 = vst [vmem:[#allocation5 + $0x248] sm:$0xff] %v2994
    %3001 = vst [vmem:[#allocation5 + $0x250] sm:$0xff] %v2995
    %v3002 = vld [vmem:[%s4] sm:$0xff]
    %v3003 = vld [vmem:[%s4 + $0x8] sm:$0xff]
    %v3004 = vld [vmem:[%s4 + $0x10] sm:$0xff]
    %v3005 = vld [vmem:[%s4 + $0x18] sm:$0xff]
    %v3006 = vld [vmem:[#allocation5] sm:$0xff]
    %v3007 = vld [vmem:[#allocation5 + $0x8] sm:$0xff]
    %v3008 = vld [vmem:[#allocation5 + $0x10] sm:$0xff]
    %v3009 = vld [vmem:[#allocation5 + $0x18] sm:$0xff]
    %v3010 = vld [vmem:[#allocation5 + $0x20] sm:$0xff]
    %v3011 = vld [vmem:[#allocation5 + $0x28] sm:$0xff]
    %v3012 = vld [vmem:[#allocation5 + $0x30] sm:$0xff]
    %v3013 = vld [vmem:[#allocation5 + $0x38] sm:$0xff]
    %v3014 = vld [vmem:[#allocation5 + $0x40] sm:$0xff]
    %v3015 = vld [vmem:[#allocation5 + $0x48] sm:$0xff]
    %v3016 = vld [vmem:[#allocation5 + $0x50] sm:$0xff]
    %v3017 = vld [vmem:[#allocation5 + $0x58] sm:$0xff]
    %v3018 = vld [vmem:[#allocation5 + $0x60] sm:$0xff]
    %v3019 = vld [vmem:[#allocation5 + $0x68] sm:$0xff]
    %v3020 = vld [vmem:[#allocation5 + $0x70] sm:$0xff]
    %v3021 = vld [vmem:[#allocation5 + $0x78] sm:$0xff]
    %v3022 = vld [vmem:[#allocation5 + $0x80] sm:$0xff]
    %v3023 = vld [vmem:[#allocation5 + $0x88] sm:$0xff]
    %v3024 = vld [vmem:[#allocation5 + $0x90] sm:$0xff]
    %v3025 = vld [vmem:[#allocation5 + $0x98] sm:$0xff]
    %v3026 = vld [vmem:[#allocation5 + $0xa0] sm:$0xff]
    %v3027 = vld [vmem:[#allocation5 + $0xa8] sm:$0xff]
    %v3028 = vld [vmem:[#allocation5 + $0xb0] sm:$0xff]
    %v3029 = vld [vmem:[#allocation5 + $0xb8] sm:$0xff]
    %v3030 = vld [vmem:[#allocation5 + $0xc0] sm:$0xff]
    %v3031 = vld [vmem:[#allocation5 + $0xc8] sm:$0xff]
    %v3032 = vld [vmem:[#allocation5 + $0xd0] sm:$0xff]
    %v3033 = vld [vmem:[#allocation5 + $0xd8] sm:$0xff]
    %v3034 = vld [vmem:[#allocation5 + $0xe0] sm:$0xff]
    %v3035 = vld [vmem:[#allocation5 + $0xe8] sm:$0xff]
    %v3036 = vld [vmem:[#allocation5 + $0xf0] sm:$0xff]
    %v3037 = vld [vmem:[#allocation5 + $0xf8] sm:$0xff]
    %v3038 = vld [vmem:[#allocation5 + $0x100] sm:$0xff]
    %v3039 = vld [vmem:[#allocation5 + $0x108] sm:$0xff]
    %v3040 = vld [vmem:[#allocation5 + $0x110] sm:$0xff]
    %v3041 = vld [vmem:[#allocation5 + $0x118] sm:$0xff]
    %v3042 = vld [vmem:[#allocation5 + $0x120] sm:$0xff]
    %v3043 = vld [vmem:[#allocation5 + $0x128] sm:$0xff]
    %v3044 = vld [vmem:[#allocation5 + $0x130] sm:$0xff]
    %v3045 = vld [vmem:[#allocation5 + $0x138] sm:$0xff]
    %v3046 = vld [vmem:[#allocation5 + $0x140] sm:$0xff]
    %v3047 = vld [vmem:[#allocation5 + $0x148] sm:$0xff]
    %v3048 = vld [vmem:[#allocation5 + $0x150] sm:$0xff]
    %v3049 = vld [vmem:[#allocation5 + $0x158] sm:$0xff]
    %v3050 = vld [vmem:[#allocation5 + $0x160] sm:$0xff]
    %v3051 = vld [vmem:[#allocation5 + $0x168] sm:$0xff]
    %v3052 = vld [vmem:[#allocation5 + $0x170] sm:$0xff]
    %v3053 = vld [vmem:[#allocation5 + $0x178] sm:$0xff]
    %v3054 = vld [vmem:[#allocation5 + $0x180] sm:$0xff]
    %v3055 = vld [vmem:[#allocation5 + $0x188] sm:$0xff]
    %v3056 = vld [vmem:[#allocation5 + $0x190] sm:$0xff]
    %v3057 = vld [vmem:[#allocation5 + $0x198] sm:$0xff]
    %v3058 = vld [vmem:[#allocation5 + $0x1a0] sm:$0xff]
    %v3059 = vld [vmem:[#allocation5 + $0x1a8] sm:$0xff]
    %v3060 = vld [vmem:[#allocation5 + $0x1b0] sm:$0xff]
    %v3061 = vld [vmem:[#allocation5 + $0x1b8] sm:$0xff]
    %v3062 = vld [vmem:[#allocation5 + $0x1c0] sm:$0xff]
    %v3063 = vld [vmem:[#allocation5 + $0x1c8] sm:$0xff]
    %v3064 = vld [vmem:[#allocation5 + $0x1d0] sm:$0xff]
    %v3065 = vld [vmem:[#allocation5 + $0x1d8] sm:$0xff]
    %v3066 = vld [vmem:[#allocation5 + $0x1e0] sm:$0xff]
    %v3067 = vld [vmem:[#allocation5 + $0x1e8] sm:$0xff]
    %v3068 = vld [vmem:[#allocation5 + $0x1f0] sm:$0xff]
    %v3069 = vld [vmem:[#allocation5 + $0x1f8] sm:$0xff]
    %v3070 = vld [vmem:[#allocation5 + $0x200] sm:$0xff]
    %v3071 = vld [vmem:[#allocation5 + $0x208] sm:$0xff]
    %v3072 = vld [vmem:[#allocation5 + $0x210] sm:$0xff]
    %v3073 = vld [vmem:[#allocation5 + $0x218] sm:$0xff]
    %v3074 = vld [vmem:[#allocation5 + $0x220] sm:$0xff]
    %v3075 = vld [vmem:[#allocation5 + $0x228] sm:$0xff]
    %v3076 = vld [vmem:[#allocation5 + $0x230] sm:$0xff]
    %v3077 = vld [vmem:[#allocation5 + $0x238] sm:$0xff]
    %v3078 = vld [vmem:[#allocation5 + $0x240] sm:$0xff]
    %v3079 = vld [vmem:[#allocation5 + $0x248] sm:$0xff]
    %v3080 = vld [vmem:[#allocation5 + $0x250] sm:$0xff]
    %v3081 = vld [vmem:[%s5] sm:$0xff]
    %v3082 = vld [vmem:[%s5 + $0x8] sm:$0xff]
    %3084 = vset.pattern.permute.xlu0 0
    %3085 = vperm.xlu0 %3084, %v3081
    %v3086 = vpop.permute.xlu0 %3085
    %3089 = vset.pattern.permute.xlu0 0
    %3090 = vperm.xlu0 %3089, %v3082
    %v3091 = vpop.permute.xlu0 %3090
    %v3094 = vsel %vm266, %v3003, 0
    %v3097 = vsel %vm266, %v3005, 0
    %3099 = vmatprep.subr.mxu0 %v3007
    %3100 = vmatpush1.msra.mxu0 %v3006
    %3101 = vmatprep.subr.mxu0 %v3010
    %3102 = vmatpush1.msra.mxu0 %v3009
    %3103 = vmatprep.subr.mxu0 %v3013
    %3104 = vmatpush1.msra.mxu0 %v3012
    %3105 = vmatprep.subr.mxu0 %v3016
    %3106 = vmatpush1.msra.mxu0 %v3015
    %3107 = vmatprep.subr.mxu0 %v3019
    %3108 = vmatpush1.msra.mxu0 %v3018
    %3109 = vmatprep.subr.mxu0 %v3022
    %3110 = vmatpush1.msra.mxu0 %v3021
    %3111 = vmatprep.subr.mxu0 %v3025
    %3112 = vmatpush1.msra.mxu0 %v3024
    %3113 = vmatprep.subr.mxu0 %v3028
    %3114 = vmatpush1.msra.mxu0 %v3027
    %3115 = vmatprep.subr.mxu0 %v3031
    %3116 = vmatpush1.msra.mxu0 %v3030
    %3117 = vmatprep.subr.mxu0 %v3034
    %3118 = vmatpush1.msra.mxu0 %v3033
    %3119 = vmatprep.subr.mxu0 %v3037
    %3120 = vmatpush1.msra.mxu0 %v3036
    %3121 = vmatprep.subr.mxu0 %v3040
    %3122 = vmatpush1.msra.mxu0 %v3039
    %3123 = vmatprep.subr.mxu0 %v3043
    %3124 = vmatpush1.msra.mxu0 %v3042
    %3125 = vmatprep.subr.mxu0 %v3046
    %3126 = vmatpush1.msra.mxu0 %v3045
    %3127 = vmatprep.subr.mxu0 %v3049
    %3128 = vmatpush1.msra.mxu0 %v3048
    %3129 = vmatprep.subr.mxu0 %v3052
    %3130 = vmatpush1.msra.mxu0 %v3051
    %3131 = vmatprep.subr.mxu0 %v3055
    %3132 = vmatpush1.msra.mxu0 %v3054
    %3133 = vmatprep.subr.mxu0 %v3058
    %3134 = vmatpush1.msra.mxu0 %v3057
    %3135 = vmatprep.subr.mxu0 %v3061
    %3136 = vmatpush1.msra.mxu0 %v3060
    %3137 = vmatprep.subr.mxu0 %v3064
    %3138 = vmatpush1.msra.mxu0 %v3063
    %3139 = vmatprep.subr.mxu0 %v3067
    %3140 = vmatpush1.msra.mxu0 %v3066
    %3141 = vmatprep.subr.mxu0 %v3070
    %3142 = vmatpush1.msra.mxu0 %v3069
    %3143 = vmatprep.subr.mxu0 %v3073
    %3144 = vmatpush1.msra.mxu0 %v3072
    %3145 = vmatprep.subr.mxu0 %v3076
    %3146 = vmatpush1.msra.mxu0 %v3075
    %3147 = vmatprep.subr.mxu0 %v3079
    %3148 = vmatpush1.msra.mxu0 %v3078
    %3149 = vmatprep.subr.mxu0 0.0
    %3150 = vmatpush1.msra.mxu0 0.0
    %3151 = vmatprep.subr.mxu0 0.0
    %3152 = vmatpush1.msra.mxu0 0.0
    %3153 = vmatprep.subr.mxu0 0.0
    %3154 = vmatpush1.msra.mxu0 0.0
    %3155 = vmatprep.subr.mxu0 0.0
    %3156 = vmatpush1.msra.mxu0 0.0
    %3157 = vmatprep.subr.mxu0 0.0
    %3158 = vmatpush1.msra.mxu0 0.0
    %3159 = vmatprep.subr.mxu0 0.0
    %3160 = vmatpush1.msra.mxu0 0.0
    %3161 = vmatprep.subr.mxu0 0.0
    %3162 = vmatpush1.msra.mxu0 0.0
    %3163 = vmatprep.mubr.f32.mxu0 %v3094
    %3164 = vmatmul.mubr.f32.gmra.mrb[0].mxu0 %v3002
    %v3165 = vpop.f32.mrb[0].mxu0
    %v3166 = vadd.f32 %v3086, %v3165
    %v3167 = vpop.f32.mrb[0].mxu0
    %v3168 = vadd.f32 %v3086, %v3167
    %3169 = vmatprep.mubr.f32.mxu0 %v3097
    %3170 = vmatmul.mubr.f32.gmra.mrb[0].mxu0 %v3004
    %v3171 = vpop.f32.mrb[0].mxu0
    %v3172 = vadd.f32 %v3091, %v3171
    %v3173 = vpop.f32.mrb[0].mxu0
    %v3174 = vadd.f32 %v3091, %v3173
    %3175 = vdwg.mxu0
    %3176 = vmatprep.subr.mxu0 0.0
    %3177 = vmatpush1.msra.mxu0 %v3008
    %3178 = vmatprep.subr.mxu0 0.0
    %3179 = vmatpush1.msra.mxu0 %v3011
    %3180 = vmatprep.subr.mxu0 0.0
    %3181 = vmatpush1.msra.mxu0 %v3014
    %3182 = vmatprep.subr.mxu0 0.0
    %3183 = vmatpush1.msra.mxu0 %v3017
    %3184 = vmatprep.subr.mxu0 0.0
    %3185 = vmatpush1.msra.mxu0 %v3020
    %3186 = vmatprep.subr.mxu0 0.0
    %3187 = vmatpush1.msra.mxu0 %v3023
    %3188 = vmatprep.subr.mxu0 0.0
    %3189 = vmatpush1.msra.mxu0 %v3026
    %3190 = vmatprep.subr.mxu0 0.0
    %3191 = vmatpush1.msra.mxu0 %v3029
    %3192 = vmatprep.subr.mxu0 0.0
    %3193 = vmatpush1.msra.mxu0 %v3032
    %3194 = vmatprep.subr.mxu0 0.0
    %3195 = vmatpush1.msra.mxu0 %v3035
    %3196 = vmatprep.subr.mxu0 0.0
    %3197 = vmatpush1.msra.mxu0 %v3038
    %3198 = vmatprep.subr.mxu0 0.0
    %3199 = vmatpush1.msra.mxu0 %v3041
    %3200 = vmatprep.subr.mxu0 0.0
    %3201 = vmatpush1.msra.mxu0 %v3044
    %3202 = vmatprep.subr.mxu0 0.0
    %3203 = vmatpush1.msra.mxu0 %v3047
    %3204 = vmatprep.subr.mxu0 0.0
    %3205 = vmatpush1.msra.mxu0 %v3050
    %3206 = vmatprep.subr.mxu0 0.0
    %3207 = vmatpush1.msra.mxu0 %v3053
    %3208 = vmatprep.subr.mxu0 0.0
    %3209 = vmatpush1.msra.mxu0 %v3056
    %3210 = vmatprep.subr.mxu0 0.0
    %3211 = vmatpush1.msra.mxu0 %v3059
    %3212 = vmatprep.subr.mxu0 0.0
    %3213 = vmatpush1.msra.mxu0 %v3062
    %3214 = vmatprep.subr.mxu0 0.0
    %3215 = vmatpush1.msra.mxu0 %v3065
    %3216 = vmatprep.subr.mxu0 0.0
    %3217 = vmatpush1.msra.mxu0 %v3068
    %3218 = vmatprep.subr.mxu0 0.0
    %3219 = vmatpush1.msra.mxu0 %v3071
    %3220 = vmatprep.subr.mxu0 0.0
    %3221 = vmatpush1.msra.mxu0 %v3074
    %3222 = vmatprep.subr.mxu0 0.0
    %3223 = vmatpush1.msra.mxu0 %v3077
    %3224 = vmatprep.subr.mxu0 0.0
    %3225 = vmatpush1.msra.mxu0 %v3080
    %3226 = vmatprep.subr.mxu0 0.0
    %3227 = vmatpush1.msra.mxu0 0.0
    %3228 = vmatprep.subr.mxu0 0.0
    %3229 = vmatpush1.msra.mxu0 0.0
    %3230 = vmatprep.subr.mxu0 0.0
    %3231 = vmatpush1.msra.mxu0 0.0
    %3232 = vmatprep.subr.mxu0 0.0
    %3233 = vmatpush1.msra.mxu0 0.0
    %3234 = vmatprep.subr.mxu0 0.0
    %3235 = vmatpush1.msra.mxu0 0.0
    %3236 = vmatprep.subr.mxu0 0.0
    %3237 = vmatpush1.msra.mxu0 0.0
    %3238 = vmatprep.subr.mxu0 0.0
    %3239 = vmatpush1.msra.mxu0 0.0
    %3240 = vmatprep.mubr.f32.mxu0 %v3094
    %3241 = vmatmul.mubr.f32.gmra.mrb[0].mxu0 %v3002
    %v3242 = vpop.f32.mrb[0].mxu0
    %v3243 = vadd.f32 %v3086, %v3242
    %v3244 = vpop.f32.mrb[0].mxu0
    %3245 = vmatprep.mubr.f32.mxu0 %v3097
    %3246 = vmatmul.mubr.f32.gmra.mrb[0].mxu0 %v3004
    %v3247 = vpop.f32.mrb[0].mxu0
    %v3248 = vadd.f32 %v3091, %v3247
    %v3249 = vpop.f32.mrb[0].mxu0
    %3250 = vdwg.mxu0
    %v3251 = vmax.f32 %v3166, 0.0
    %v3252 = vmax.f32 %v3168, 0.0
    %v3253 = vmax.f32 %v3243, 0.0
    %v3254 = vmax.f32 %v3172, 0.0
    %v3255 = vmax.f32 %v3174, 0.0
    %v3256 = vmax.f32 %v3248, 0.0
    %3257 = vst [vmem:[#allocation6] sm:$0xff] %v3251
    %3258 = vst [vmem:[#allocation6 + $0x8] sm:$0xff] %v3252
    %3259 = vst [vmem:[#allocation6 + $0x10] sm:$0xff] %v3253
    %3260 = vst [vmem:[#allocation6 + $0x18] sm:$0xff] %v3254
    %3261 = vst [vmem:[#allocation6 + $0x20] sm:$0xff] %v3255
    %3262 = vst [vmem:[#allocation6 + $0x28] sm:$0xff] %v3256
    %3263 = vst [vmem:[#allocation7] sm:$0xff] 0.0
    %3264 = vst [vmem:[#allocation7 + $0x8] sm:$0xff] 0.0
    %v3265 = vld [vmem:[#allocation6] sm:$0xff]
    %v3266 = vld [vmem:[#allocation6 + $0x8] sm:$0xff]
    %v3267 = vld [vmem:[#allocation6 + $0x18] sm:$0xff]
    %v3268 = vld [vmem:[#allocation6 + $0x20] sm:$0xff]
    %3273 = vrot.lane.b32.xlu0 %v3265, 127
    %v3274 = vpop.permute.xlu0 %3273
    %3275 = vrot.lane.b32.xlu0 %v3266, 127
    %v3276 = vpop.permute.xlu0 %3275
    %3277 = vrot.lane.b32.xlu0 %v3267, 127
    %v3278 = vpop.permute.xlu0 %3277
    %3279 = vrot.lane.b32.xlu0 %v3268, 127
    %v3280 = vpop.permute.xlu0 %3279
    %v3281 = vsel %vm68, %v3274, %v3276
    %v3282 = vsel %vm68, %v3278, %v3280
    %v3287 = vmax.f32 %v3265, %v3281
    %v3288 = vmax.f32 %v3266, %v3276
    %v3289 = vmax.f32 %v3267, %v3282
    %v3290 = vmax.f32 %v3268, %v3280
    %3295 = vrot.lane.b32.xlu0 %v3287, 116
    %v3296 = vpop.permute.xlu0 %3295
    %3297 = vrot.lane.b32.xlu0 %v3288, 116
    %v3298 = vpop.permute.xlu0 %3297
    %3299 = vrot.lane.b32.xlu0 %v3289, 116
    %v3300 = vpop.permute.xlu0 %3299
    %3301 = vrot.lane.b32.xlu0 %v3290, 116
    %v3302 = vpop.permute.xlu0 %3301
    %v3303 = vsel %vm2500, %v3296, %v3298
    %v3304 = vsel %vm2500, %v3300, %v3302
    %v3309 = vmax.f32 %v3287, %v3303
    %v3310 = vmax.f32 %v3288, %v3298
    %v3311 = vmax.f32 %v3289, %v3304
    %v3312 = vmax.f32 %v3290, %v3302
    %v3313 = vld [vmem:[%s6] sm:$0xff]
    %v3314 = vld [vmem:[%s6 + $0x8] sm:$0xff]
    %v3315 = vld [vmem:[%s6 + $0x10] sm:$0xff]
    %v3316 = vld [vmem:[%s6 + $0x18] sm:$0xff]
    %v3317 = vld [vmem:[%s6 + $0x20] sm:$0xff]
    %v3318 = vld [vmem:[%s6 + $0x28] sm:$0xff]
    %v3319 = vld [vmem:[%s6 + $0x30] sm:$0xff]
    %v3320 = vld [vmem:[%s6 + $0x38] sm:$0xff]
    %v3321 = vld [vmem:[%s6 + $0x40] sm:$0xff]
    %v3322 = vld [vmem:[%s6 + $0x48] sm:$0xff]
    %v3323 = vld [vmem:[%s6 + $0x50] sm:$0xff]
    %v3324 = vld [vmem:[%s6 + $0x58] sm:$0xff]
    %v3325 = vld [vmem:[%s6 + $0x60] sm:$0xff]
    %v3326 = vld [vmem:[%s6 + $0x68] sm:$0xff]
    %v3327 = vld [vmem:[%s6 + $0x70] sm:$0xff]
    %v3328 = vld [vmem:[%s6 + $0x78] sm:$0xff]
    %v3329 = vld [vmem:[%s6 + $0x80] sm:$0xff]
    %v3330 = vld [vmem:[%s6 + $0x88] sm:$0xff]
    %v3332 = vsel %vm486, %v3310, 0
    %v3335 = vsel %vm486, %v3312, 0
    %3337 = vmatprep.subr.mxu0 0.0
    %3338 = vmatpush1.msra.mxu0 %v3313
    %3339 = vmatprep.subr.mxu0 0.0
    %3340 = vmatpush1.msra.mxu0 %v3314
    %3341 = vmatprep.subr.mxu0 0.0
    %3342 = vmatpush1.msra.mxu0 %v3315
    %3343 = vmatprep.subr.mxu0 0.0
    %3344 = vmatpush1.msra.mxu0 %v3316
    %3345 = vmatprep.subr.mxu0 0.0
    %3346 = vmatpush1.msra.mxu0 %v3317
    %3347 = vmatprep.subr.mxu0 0.0
    %3348 = vmatpush1.msra.mxu0 %v3318
    %3349 = vmatprep.subr.mxu0 0.0
    %3350 = vmatpush1.msra.mxu0 %v3319
    %3351 = vmatprep.subr.mxu0 0.0
    %3352 = vmatpush1.msra.mxu0 %v3320
    %3353 = vmatprep.subr.mxu0 0.0
    %3354 = vmatpush1.msra.mxu0 %v3321
    %3355 = vmatprep.subr.mxu0 0.0
    %3356 = vmatpush1.msra.mxu0 %v3322
    %3357 = vmatprep.subr.mxu0 0.0
    %3358 = vmatpush1.msra.mxu0 %v3323
    %3359 = vmatprep.subr.mxu0 0.0
    %3360 = vmatpush1.msra.mxu0 %v3324
    %3361 = vmatprep.subr.mxu0 0.0
    %3362 = vmatpush1.msra.mxu0 %v3325
    %3363 = vmatprep.subr.mxu0 0.0
    %3364 = vmatpush1.msra.mxu0 %v3326
    %3365 = vmatprep.subr.mxu0 0.0
    %3366 = vmatpush1.msra.mxu0 %v3327
    %3367 = vmatprep.subr.mxu0 0.0
    %3368 = vmatpush1.msra.mxu0 %v3328
    %3369 = vmatprep.subr.mxu0 0.0
    %3370 = vmatpush1.msra.mxu0 %v3329
    %3371 = vmatprep.subr.mxu0 0.0
    %3372 = vmatpush1.msra.mxu0 %v3330
    %3373 = vmatprep.subr.mxu0 0.0
    %3374 = vmatpush1.msra.mxu0 0.0
    %3375 = vmatprep.subr.mxu0 0.0
    %3376 = vmatpush1.msra.mxu0 0.0
    %3377 = vmatprep.subr.mxu0 0.0
    %3378 = vmatpush1.msra.mxu0 0.0
    %3379 = vmatprep.subr.mxu0 0.0
    %3380 = vmatpush1.msra.mxu0 0.0
    %3381 = vmatprep.subr.mxu0 0.0
    %3382 = vmatpush1.msra.mxu0 0.0
    %3383 = vmatprep.subr.mxu0 0.0
    %3384 = vmatpush1.msra.mxu0 0.0
    %3385 = vmatprep.subr.mxu0 0.0
    %3386 = vmatpush1.msra.mxu0 0.0
    %3387 = vmatprep.subr.mxu0 0.0
    %3388 = vmatpush1.msra.mxu0 0.0
    %3389 = vmatprep.subr.mxu0 0.0
    %3390 = vmatpush1.msra.mxu0 0.0
    %3391 = vmatprep.subr.mxu0 0.0
    %3392 = vmatpush1.msra.mxu0 0.0
    %3393 = vmatprep.subr.mxu0 0.0
    %3394 = vmatpush1.msra.mxu0 0.0
    %3395 = vmatprep.subr.mxu0 0.0
    %3396 = vmatpush1.msra.mxu0 0.0
    %3397 = vmatprep.subr.mxu0 0.0
    %3398 = vmatpush1.msra.mxu0 0.0
    %3399 = vmatprep.subr.mxu0 0.0
    %3400 = vmatpush1.msra.mxu0 0.0
    %3401 = vmatprep.mubr.f32.mxu0 %v3332
    %3402 = vmatmul.mubr.f32.gmra.mrb[0].mxu0 %v3309
    %v3403 = vpop.f32.mrb[0].mxu0
    %v3404 = vadd.f32 0.0, %v3403
    %v3405 = vpop.f32.mrb[0].mxu0
    %3406 = vmatprep.mubr.f32.mxu0 %v3335
    %3407 = vmatmul.mubr.f32.gmra.mrb[0].mxu0 %v3311
    %v3408 = vpop.f32.mrb[0].mxu0
    %v3409 = vadd.f32 0.0, %v3408
    %v3410 = vpop.f32.mrb[0].mxu0
    %3411 = vdwg.mxu0
    %vm3412 = vcmask 122880
    %3413 = vst.msk [vmem:[#allocation7] sm:$0x1] %vm3412, %v3404
    %v3415 = vrot.slane %v3404, 1
    %3416 = vrot.lane.b32.xlu0 %v3415, 16
    %v3417 = vpop.permute.xlu0 %3416
    %vm3419 = vcmask 254080
    %3420 = vst.msk [vmem:[#allocation7] sm:$0x1] %vm3419, %v3417
    %v3421 = vrot.slane %v3404, 2
    %3422 = vrot.lane.b32.xlu0 %v3421, 32
    %v3423 = vpop.permute.xlu0 %3422
    %vm3425 = vcmask 385280
    %3426 = vst.msk [vmem:[#allocation7] sm:$0x1] %vm3425, %v3423
    %v3427 = vrot.slane %v3404, 3
    %3428 = vrot.lane.b32.xlu0 %v3427, 48
    %v3429 = vpop.permute.xlu0 %3428
    %vm3431 = vcmask 516480
    %3432 = vst.msk [vmem:[#allocation7] sm:$0x1] %vm3431, %v3429
    %v3433 = vrot.slane %v3404, 4
    %3434 = vrot.lane.b32.xlu0 %v3433, 64
    %v3435 = vpop.permute.xlu0 %3434
    %vm3437 = vcmask 647680
    %3438 = vst.msk [vmem:[#allocation7] sm:$0x1] %vm3437, %v3435
    %v3439 = vrot.slane %v3404, 5
    %3440 = vrot.lane.b32.xlu0 %v3439, 80
    %v3441 = vpop.permute.xlu0 %3440
    %vm3443 = vcmask 778880
    %3444 = vst.msk [vmem:[#allocation7] sm:$0x1] %vm3443, %v3441
    %v3445 = vrot.slane %v3404, 6
    %3446 = vrot.lane.b32.xlu0 %v3445, 96
    %v3447 = vpop.permute.xlu0 %3446
    %vm3449 = vcmask 910080
    %3450 = vst.msk [vmem:[#allocation7] sm:$0x1] %vm3449, %v3447
    %v3451 = vrot.slane %v3404, 7
    %3452 = vrot.lane.b32.xlu0 %v3451, 112
    %v3453 = vpop.permute.xlu0 %3452
    %vm3455 = vcmask 1041280
    %3456 = vst.msk [vmem:[#allocation7] sm:$0x1] %vm3455, %v3453
    %3457 = vst.msk [vmem:[#allocation7 + $0x8] sm:$0x1] %vm3412, %v3409
    %v3459 = vrot.slane %v3409, 1
    %3460 = vrot.lane.b32.xlu0 %v3459, 16
    %v3461 = vpop.permute.xlu0 %3460
    %3463 = vst.msk [vmem:[#allocation7 + $0x8] sm:$0x1] %vm3419, %v3461
    %v3464 = vrot.slane %v3409, 2
    %3465 = vrot.lane.b32.xlu0 %v3464, 32
    %v3466 = vpop.permute.xlu0 %3465
    %3468 = vst.msk [vmem:[#allocation7 + $0x8] sm:$0x1] %vm3425, %v3466
    %v3469 = vrot.slane %v3409, 3
    %3470 = vrot.lane.b32.xlu0 %v3469, 48
    %v3471 = vpop.permute.xlu0 %3470
    %3473 = vst.msk [vmem:[#allocation7 + $0x8] sm:$0x1] %vm3431, %v3471
    %v3474 = vrot.slane %v3409, 4
    %3475 = vrot.lane.b32.xlu0 %v3474, 64
    %v3476 = vpop.permute.xlu0 %3475
    %3478 = vst.msk [vmem:[#allocation7 + $0x8] sm:$0x1] %vm3437, %v3476
    %v3479 = vrot.slane %v3409, 5
    %3480 = vrot.lane.b32.xlu0 %v3479, 80
    %v3481 = vpop.permute.xlu0 %3480
    %3483 = vst.msk [vmem:[#allocation7 + $0x8] sm:$0x1] %vm3443, %v3481
    %v3484 = vrot.slane %v3409, 6
    %3485 = vrot.lane.b32.xlu0 %v3484, 96
    %v3486 = vpop.permute.xlu0 %3485
    %3488 = vst.msk [vmem:[#allocation7 + $0x8] sm:$0x1] %vm3449, %v3486
    %v3489 = vrot.slane %v3409, 7
    %3490 = vrot.lane.b32.xlu0 %v3489, 112
    %v3491 = vpop.permute.xlu0 %3490
    %3493 = vst.msk [vmem:[#allocation7 + $0x8] sm:$0x1] %vm3455, %v3491
    %v3494 = vld [vmem:[#allocation6 + $0x8] sm:$0xff]
    %v3495 = vld [vmem:[#allocation6 + $0x10] sm:$0xff]
    %v3496 = vld [vmem:[#allocation6 + $0x20] sm:$0xff]
    %v3497 = vld [vmem:[#allocation6 + $0x28] sm:$0xff]
    %3502 = vrot.lane.b32.xlu0 %v3494, 127
    %v3503 = vpop.permute.xlu0 %3502
    %3504 = vrot.lane.b32.xlu0 %v3495, 127
    %v3505 = vpop.permute.xlu0 %3504
    %3506 = vrot.lane.b32.xlu0 %v3496, 127
    %v3507 = vpop.permute.xlu0 %3506
    %3508 = vrot.lane.b32.xlu0 %v3497, 127
    %v3509 = vpop.permute.xlu0 %3508
    %v3510 = vsel %vm68, %v3503, %v3505
    %v3511 = vsel %vm68, %v3507, %v3509
    %v3516 = vmax.f32 %v3494, %v3510
    %v3517 = vmax.f32 %v3495, %v3505
    %v3518 = vmax.f32 %v3496, %v3511
    %v3519 = vmax.f32 %v3497, %v3509
    %3524 = vrot.lane.b32.xlu0 %v3516, 116
    %v3525 = vpop.permute.xlu0 %3524
    %3526 = vrot.lane.b32.xlu0 %v3517, 116
    %v3527 = vpop.permute.xlu0 %3526
    %3528 = vrot.lane.b32.xlu0 %v3518, 116
    %v3529 = vpop.permute.xlu0 %3528
    %3530 = vrot.lane.b32.xlu0 %v3519, 116
    %v3531 = vpop.permute.xlu0 %3530
    %v3532 = vsel %vm2500, %v3525, %v3527
    %v3533 = vsel %vm2500, %v3529, %v3531
    %v3538 = vmax.f32 %v3516, %v3532
    %v3539 = vmax.f32 %v3517, %v3527
    %v3540 = vmax.f32 %v3518, %v3533
    %v3541 = vmax.f32 %v3519, %v3531
    %v3542 = vld [vmem:[%s6] sm:$0xff]
    %v3543 = vld [vmem:[%s6 + $0x8] sm:$0xff]
    %v3544 = vld [vmem:[%s6 + $0x10] sm:$0xff]
    %v3545 = vld [vmem:[%s6 + $0x18] sm:$0xff]
    %v3546 = vld [vmem:[%s6 + $0x20] sm:$0xff]
    %v3547 = vld [vmem:[%s6 + $0x28] sm:$0xff]
    %v3548 = vld [vmem:[%s6 + $0x30] sm:$0xff]
    %v3549 = vld [vmem:[%s6 + $0x38] sm:$0xff]
    %v3550 = vld [vmem:[%s6 + $0x40] sm:$0xff]
    %v3551 = vld [vmem:[%s6 + $0x48] sm:$0xff]
    %v3552 = vld [vmem:[%s6 + $0x50] sm:$0xff]
    %v3553 = vld [vmem:[%s6 + $0x58] sm:$0xff]
    %v3554 = vld [vmem:[%s6 + $0x60] sm:$0xff]
    %v3555 = vld [vmem:[%s6 + $0x68] sm:$0xff]
    %v3556 = vld [vmem:[%s6 + $0x70] sm:$0xff]
    %v3557 = vld [vmem:[%s6 + $0x78] sm:$0xff]
    %v3558 = vld [vmem:[%s6 + $0x80] sm:$0xff]
    %v3559 = vld [vmem:[%s6 + $0x88] sm:$0xff]
    %3564 = vrot.lane.b32.xlu0 %v3538, 112
    %v3565 = vpop.permute.xlu0 %3564
    %3566 = vrot.lane.b32.xlu0 %v3539, 112
    %v3567 = vpop.permute.xlu0 %3566
    %3568 = vrot.lane.b32.xlu0 %v3540, 112
    %v3569 = vpop.permute.xlu0 %3568
    %3570 = vrot.lane.b32.xlu0 %v3541, 112
    %v3571 = vpop.permute.xlu0 %3570
    %v3572 = vsel %vm2067, %v3565, %v3567
    %v3573 = vsel %vm2067, %v3569, %v3571
    %v3576 = vsel %vm486, %v3567, 0
    %v3578 = vsel %vm486, %v3571, 0
    %3580 = vmatprep.subr.mxu0 0.0
    %3581 = vmatpush1.msra.mxu0 %v3542
    %3582 = vmatprep.subr.mxu0 0.0
    %3583 = vmatpush1.msra.mxu0 %v3543
    %3584 = vmatprep.subr.mxu0 0.0
    %3585 = vmatpush1.msra.mxu0 %v3544
    %3586 = vmatprep.subr.mxu0 0.0
    %3587 = vmatpush1.msra.mxu0 %v3545
    %3588 = vmatprep.subr.mxu0 0.0
    %3589 = vmatpush1.msra.mxu0 %v3546
    %3590 = vmatprep.subr.mxu0 0.0
    %3591 = vmatpush1.msra.mxu0 %v3547
    %3592 = vmatprep.subr.mxu0 0.0
    %3593 = vmatpush1.msra.mxu0 %v3548
    %3594 = vmatprep.subr.mxu0 0.0
    %3595 = vmatpush1.msra.mxu0 %v3549
    %3596 = vmatprep.subr.mxu0 0.0
    %3597 = vmatpush1.msra.mxu0 %v3550
    %3598 = vmatprep.subr.mxu0 0.0
    %3599 = vmatpush1.msra.mxu0 %v3551
    %3600 = vmatprep.subr.mxu0 0.0
    %3601 = vmatpush1.msra.mxu0 %v3552
    %3602 = vmatprep.subr.mxu0 0.0
    %3603 = vmatpush1.msra.mxu0 %v3553
    %3604 = vmatprep.subr.mxu0 0.0
    %3605 = vmatpush1.msra.mxu0 %v3554
    %3606 = vmatprep.subr.mxu0 0.0
    %3607 = vmatpush1.msra.mxu0 %v3555
    %3608 = vmatprep.subr.mxu0 0.0
    %3609 = vmatpush1.msra.mxu0 %v3556
    %3610 = vmatprep.subr.mxu0 0.0
    %3611 = vmatpush1.msra.mxu0 %v3557
    %3612 = vmatprep.subr.mxu0 0.0
    %3613 = vmatpush1.msra.mxu0 %v3558
    %3614 = vmatprep.subr.mxu0 0.0
    %3615 = vmatpush1.msra.mxu0 %v3559
    %3616 = vmatprep.subr.mxu0 0.0
    %3617 = vmatpush1.msra.mxu0 0.0
    %3618 = vmatprep.subr.mxu0 0.0
    %3619 = vmatpush1.msra.mxu0 0.0
    %3620 = vmatprep.subr.mxu0 0.0
    %3621 = vmatpush1.msra.mxu0 0.0
    %3622 = vmatprep.subr.mxu0 0.0
    %3623 = vmatpush1.msra.mxu0 0.0
    %3624 = vmatprep.subr.mxu0 0.0
    %3625 = vmatpush1.msra.mxu0 0.0
    %3626 = vmatprep.subr.mxu0 0.0
    %3627 = vmatpush1.msra.mxu0 0.0
    %3628 = vmatprep.subr.mxu0 0.0
    %3629 = vmatpush1.msra.mxu0 0.0
    %3630 = vmatprep.subr.mxu0 0.0
    %3631 = vmatpush1.msra.mxu0 0.0
    %3632 = vmatprep.subr.mxu0 0.0
    %3633 = vmatpush1.msra.mxu0 0.0
    %3634 = vmatprep.subr.mxu0 0.0
    %3635 = vmatpush1.msra.mxu0 0.0
    %3636 = vmatprep.subr.mxu0 0.0
    %3637 = vmatpush1.msra.mxu0 0.0
    %3638 = vmatprep.subr.mxu0 0.0
    %3639 = vmatpush1.msra.mxu0 0.0
    %3640 = vmatprep.subr.mxu0 0.0
    %3641 = vmatpush1.msra.mxu0 0.0
    %3642 = vmatprep.subr.mxu0 0.0
    %3643 = vmatpush1.msra.mxu0 0.0
    %3644 = vmatprep.mubr.f32.mxu0 %v3576
    %3645 = vmatmul.mubr.f32.gmra.mrb[0].mxu0 %v3572
    %v3646 = vpop.f32.mrb[0].mxu0
    %v3647 = vadd.f32 0.0, %v3646
    %v3648 = vpop.f32.mrb[0].mxu0
    %3649 = vmatprep.mubr.f32.mxu0 %v3578
    %3650 = vmatmul.mubr.f32.gmra.mrb[0].mxu0 %v3573
    %v3651 = vpop.f32.mrb[0].mxu0
    %v3652 = vadd.f32 0.0, %v3651
    %v3653 = vpop.f32.mrb[0].mxu0
    %3654 = vdwg.mxu0
    %3655 = vst.msk [vmem:[#allocation7 + $0x1] sm:$0x1] %vm3412, %v3647
    %v3657 = vrot.slane %v3647, 1
    %3658 = vrot.lane.b32.xlu0 %v3657, 16
    %v3659 = vpop.permute.xlu0 %3658
    %3661 = vst.msk [vmem:[#allocation7 + $0x1] sm:$0x1] %vm3419, %v3659
    %v3662 = vrot.slane %v3647, 2
    %3663 = vrot.lane.b32.xlu0 %v3662, 32
    %v3664 = vpop.permute.xlu0 %3663
    %3666 = vst.msk [vmem:[#allocation7 + $0x1] sm:$0x1] %vm3425, %v3664
    %v3667 = vrot.slane %v3647, 3
    %3668 = vrot.lane.b32.xlu0 %v3667, 48
    %v3669 = vpop.permute.xlu0 %3668
    %3671 = vst.msk [vmem:[#allocation7 + $0x1] sm:$0x1] %vm3431, %v3669
    %v3672 = vrot.slane %v3647, 4
    %3673 = vrot.lane.b32.xlu0 %v3672, 64
    %v3674 = vpop.permute.xlu0 %3673
    %3676 = vst.msk [vmem:[#allocation7 + $0x1] sm:$0x1] %vm3437, %v3674
    %v3677 = vrot.slane %v3647, 5
    %3678 = vrot.lane.b32.xlu0 %v3677, 80
    %v3679 = vpop.permute.xlu0 %3678
    %3681 = vst.msk [vmem:[#allocation7 + $0x1] sm:$0x1] %vm3443, %v3679
    %v3682 = vrot.slane %v3647, 6
    %3683 = vrot.lane.b32.xlu0 %v3682, 96
    %v3684 = vpop.permute.xlu0 %3683
    %3686 = vst.msk [vmem:[#allocation7 + $0x1] sm:$0x1] %vm3449, %v3684
    %v3687 = vrot.slane %v3647, 7
    %3688 = vrot.lane.b32.xlu0 %v3687, 112
    %v3689 = vpop.permute.xlu0 %3688
    %3691 = vst.msk [vmem:[#allocation7 + $0x1] sm:$0x1] %vm3455, %v3689
    %3692 = vst.msk [vmem:[#allocation7 + $0x9] sm:$0x1] %vm3412, %v3652
    %v3694 = vrot.slane %v3652, 1
    %3695 = vrot.lane.b32.xlu0 %v3694, 16
    %v3696 = vpop.permute.xlu0 %3695
    %3698 = vst.msk [vmem:[#allocation7 + $0x9] sm:$0x1] %vm3419, %v3696
    %v3699 = vrot.slane %v3652, 2
    %3700 = vrot.lane.b32.xlu0 %v3699, 32
    %v3701 = vpop.permute.xlu0 %3700
    %3703 = vst.msk [vmem:[#allocation7 + $0x9] sm:$0x1] %vm3425, %v3701
    %v3704 = vrot.slane %v3652, 3
    %3705 = vrot.lane.b32.xlu0 %v3704, 48
    %v3706 = vpop.permute.xlu0 %3705
    %3708 = vst.msk [vmem:[#allocation7 + $0x9] sm:$0x1] %vm3431, %v3706
    %v3709 = vrot.slane %v3652, 4
    %3710 = vrot.lane.b32.xlu0 %v3709, 64
    %v3711 = vpop.permute.xlu0 %3710
    %3713 = vst.msk [vmem:[#allocation7 + $0x9] sm:$0x1] %vm3437, %v3711
    %v3714 = vrot.slane %v3652, 5
    %3715 = vrot.lane.b32.xlu0 %v3714, 80
    %v3716 = vpop.permute.xlu0 %3715
    %3718 = vst.msk [vmem:[#allocation7 + $0x9] sm:$0x1] %vm3443, %v3716
    %v3719 = vrot.slane %v3652, 6
    %3720 = vrot.lane.b32.xlu0 %v3719, 96
    %v3721 = vpop.permute.xlu0 %3720
    %3723 = vst.msk [vmem:[#allocation7 + $0x9] sm:$0x1] %vm3449, %v3721
    %v3724 = vrot.slane %v3652, 7
    %3725 = vrot.lane.b32.xlu0 %v3724, 112
    %v3726 = vpop.permute.xlu0 %3725
    %3728 = vst.msk [vmem:[#allocation7 + $0x9] sm:$0x1] %vm3455, %v3726
    %v3729 = vld [vmem:[#allocation7] sm:$0xff]
    %v3730 = vld [vmem:[#allocation7 + $0x8] sm:$0xff]
    %v3731 = vld [vmem:[%s7] sm:$0xff]
    %v3732 = vld [vmem:[%s7 + $0x8] sm:$0xff]
    %v3733 = vld [vmem:[%s7 + $0x10] sm:$0xff]
    %v3734 = vld [vmem:[%s7 + $0x18] sm:$0xff]
    %v3735 = vld [vmem:[%s7 + $0x20] sm:$0xff]
    %v3736 = vld [vmem:[%s7 + $0x28] sm:$0xff]
    %v3737 = vld [vmem:[%s7 + $0x30] sm:$0xff]
    %v3738 = vld [vmem:[%s7 + $0x38] sm:$0xff]
    %v3739 = vld [vmem:[%s7 + $0x40] sm:$0xff]
    %v3740 = vld [vmem:[%s7 + $0x48] sm:$0xff]
    %v3741 = vld [vmem:[%s7 + $0x50] sm:$0xff]
    %v3742 = vld [vmem:[%s7 + $0x58] sm:$0xff]
    %v3743 = vld [vmem:[%s7 + $0x60] sm:$0xff]
    %v3744 = vld [vmem:[%s7 + $0x68] sm:$0xff]
    %v3745 = vld [vmem:[%s7 + $0x70] sm:$0xff]
    %v3746 = vld [vmem:[%s7 + $0x78] sm:$0xff]
    %v3747 = vld [vmem:[%s7 + $0x80] sm:$0xff]
    %v3748 = vld [vmem:[%s7 + $0x88] sm:$0xff]
    %v3749 = vld [vmem:[%s7 + $0x90] sm:$0xff]
    %v3750 = vld [vmem:[%s7 + $0x98] sm:$0xff]
    %v3751 = vld [vmem:[%s7 + $0xa0] sm:$0xff]
    %v3752 = vld [vmem:[%s7 + $0xa8] sm:$0xff]
    %v3753 = vld [vmem:[%s7 + $0xb0] sm:$0xff]
    %v3754 = vld [vmem:[%s7 + $0xb8] sm:$0xff]
    %v3755 = vld [vmem:[%s7 + $0xc0] sm:$0xff]
    %v3756 = vld [vmem:[%s7 + $0xc8] sm:$0xff]
    %v3757 = vld [vmem:[%s7 + $0xd0] sm:$0xff]
    %v3758 = vld [vmem:[%s7 + $0xd8] sm:$0xff]
    %v3759 = vld [vmem:[%s7 + $0xe0] sm:$0xff]
    %v3760 = vld [vmem:[%s7 + $0xe8] sm:$0xff]
    %v3761 = vld [vmem:[%s7 + $0xf0] sm:$0xff]
    %v3762 = vld [vmem:[%s7 + $0xf8] sm:$0xff]
    %v3763 = vld [vmem:[%s8] sm:$0x1]
    %v3765 = vlaneseq
    %v3766 = vshrl.u32 %v3765, 7
    %v3767 = vsub.s32 0, %v3766
    %v3768 = vrot.slane %v3763, %v3767
    %3770 = vmatprep.subr.mxu0 0.0
    %3771 = vmatpush1.msra.mxu0 %v3731
    %3772 = vmatprep.subr.mxu0 0.0
    %3773 = vmatpush1.msra.mxu0 %v3732
    %3774 = vmatprep.subr.mxu0 0.0
    %3775 = vmatpush1.msra.mxu0 %v3733
    %3776 = vmatprep.subr.mxu0 0.0
    %3777 = vmatpush1.msra.mxu0 %v3734
    %3778 = vmatprep.subr.mxu0 0.0
    %3779 = vmatpush1.msra.mxu0 %v3735
    %3780 = vmatprep.subr.mxu0 0.0
    %3781 = vmatpush1.msra.mxu0 %v3736
    %3782 = vmatprep.subr.mxu0 0.0
    %3783 = vmatpush1.msra.mxu0 %v3737
    %3784 = vmatprep.subr.mxu0 0.0
    %3785 = vmatpush1.msra.mxu0 %v3738
    %3786 = vmatprep.subr.mxu0 0.0
    %3787 = vmatpush1.msra.mxu0 %v3739
    %3788 = vmatprep.subr.mxu0 0.0
    %3789 = vmatpush1.msra.mxu0 %v3740
    %3790 = vmatprep.subr.mxu0 0.0
    %3791 = vmatpush1.msra.mxu0 %v3741
    %3792 = vmatprep.subr.mxu0 0.0
    %3793 = vmatpush1.msra.mxu0 %v3742
    %3794 = vmatprep.subr.mxu0 0.0
    %3795 = vmatpush1.msra.mxu0 %v3743
    %3796 = vmatprep.subr.mxu0 0.0
    %3797 = vmatpush1.msra.mxu0 %v3744
    %3798 = vmatprep.subr.mxu0 0.0
    %3799 = vmatpush1.msra.mxu0 %v3745
    %3800 = vmatprep.subr.mxu0 0.0
    %3801 = vmatpush1.msra.mxu0 %v3746
    %3802 = vmatprep.subr.mxu0 0.0
    %3803 = vmatpush1.msra.mxu0 %v3747
    %3804 = vmatprep.subr.mxu0 0.0
    %3805 = vmatpush1.msra.mxu0 %v3748
    %3806 = vmatprep.subr.mxu0 0.0
    %3807 = vmatpush1.msra.mxu0 %v3749
    %3808 = vmatprep.subr.mxu0 0.0
    %3809 = vmatpush1.msra.mxu0 %v3750
    %3810 = vmatprep.subr.mxu0 0.0
    %3811 = vmatpush1.msra.mxu0 %v3751
    %3812 = vmatprep.subr.mxu0 0.0
    %3813 = vmatpush1.msra.mxu0 %v3752
    %3814 = vmatprep.subr.mxu0 0.0
    %3815 = vmatpush1.msra.mxu0 %v3753
    %3816 = vmatprep.subr.mxu0 0.0
    %3817 = vmatpush1.msra.mxu0 %v3754
    %3818 = vmatprep.subr.mxu0 0.0
    %3819 = vmatpush1.msra.mxu0 %v3755
    %3820 = vmatprep.subr.mxu0 0.0
    %3821 = vmatpush1.msra.mxu0 %v3756
    %3822 = vmatprep.subr.mxu0 0.0
    %3823 = vmatpush1.msra.mxu0 %v3757
    %3824 = vmatprep.subr.mxu0 0.0
    %3825 = vmatpush1.msra.mxu0 %v3758
    %3826 = vmatprep.subr.mxu0 0.0
    %3827 = vmatpush1.msra.mxu0 %v3759
    %3828 = vmatprep.subr.mxu0 0.0
    %3829 = vmatpush1.msra.mxu0 %v3760
    %3830 = vmatprep.subr.mxu0 0.0
    %3831 = vmatpush1.msra.mxu0 %v3761
    %3832 = vmatprep.subr.mxu0 0.0
    %3833 = vmatpush1.msra.mxu0 %v3762
    %3834 = vmatprep.mubr.f32.mxu0 %v3730
    %3835 = vmatmul.mubr.f32.gmra.mrb[0].mxu0 %v3729
    %v3836 = vpop.f32.mrb[0].mxu0
    %v3837 = vadd.f32 %v3768, %v3836
    %v3838 = vpop.f32.mrb[0].mxu0
    %3839 = vdwg.mxu0
    %v3840 = vmax.f32 %v3837, 0.0
    %v3841 = vld [vmem:[%s9] sm:$0xff]
    %v3842 = vld [vmem:[%s9 + $0x8] sm:$0xff]
    %v3843 = vld [vmem:[%s9 + $0x10] sm:$0xff]
    %v3844 = vld [vmem:[%s9 + $0x18] sm:$0xff]
    %v3845 = vld [vmem:[%s9 + $0x20] sm:$0xff]
    %v3846 = vld [vmem:[%s9 + $0x28] sm:$0xff]
    %v3847 = vld [vmem:[%s9 + $0x30] sm:$0xff]
    %v3848 = vld [vmem:[%s9 + $0x38] sm:$0xff]
    %v3849 = vld [vmem:[%s9 + $0x40] sm:$0xff]
    %v3850 = vld [vmem:[%s9 + $0x48] sm:$0xff]
    %v3851 = vld [vmem:[%s9 + $0x50] sm:$0xff]
    %v3852 = vld [vmem:[%s9 + $0x58] sm:$0xff]
    %v3853 = vld [vmem:[%s9 + $0x60] sm:$0xff]
    %v3854 = vld [vmem:[%s9 + $0x68] sm:$0xff]
    %v3855 = vld [vmem:[%s9 + $0x70] sm:$0xff]
    %v3856 = vld [vmem:[%s9 + $0x78] sm:$0xff]
    %v3857 = vld [vmem:[%s10] sm:$0x1]
    %v3859 = vlaneseq
    %v3860 = vshrl.u32 %v3859, 7
    %v3861 = vsub.s32 0, %v3860
    %v3862 = vrot.slane %v3857, %v3861
    %3864 = vmatprep.subr.mxu0 0.0
    %3865 = vmatpush1.msra.mxu0 %v3841
    %3866 = vmatprep.subr.mxu0 0.0
    %3867 = vmatpush1.msra.mxu0 %v3842
    %3868 = vmatprep.subr.mxu0 0.0
    %3869 = vmatpush1.msra.mxu0 %v3843
    %3870 = vmatprep.subr.mxu0 0.0
    %3871 = vmatpush1.msra.mxu0 %v3844
    %3872 = vmatprep.subr.mxu0 0.0
    %3873 = vmatpush1.msra.mxu0 %v3845
    %3874 = vmatprep.subr.mxu0 0.0
    %3875 = vmatpush1.msra.mxu0 %v3846
    %3876 = vmatprep.subr.mxu0 0.0
    %3877 = vmatpush1.msra.mxu0 %v3847
    %3878 = vmatprep.subr.mxu0 0.0
    %3879 = vmatpush1.msra.mxu0 %v3848
    %3880 = vmatprep.subr.mxu0 0.0
    %3881 = vmatpush1.msra.mxu0 %v3849
    %3882 = vmatprep.subr.mxu0 0.0
    %3883 = vmatpush1.msra.mxu0 %v3850
    %3884 = vmatprep.subr.mxu0 0.0
    %3885 = vmatpush1.msra.mxu0 %v3851
    %3886 = vmatprep.subr.mxu0 0.0
    %3887 = vmatpush1.msra.mxu0 %v3852
    %3888 = vmatprep.subr.mxu0 0.0
    %3889 = vmatpush1.msra.mxu0 %v3853
    %3890 = vmatprep.subr.mxu0 0.0
    %3891 = vmatpush1.msra.mxu0 %v3854
    %3892 = vmatprep.subr.mxu0 0.0
    %3893 = vmatpush1.msra.mxu0 %v3855
    %3894 = vmatprep.subr.mxu0 0.0
    %3895 = vmatpush1.msra.mxu0 %v3856
    %3896 = vmatprep.subr.mxu0 0.0
    %3897 = vmatpush1.msra.mxu0 0.0
    %3898 = vmatprep.subr.mxu0 0.0
    %3899 = vmatpush1.msra.mxu0 0.0
    %3900 = vmatprep.subr.mxu0 0.0
    %3901 = vmatpush1.msra.mxu0 0.0
    %3902 = vmatprep.subr.mxu0 0.0
    %3903 = vmatpush1.msra.mxu0 0.0
    %3904 = vmatprep.subr.mxu0 0.0
    %3905 = vmatpush1.msra.mxu0 0.0
    %3906 = vmatprep.subr.mxu0 0.0
    %3907 = vmatpush1.msra.mxu0 0.0
    %3908 = vmatprep.subr.mxu0 0.0
    %3909 = vmatpush1.msra.mxu0 0.0
    %3910 = vmatprep.subr.mxu0 0.0
    %3911 = vmatpush1.msra.mxu0 0.0
    %3912 = vmatprep.subr.mxu0 0.0
    %3913 = vmatpush1.msra.mxu0 0.0
    %3914 = vmatprep.subr.mxu0 0.0
    %3915 = vmatpush1.msra.mxu0 0.0
    %3916 = vmatprep.subr.mxu0 0.0
    %3917 = vmatpush1.msra.mxu0 0.0
    %3918 = vmatprep.subr.mxu0 0.0
    %3919 = vmatpush1.msra.mxu0 0.0
    %3920 = vmatprep.subr.mxu0 0.0
    %3921 = vmatpush1.msra.mxu0 0.0
    %3922 = vmatprep.subr.mxu0 0.0
    %3923 = vmatpush1.msra.mxu0 0.0
    %3924 = vmatprep.subr.mxu0 0.0
    %3925 = vmatpush1.msra.mxu0 0.0
    %3926 = vmatprep.subr.mxu0 0.0
    %3927 = vmatpush1.msra.mxu0 0.0
    %3928 = vmatprep.mubr.f32.mxu0 0.0
    %3929 = vmatmul.mubr.f32.gmra.mrb[0].mxu0 %v3840
    %v3930 = vpop.f32.mrb[0].mxu0
    %v3931 = vadd.f32 %v3862, %v3930
    %v3932 = vpop.f32.mrb[0].mxu0
    %3933 = vdwg.mxu0
    %v3934 = vmax.f32 %v3931, 0.0
    %v3935 = vld [vmem:[%s11] sm:$0xff]
    %v3936 = vld [vmem:[%s11 + $0x8] sm:$0xff]
    %v3937 = vld [vmem:[%s11 + $0x10] sm:$0xff]
    %v3938 = vld [vmem:[%s11 + $0x18] sm:$0xff]
    %v3939 = vld [vmem:[%s11 + $0x20] sm:$0xff]
    %v3940 = vld [vmem:[%s11 + $0x28] sm:$0xff]
    %v3941 = vld [vmem:[%s11 + $0x30] sm:$0xff]
    %v3942 = vld [vmem:[%s11 + $0x38] sm:$0xff]
    %v3943 = vld [vmem:[%s12] sm:$0x1]
    %v3945 = vlaneseq
    %v3946 = vshrl.u32 %v3945, 7
    %v3947 = vsub.s32 0, %v3946
    %v3948 = vrot.slane %v3943, %v3947
    %v3951 = vsel %vm1185, %v3934, 0
    %3953 = vmatprep.subr.mxu0 0.0
    %3954 = vmatpush1.msra.mxu0 %v3935
    %3955 = vmatprep.subr.mxu0 0.0
    %3956 = vmatpush1.msra.mxu0 %v3936
    %3957 = vmatprep.subr.mxu0 0.0
    %3958 = vmatpush1.msra.mxu0 %v3937
    %3959 = vmatprep.subr.mxu0 0.0
    %3960 = vmatpush1.msra.mxu0 %v3938
    %3961 = vmatprep.subr.mxu0 0.0
    %3962 = vmatpush1.msra.mxu0 %v3939
    %3963 = vmatprep.subr.mxu0 0.0
    %3964 = vmatpush1.msra.mxu0 %v3940
    %3965 = vmatprep.subr.mxu0 0.0
    %3966 = vmatpush1.msra.mxu0 %v3941
    %3967 = vmatprep.subr.mxu0 0.0
    %3968 = vmatpush1.msra.mxu0 %v3942
    %3969 = vmatprep.subr.mxu0 0.0
    %3970 = vmatpush1.msra.mxu0 0.0
    %3971 = vmatprep.subr.mxu0 0.0
    %3972 = vmatpush1.msra.mxu0 0.0
    %3973 = vmatprep.subr.mxu0 0.0
    %3974 = vmatpush1.msra.mxu0 0.0
    %3975 = vmatprep.subr.mxu0 0.0
    %3976 = vmatpush1.msra.mxu0 0.0
    %3977 = vmatprep.subr.mxu0 0.0
    %3978 = vmatpush1.msra.mxu0 0.0
    %3979 = vmatprep.subr.mxu0 0.0
    %3980 = vmatpush1.msra.mxu0 0.0
    %3981 = vmatprep.subr.mxu0 0.0
    %3982 = vmatpush1.msra.mxu0 0.0
    %3983 = vmatprep.subr.mxu0 0.0
    %3984 = vmatpush1.msra.mxu0 0.0
    %3985 = vmatprep.subr.mxu0 0.0
    %3986 = vmatpush1.msra.mxu0 0.0
    %3987 = vmatprep.subr.mxu0 0.0
    %3988 = vmatpush1.msra.mxu0 0.0
    %3989 = vmatprep.subr.mxu0 0.0
    %3990 = vmatpush1.msra.mxu0 0.0
    %3991 = vmatprep.subr.mxu0 0.0
    %3992 = vmatpush1.msra.mxu0 0.0
    %3993 = vmatprep.subr.mxu0 0.0
    %3994 = vmatpush1.msra.mxu0 0.0
    %3995 = vmatprep.subr.mxu0 0.0
    %3996 = vmatpush1.msra.mxu0 0.0
    %3997 = vmatprep.subr.mxu0 0.0
    %3998 = vmatpush1.msra.mxu0 0.0
    %3999 = vmatprep.subr.mxu0 0.0
    %4000 = vmatpush1.msra.mxu0 0.0
    %4001 = vmatprep.subr.mxu0 0.0
    %4002 = vmatpush1.msra.mxu0 0.0
    %4003 = vmatprep.subr.mxu0 0.0
    %4004 = vmatpush1.msra.mxu0 0.0
    %4005 = vmatprep.subr.mxu0 0.0
    %4006 = vmatpush1.msra.mxu0 0.0
    %4007 = vmatprep.subr.mxu0 0.0
    %4008 = vmatpush1.msra.mxu0 0.0
    %4009 = vmatprep.subr.mxu0 0.0
    %4010 = vmatpush1.msra.mxu0 0.0
    %4011 = vmatprep.subr.mxu0 0.0
    %4012 = vmatpush1.msra.mxu0 0.0
    %4013 = vmatprep.subr.mxu0 0.0
    %4014 = vmatpush1.msra.mxu0 0.0
    %4015 = vmatprep.subr.mxu0 0.0
    %4016 = vmatpush1.msra.mxu0 0.0
    %4017 = vmatprep.mubr.f32.mxu0 0.0
    %4018 = vmatmul.mubr.f32.gmra.mrb[0].mxu0 %v3951
    %v4019 = vpop.f32.mrb[0].mxu0
    %v4020 = vadd.f32 %v3948, %v4019
    %v4021 = vpop.f32.mrb[0].mxu0
    %4022 = vdwg.mxu0
    %vm4023 = vcmask 80896
    %v4024 = vsel %vm4023, %v4020, -inf
    %4025 = vmax.xlane.f32.xlu0 %v4024
    %v4026 = vpop.xlane.xlu0 %4025
    %v4027 = vsub.f32 %v4020, %v4026
    %v4028 = vmul.f32 %v4027, 1.442695
    %v4029 = vpow.pop %v4028
    %v4030 = vsel %vm4023, %v4029, 0.0
    %4031 = vadd.xlane.f32.xlu0 %v4030
    %v4032 = vpop.xlane.xlu0 %4031
    %v4033 = vrcp.pop %v4032
    %v4034 = vmul.f32 %v4029, %v4033
    %vm4035 = vcmask 74752
    %4036 = vst.msk [vmem:[#allocation8] sm:$0x3] %vm4035, %v4034
    // Predicated region
    $region54: #{fused_forward.1} parent=1 // pred_check
      _
    $region55: #{fused_forward.1} parent=1 // pred_check_branch
      %4038 = sbr.rel (0) target = $region57
    $region56: #{fused_forward.1} parent=1 // pred_region
      %s4040 = ssub.s32 32, 32
      %4041 = vsyncadd [#allocation9], %s4040
      %s4043 = sshll.u32 [#allocation8], 4
      %s4044 = int_to_ptr.vmem [resolvable:$true] %s4043
      %4046 = dma.vmem_to_hbm [thread:$0]  %s4044, 32, %s13, [#allocation9]
    $region57: #{fused_forward.1} parent=1 // pred_fallthru
      _
    // Predicated region
    $region58: #{fused_forward.1} parent=1 // pred_check
      _
    $region59: #{fused_forward.1} parent=1 // pred_check_branch
      %4048 = sbr.rel (0) target = $region61
    $region60: #{fused_forward.1} parent=1 // pred_region
      %4049 = dma.done [#allocation9], 32
    $region61: #{fused_forward.1} parent=1 // pred_fallthru
      _
    %4050 = vsyncpa [#allocation9], 1

</llo_original>
